<compile_context>
chip_gen: v7x
topology: tpu7x:2x2x1
jax: 0.10.0
libtpu: 0.0.40
codegen_flags: <defaults>
</compile_context>

<pallas_src>
import functools

import jax
import jax.numpy as jnp
from jax import lax
from jax.experimental import pallas as pl
from jax.experimental.pallas import tpu as pltpu


def _mha_kernel(xf_ref, mask_ref, wq_ref, wk_ref, wv_ref, wo_ref,
                bq_ref, bk_ref, bv_ref, bo_ref,
                o_ref, k_sc, v_sc, acc_ref, *,
                scaling, q_tile, head_dim, group_size, approx_recip):
    """One (batch, q_tile, head_group) grid step.

    xf_ref : (1, S_pad, E)    full-sequence activations (compute dtype)
    mask_ref : (1, S_pad)     additive key mask (0 valid / -1e30 padded), f32
    wq/wk/wv_ref : (HG, E, GD)  grid-invariant input-projection weights
    wo_ref : (HG, GD, E)        grid-invariant output-projection weights
    bq/bk/bv_ref : (HG, 1, GD)  f32 biases;  bo_ref : (1, E) f32
    o_ref  : (1, TQ, E)       output tile (last tile clipped by Pallas)
    k_sc, v_sc : (HG, S_pad, GD) VMEM K/V cache (persists across grid steps)
    acc_ref    : (TQ, E) f32  output-projection accumulator
    """
    qi = pl.program_id(1)
    g = pl.program_id(2)
    n_groups = pl.num_programs(2)

    # ---- Build this head-group's K/V for the whole sequence once per batch.
    @pl.when(qi == 0)
    def _():
        xf = xf_ref[0]                                                   # (S_pad, E)
        k = jnp.dot(xf, wk_ref[g], preferred_element_type=jnp.float32) + bk_ref[g]
        v = jnp.dot(xf, wv_ref[g], preferred_element_type=jnp.float32) + bv_ref[g]
        k_sc[g] = k.astype(k_sc.dtype)                                   # (S_pad, GD)
        v_sc[g] = v.astype(v_sc.dtype)

    # ---- Reset the output-projection accumulator at the first head group.
    @pl.when(g == 0)
    def _():
        acc_ref[...] = jnp.zeros_like(acc_ref)

    # ---- Query tile sliced from the resident full-sequence block (no second
    #      HBM read of x), projected at group width and scaled once.
    q_start = pl.multiple_of(qi * q_tile, q_tile)
    xq = xf_ref[0, pl.ds(q_start, q_tile), :]                            # (TQ, E)
    q = (jnp.dot(xq, wq_ref[g], preferred_element_type=jnp.float32)
         + bq_ref[g]) * scaling                                          # (TQ, GD) f32
    q = q.astype(k_sc.dtype)

    k_g = k_sc[g]                                                        # (S_pad, GD)
    v_g = v_sc[g]
    mask = mask_ref[...]                                                 # (1, S_pad)

    # ---- Per-head attention inside the group (static loop, static slices).
    o_cols = []
    for j in range(group_size):
        lo, hi = j * head_dim, (j + 1) * head_dim
        # scores = q_h @ k_h^T without materializing a transpose.
        s = lax.dot_general(q[:, lo:hi], k_g[:, lo:hi],
                            (((1,), (1,)), ((), ())),
                            preferred_element_type=jnp.float32)          # (TQ, S_pad)
        s = s + mask                                                     # mask pad keys
        m = jnp.max(s, axis=-1, keepdims=True)
        # TODO(synk): on v6e/v7x, compute p in bf16 (keep m/denom in f32) once
        # EUP exp becomes the binding slot; not done here (unsafe on v5e).
        p = jnp.exp(s - m)
        denom = jnp.sum(p, axis=-1, keepdims=True)                       # (TQ, 1)
        o_h = jnp.dot(p.astype(v_g.dtype), v_g[:, lo:hi],
                      preferred_element_type=jnp.float32)                # (TQ, D)
        o_cols.append(o_h * pl.reciprocal(denom, approx=approx_recip))

    o_g = o_cols[0] if group_size == 1 else jnp.concatenate(o_cols, axis=-1)

    # Output projection folded into the head-group reduction (contracts GD).
    acc_ref[...] += jnp.dot(o_g.astype(wo_ref.dtype), wo_ref[g],
                            preferred_element_type=jnp.float32)          # (TQ, E)

    @pl.when(g == n_groups - 1)
    def _():
        o_ref[0] = (acc_ref[...] + bo_ref[...]).astype(o_ref.dtype)


def _default_vmem_limit_bytes():
    cap = 64 * 1024 * 1024
    try:
        cap = int(pltpu.get_tpu_info().vmem_capacity_bytes)
    except Exception:
        pass
    # ~80% of physical VMEM, capped: ~100 MiB on v5e/v6e, ~52 MiB on v7x.
    return min(int(cap * 0.8), 100 * 1024 * 1024)


def self_attention_pallas(x, params, num_heads, *, compute_dtype=jnp.bfloat16,
                          q_tile=128, head_group_lanes=128,
                          vmem_limit_bytes=None):
    """x: [B, S, E].  params: [in,out] weights + [1,E] biases.  Returns [B,S,E].

    q_tile: 128 (v5e) / 256 (v6e, if VMEM allows).  head_group_lanes: target
    lane width per head group (128; 256 on v6e/v7x when D is small).
    """
    B, S, E = x.shape
    H = num_heads
    D = E // H
    if D * H != E:
        raise ValueError("embed_dim must be divisible by num_heads")
    if q_tile % 128 != 0:
        raise ValueError("q_tile must be a multiple of 128")
    scaling = float(D) ** -0.5
    cdt = jnp.dtype(compute_dtype)

    TQ = q_tile
    n_q = pl.cdiv(S, TQ)
    S_pad = n_q * TQ

    # Head grouping: G heads per grid step so the minor dim (G*D) of Q/K/V,
    # weights and scratch is lane-dense.
    G = max(1, min(H, head_group_lanes // D))
    while H % G:
        G -= 1
    GD = G * D
    HG = H // G

    # ---- Head-group-major weight / bias layouts (plain XLA, outside kernel).
    def in_proj_groups(w):                   # (E, E) [in, out] -> (HG, E, GD)
        return w.reshape(E, HG, GD).transpose(1, 0, 2).astype(cdt)

    wq = in_proj_groups(params["wq"])
    wk = in_proj_groups(params["wk"])
    wv = in_proj_groups(params["wv"])
    wo = params["wo"].reshape(HG, GD, E).astype(cdt)      # rows are head-major

    def bias_groups(b):                      # (1, E) -> (HG, 1, GD) f32
        return b.reshape(HG, 1, GD).astype(jnp.float32)

    bq = bias_groups(params["bq"])
    bk = bias_groups(params["bk"])
    bv = bias_groups(params["bv"])
    bo = params["bo"].reshape(1, E).astype(jnp.float32)

    # Additive key mask row: 0 for valid keys, -1e30 for padded keys (scores
    # stay f32 so -1e30 is safe).
    key_ids = jnp.arange(S_pad, dtype=jnp.int32)
    mask_row = jnp.where(key_ids < S, 0.0, -1e30).astype(jnp.float32).reshape(1, S_pad)

    # Zero-pad the sequence once (keeps padded K/V rows finite) and cast to the
    # matmul compute dtype.
    x_p = jnp.pad(x, ((0, 0), (0, S_pad - S), (0, 0))).astype(cdt)

    if vmem_limit_bytes is None:
        vmem_limit_bytes = _default_vmem_limit_bytes()

    kernel = functools.partial(
        _mha_kernel, scaling=scaling, q_tile=TQ, head_dim=D, group_size=G,
        approx_recip=(cdt != jnp.dtype(jnp.float32)))

    # Grid-invariant inputs: DMA'd once, resident in VMEM for the whole call.
    def pinned3(shape):
        return pl.BlockSpec(shape, lambda b, q, g: (0, 0, 0))

    def pinned2(shape):
        return pl.BlockSpec(shape, lambda b, q, g: (0, 0))

    itemsize = cdt.itemsize
    cost = pl.CostEstimate(
        flops=int(8 * B * S_pad * E * E + 4 * B * S_pad * S_pad * E),
        transcendentals=int(B * H * S_pad * S_pad),
        bytes_accessed=int(B * S_pad * E * itemsize              # x read (once/batch)
                           + B * S * E * x.dtype.itemsize        # output write
                           + 4 * E * E * itemsize + 4 * E * 4),  # weights + biases
    )

    out = pl.pallas_call(
        kernel,
        out_shape=jax.ShapeDtypeStruct((B, S, E), x.dtype),   # last tile clipped
        grid_spec=pltpu.PrefetchScalarGridSpec(
            num_scalar_prefetch=0,
            grid=(B, n_q, HG),                # head-group = innermost reduction
            in_specs=[
                # Full-sequence activations; block index changes only with b.
                # TODO(synk): on v7x, pipeline_mode=pl.Buffered(1) here (or
                # stream K/V from HBM) to halve this buffer's VMEM footprint.
                pl.BlockSpec((1, S_pad, E), lambda b, q, g: (b, 0, 0)),
                pinned2((1, S_pad)),                            # additive key mask
                pinned3((HG, E, GD)),                           # wq
                pinned3((HG, E, GD)),                           # wk
                pinned3((HG, E, GD)),                           # wv
                pinned3((HG, GD, E)),                           # wo
                pinned3((HG, 1, GD)),                           # bq
                pinned3((HG, 1, GD)),                           # bk
                pinned3((HG, 1, GD)),                           # bv
                pinned2((1, E)),                                # bo
            ],
            out_specs=pl.BlockSpec((1, TQ, E), lambda b, q, g: (b, q, 0)),
            scratch_shapes=[
                pltpu.VMEM((HG, S_pad, GD), cdt),               # K cache (lane-dense)
                pltpu.VMEM((HG, S_pad, GD), cdt),               # V cache (lane-dense)
                pltpu.VMEM((TQ, E), jnp.float32),               # out-proj accumulator
            ],
        ),
        compiler_params=pltpu.CompilerParams(
            dimension_semantics=("parallel", "arbitrary", "arbitrary"),
            vmem_limit_bytes=int(vmem_limit_bytes)),
        cost_estimate=cost,
    )(x_p, mask_row, wq, wk, wv, wo, bq, bk, bv, bo)

    return out


def self_attention_reference(x, params, num_heads):
    """Pure-JAX f32 reference mirroring the PyTorch forward (attention_mask=None)."""
    B, S, E = x.shape
    D = E // num_heads
    q = x @ params["wq"] + params["bq"][0]
    k = x @ params["wk"] + params["bk"][0]
    v = x @ params["wv"] + params["bv"][0]

    def heads(t):  # (B,S,E) -> (B,H,S,D)
        return t.reshape(B, S, num_heads, D).transpose(0, 2, 1, 3)

    qh, kh, vh = heads(q), heads(k), heads(v)
    scores = jnp.einsum("bhqd,bhkd->bhqk", qh, kh) * (D ** -0.5)
    p = jax.nn.softmax(scores, axis=-1)
    o = jnp.einsum("bhqk,bhkd->bhqd", p, vh)
    o = o.transpose(0, 2, 1, 3).reshape(B, S, E)
    return o @ params["wo"] + params["bo"][0]


def make_params(key, embed_dim):
    """Deterministic synthetic parameters: weights stored [in, out], biases [1, E]."""
    keys = jax.random.split(key, 8)
    s = 0.05
    return {
        "wq": s * jax.random.normal(keys[0], (embed_dim, embed_dim), jnp.float32),
        "bq": s * jax.random.normal(keys[1], (1, embed_dim), jnp.float32),
        "wk": s * jax.random.normal(keys[2], (embed_dim, embed_dim), jnp.float32),
        "bk": s * jax.random.normal(keys[3], (1, embed_dim), jnp.float32),
        "wv": s * jax.random.normal(keys[4], (embed_dim, embed_dim), jnp.float32),
        "bv": s * jax.random.normal(keys[5], (1, embed_dim), jnp.float32),
        "wo": s * jax.random.normal(keys[6], (embed_dim, embed_dim), jnp.float32),
        "bo": s * jax.random.normal(keys[7], (1, embed_dim), jnp.float32),
    }


if __name__ == "__main__":
    # Small shapes consistent with the module: batch=2, seq=8, embed_dim=32, heads=4.
    B, S, E, H = 2, 8, 32, 4
    key = jax.random.PRNGKey(0)
    kx, kp, kx2, kx3 = jax.random.split(key, 4)

    x = jax.random.normal(kx, (B, S, E), jnp.float32)
    params = make_params(kp, E)
    ref = self_attention_reference(x, params, H)

    # Default (bf16 matmul operands, f32 accumulation).
    out = jax.block_until_ready(self_attention_pallas(x, params, H))
    assert out.shape == (B, S, E)
    assert jnp.allclose(out, ref, atol=2e-2, rtol=2e-2), "bf16 kernel mismatch"

    # f32 compute path (exact reciprocal in softmax normalization).
    out_f32 = jax.block_until_ready(
        self_attention_pallas(x, params, H, compute_dtype=jnp.float32))
    assert jnp.allclose(out_f32, ref, atol=1e-2, rtol=1e-2), "f32 kernel mismatch"

    # Aligned multi-q-tile case (K/V scratch reuse across q tiles, head grouping).
    S2 = 256
    x2 = jax.random.normal(kx2, (B, S2, E), jnp.float32)
    out2 = jax.block_until_ready(self_attention_pallas(x2, params, H))
    ref2 = self_attention_reference(x2, params, H)
    assert jnp.allclose(out2, ref2, atol=2e-2, rtol=2e-2), "multi-tile mismatch"

    # Unaligned case: exercises clipped output blocks + padded-key masking.
    S3 = 200
    x3 = jax.random.normal(kx3, (B, S3, E), jnp.float32)
    out3 = jax.block_until_ready(self_attention_pallas(x3, params, H))
    ref3 = self_attention_reference(x3, params, H)
    assert out3.shape == (B, S3, E)
    assert jnp.allclose(out3, ref3, atol=2e-2, rtol=2e-2), "unaligned-seq mismatch"

    print("KERNEL_OK")
</pallas_src>

<mosaic_0001>
module attributes {stable_mosaic.version = 11 : i64} {
  func.func @_mha_kernel(%arg0: i32, %arg1: i32, %arg2: i32, %arg3: memref<1x128x32xbf16, #tpu.memory_space<vmem>>, %arg4: memref<1x128xf32, #tpu.memory_space<vmem>>, %arg5: memref<1x32x32xbf16, #tpu.memory_space<vmem>>, %arg6: memref<1x32x32xbf16, #tpu.memory_space<vmem>>, %arg7: memref<1x32x32xbf16, #tpu.memory_space<vmem>>, %arg8: memref<1x32x32xbf16, #tpu.memory_space<vmem>>, %arg9: memref<1x1x32xf32, #tpu.memory_space<vmem>>, %arg10: memref<1x1x32xf32, #tpu.memory_space<vmem>>, %arg11: memref<1x1x32xf32, #tpu.memory_space<vmem>>, %arg12: memref<1x32xf32, #tpu.memory_space<vmem>>, %arg13: memref<1x128x32xf32, #tpu.memory_space<vmem>>, %arg14: memref<1x128x32xbf16, #tpu.memory_space<vmem>>, %arg15: memref<1x128x32xbf16, #tpu.memory_space<vmem>>, %arg16: memref<128x32xf32, #tpu.memory_space<vmem>>) attributes {dimension_semantics = [#tpu.dimension_semantics<parallel>, #tpu.dimension_semantics<arbitrary>, #tpu.dimension_semantics<arbitrary>], iteration_bounds = array<i64: 2, 1, 1>, scalar_prefetch = 0 : i64, scratch_operands = 3 : i64, tpu.core_type = #tpu.core_type<tc>, window_params = [{transform_indices = @transform_0, window_bounds = array<i64: 1, 128, 32>}, {pipeline_mode = #tpu.pipeline_mode<synchronous>, transform_indices = @transform_1, window_bounds = array<i64: 1, 128>}, {pipeline_mode = #tpu.pipeline_mode<synchronous>, transform_indices = @transform_2, window_bounds = array<i64: 1, 32, 32>}, {pipeline_mode = #tpu.pipeline_mode<synchronous>, transform_indices = @transform_3, window_bounds = array<i64: 1, 32, 32>}, {pipeline_mode = #tpu.pipeline_mode<synchronous>, transform_indices = @transform_4, window_bounds = array<i64: 1, 32, 32>}, {pipeline_mode = #tpu.pipeline_mode<synchronous>, transform_indices = @transform_5, window_bounds = array<i64: 1, 32, 32>}, {pipeline_mode = #tpu.pipeline_mode<synchronous>, transform_indices = @transform_6, window_bounds = array<i64: 1, 1, 32>}, {pipeline_mode = #tpu.pipeline_mode<synchronous>, transform_indices = @transform_7, window_bounds = array<i64: 1, 1, 32>}, {pipeline_mode = #tpu.pipeline_mode<synchronous>, transform_indices = @transform_8, window_bounds = array<i64: 1, 1, 32>}, {pipeline_mode = #tpu.pipeline_mode<synchronous>, transform_indices = @transform_9, window_bounds = array<i64: 1, 32>}, {transform_indices = @transform_10, window_bounds = array<i64: 1, 128, 32>}]} {
    %c0_i32 = arith.constant 0 : i32
    %0 = arith.cmpi eq, %arg1, %c0_i32 : i32
    %1 = arith.extui %0 : i1 to i32
    %c0_i32_0 = arith.constant 0 : i32
    %2 = arith.cmpi ne, %1, %c0_i32_0 : i32
    scf.if %2 {
      %c0_40 = arith.constant 0 : index
      %c0_41 = arith.constant 0 : index
      %c0_42 = arith.constant 0 : index
      %114 = vector.load %arg3[%c0_40, %c0_41, %c0_42] : memref<1x128x32xbf16, #tpu.memory_space<vmem>>, vector<1x128x32xbf16>
      %115 = vector.shape_cast %114 : vector<1x128x32xbf16> to vector<128x32xbf16>
      %116 = arith.index_cast %arg2 : i32 to index
      %c0_43 = arith.constant 0 : index
      %c0_44 = arith.constant 0 : index
      %117 = vector.load %arg6[%116, %c0_43, %c0_44] : memref<1x32x32xbf16, #tpu.memory_space<vmem>>, vector<1x32x32xbf16>
      %118 = vector.shape_cast %117 : vector<1x32x32xbf16> to vector<32x32xbf16>
      %cst_45 = arith.constant dense<0.000000e+00> : vector<128x32xf32>
      %119 = tpu.matmul %115, %118, %cst_45 {dimension_numbers = #tpu.dot_dimension_numbers<[1], [0], [0], [1], [0, 0, 1, 1], [], []>} : vector<128x32xbf16>, vector<32x32xbf16>, vector<128x32xf32> -> vector<128x32xf32>
      %120 = arith.index_cast %arg2 : i32 to index
      %c0_46 = arith.constant 0 : index
      %c0_47 = arith.constant 0 : index
      %121 = vector.load %arg10[%120, %c0_46, %c0_47] : memref<1x1x32xf32, #tpu.memory_space<vmem>>, vector<1x1x32xf32>
      %122 = vector.shape_cast %121 : vector<1x1x32xf32> to vector<1x32xf32>
      %123 = vector.broadcast %122 : vector<1x32xf32> to vector<128x32xf32>
      %124 = arith.addf %119, %123 : vector<128x32xf32>
      %125 = arith.index_cast %arg2 : i32 to index
      %c0_48 = arith.constant 0 : index
      %c0_49 = arith.constant 0 : index
      %126 = vector.load %arg7[%125, %c0_48, %c0_49] : memref<1x32x32xbf16, #tpu.memory_space<vmem>>, vector<1x32x32xbf16>
      %127 = vector.shape_cast %126 : vector<1x32x32xbf16> to vector<32x32xbf16>
      %cst_50 = arith.constant dense<0.000000e+00> : vector<128x32xf32>
      %128 = tpu.matmul %115, %127, %cst_50 {dimension_numbers = #tpu.dot_dimension_numbers<[1], [0], [0], [1], [0, 0, 1, 1], [], []>} : vector<128x32xbf16>, vector<32x32xbf16>, vector<128x32xf32> -> vector<128x32xf32>
      %129 = arith.index_cast %arg2 : i32 to index
      %c0_51 = arith.constant 0 : index
      %c0_52 = arith.constant 0 : index
      %130 = vector.load %arg11[%129, %c0_51, %c0_52] : memref<1x1x32xf32, #tpu.memory_space<vmem>>, vector<1x1x32xf32>
      %131 = vector.shape_cast %130 : vector<1x1x32xf32> to vector<1x32xf32>
      %132 = vector.broadcast %131 : vector<1x32xf32> to vector<128x32xf32>
      %133 = arith.addf %128, %132 : vector<128x32xf32>
      %134 = arith.truncf %124 : vector<128x32xf32> to vector<128x32xbf16>
      %135 = arith.index_cast %arg2 : i32 to index
      %c0_53 = arith.constant 0 : index
      %c0_54 = arith.constant 0 : index
      %136 = vector.load %arg14[%135, %c0_53, %c0_54] : memref<1x128x32xbf16, #tpu.memory_space<vmem>>, vector<1x128x32xbf16>
      %137 = vector.shape_cast %136 : vector<1x128x32xbf16> to vector<128x32xbf16>
      %138 = vector.shape_cast %134 : vector<128x32xbf16> to vector<1x128x32xbf16>
      tpu.vector_store %arg14[%135, %c0_53, %c0_54], %138 {strides = array<i32>} : memref<1x128x32xbf16, #tpu.memory_space<vmem>>, vector<1x128x32xbf16>,
      %139 = arith.truncf %133 : vector<128x32xf32> to vector<128x32xbf16>
      %140 = arith.index_cast %arg2 : i32 to index
      %c0_55 = arith.constant 0 : index
      %c0_56 = arith.constant 0 : index
      %141 = vector.load %arg15[%140, %c0_55, %c0_56] : memref<1x128x32xbf16, #tpu.memory_space<vmem>>, vector<1x128x32xbf16>
      %142 = vector.shape_cast %141 : vector<1x128x32xbf16> to vector<128x32xbf16>
      %143 = vector.shape_cast %139 : vector<128x32xbf16> to vector<1x128x32xbf16>
      tpu.vector_store %arg15[%140, %c0_55, %c0_56], %143 {strides = array<i32>} : memref<1x128x32xbf16, #tpu.memory_space<vmem>>, vector<1x128x32xbf16>,
    } else {
    }
    %c0_i32_1 = arith.constant 0 : i32
    %3 = arith.cmpi eq, %arg2, %c0_i32_1 : i32
    %4 = arith.extui %3 : i1 to i32
    %c0_i32_2 = arith.constant 0 : i32
    %5 = arith.cmpi ne, %4, %c0_i32_2 : i32
    scf.if %5 {
      %cst_40 = arith.constant 0.000000e+00 : f32
      %114 = vector.broadcast %cst_40 : f32 to vector<128x32xf32>
      %c0_41 = arith.constant 0 : index
      %c0_42 = arith.constant 0 : index
      %115 = vector.load %arg16[%c0_41, %c0_42] : memref<128x32xf32, #tpu.memory_space<vmem>>, vector<128x32xf32>
      tpu.vector_store %arg16[%c0_41, %c0_42], %114 {strides = array<i32>} : memref<128x32xf32, #tpu.memory_space<vmem>>, vector<128x32xf32>,
    } else {
    }
    %c128_i32 = arith.constant 128 : i32
    %6 = arith.muli %arg1, %c128_i32 : i32
    %7 = tpu.assume_multiple %6, 128 : i32
    %c0 = arith.constant 0 : index
    %8 = arith.index_cast %7 : i32 to index
    %c0_3 = arith.constant 0 : index
    %9 = vector.load %arg3[%c0, %8, %c0_3] : memref<1x128x32xbf16, #tpu.memory_space<vmem>>, vector<1x128x32xbf16>
    %10 = vector.shape_cast %9 : vector<1x128x32xbf16> to vector<128x32xbf16>
    %11 = arith.index_cast %arg2 : i32 to index
    %c0_4 = arith.constant 0 : index
    %c0_5 = arith.constant 0 : index
    %12 = vector.load %arg5[%11, %c0_4, %c0_5] : memref<1x32x32xbf16, #tpu.memory_space<vmem>>, vector<1x32x32xbf16>
    %13 = vector.shape_cast %12 : vector<1x32x32xbf16> to vector<32x32xbf16>
    %cst = arith.constant dense<0.000000e+00> : vector<128x32xf32>
    %14 = tpu.matmul %10, %13, %cst {dimension_numbers = #tpu.dot_dimension_numbers<[1], [0], [0], [1], [0, 0, 1, 1], [], []>} : vector<128x32xbf16>, vector<32x32xbf16>, vector<128x32xf32> -> vector<128x32xf32>
    %15 = arith.index_cast %arg2 : i32 to index
    %c0_6 = arith.constant 0 : index
    %c0_7 = arith.constant 0 : index
    %16 = vector.load %arg9[%15, %c0_6, %c0_7] : memref<1x1x32xf32, #tpu.memory_space<vmem>>, vector<1x1x32xf32>
    %17 = vector.shape_cast %16 : vector<1x1x32xf32> to vector<1x32xf32>
    %18 = vector.broadcast %17 : vector<1x32xf32> to vector<128x32xf32>
    %19 = arith.addf %14, %18 : vector<128x32xf32>
    %cst_8 = arith.constant 0.353553385 : f32
    %20 = vector.broadcast %cst_8 : f32 to vector<128x32xf32>
    %21 = arith.mulf %19, %20 : vector<128x32xf32>
    %22 = arith.truncf %21 : vector<128x32xf32> to vector<128x32xbf16>
    %23 = arith.index_cast %arg2 : i32 to index
    %c0_9 = arith.constant 0 : index
    %c0_10 = arith.constant 0 : index
    %24 = vector.load %arg14[%23, %c0_9, %c0_10] : memref<1x128x32xbf16, #tpu.memory_space<vmem>>, vector<1x128x32xbf16>
    %25 = vector.shape_cast %24 : vector<1x128x32xbf16> to vector<128x32xbf16>
    %26 = arith.index_cast %arg2 : i32 to index
    %c0_11 = arith.constant 0 : index
    %c0_12 = arith.constant 0 : index
    %27 = vector.load %arg15[%26, %c0_11, %c0_12] : memref<1x128x32xbf16, #tpu.memory_space<vmem>>, vector<1x128x32xbf16>
    %28 = vector.shape_cast %27 : vector<1x128x32xbf16> to vector<128x32xbf16>
    %c0_13 = arith.constant 0 : index
    %c0_14 = arith.constant 0 : index
    %29 = vector.load %arg4[%c0_13, %c0_14] : memref<1x128xf32, #tpu.memory_space<vmem>>, vector<1x128xf32>
    %30 = vector.extract_strided_slice %22 {offsets = [0, 0], sizes = [128, 8], strides = [1, 1]} : vector<128x32xbf16> to vector<128x8xbf16>
    %31 = vector.extract_strided_slice %25 {offsets = [0, 0], sizes = [128, 8], strides = [1, 1]} : vector<128x32xbf16> to vector<128x8xbf16>
    %cst_15 = arith.constant dense<0.000000e+00> : vector<128x128xf32>
    %32 = tpu.matmul %30, %31, %cst_15 {dimension_numbers = #tpu.dot_dimension_numbers<[1], [1], [0], [0], [0, 0, 1, 0], [], []>} : vector<128x8xbf16>, vector<128x8xbf16>, vector<128x128xf32> -> vector<128x128xf32>
    %33 = vector.broadcast %29 : vector<1x128xf32> to vector<128x128xf32>
    %34 = arith.addf %32, %33 : vector<128x128xf32>
    %cst_16 = arith.constant dense<0xFF800000> : vector<128xf32>
    %35 = vector.multi_reduction <maximumf>, %34, %cst_16 [1] : vector<128x128xf32> to vector<128xf32>
    %36 = vector.shape_cast %35 : vector<128xf32> to vector<128x1xf32>
    %37 = vector.broadcast %36 : vector<128x1xf32> to vector<128x128xf32>
    %38 = arith.subf %34, %37 : vector<128x128xf32>
    %39 = math.exp %38 : vector<128x128xf32>
    %cst_17 = arith.constant dense<0.000000e+00> : vector<128xf32>
    %40 = vector.multi_reduction <add>, %39, %cst_17 [1] : vector<128x128xf32> to vector<128xf32>
    %41 = vector.shape_cast %40 : vector<128xf32> to vector<128x1xf32>
    %42 = arith.truncf %39 : vector<128x128xf32> to vector<128x128xbf16>
    %43 = vector.extract_strided_slice %28 {offsets = [0, 0], sizes = [128, 8], strides = [1, 1]} : vector<128x32xbf16> to vector<128x8xbf16>
    %cst_18 = arith.constant dense<0.000000e+00> : vector<128x8xf32>
    %44 = tpu.matmul %42, %43, %cst_18 {dimension_numbers = #tpu.dot_dimension_numbers<[1], [0], [0], [1], [0, 0, 1, 1], [], []>} : vector<128x128xbf16>, vector<128x8xbf16>, vector<128x8xf32> -> vector<128x8xf32>
    %45 = tpu.reciprocal %41 {approx = true} : vector<128x1xf32> -> vector<128x1xf32>
    %46 = vector.broadcast %45 : vector<128x1xf32> to vector<128x8xf32>
    %47 = arith.mulf %44, %46 : vector<128x8xf32>
    %48 = vector.extract_strided_slice %22 {offsets = [0, 8], sizes = [128, 8], strides = [1, 1]} : vector<128x32xbf16> to vector<128x8xbf16>
    %49 = vector.extract_strided_slice %25 {offsets = [0, 8], sizes = [128, 8], strides = [1, 1]} : vector<128x32xbf16> to vector<128x8xbf16>
    %cst_19 = arith.constant dense<0.000000e+00> : vector<128x128xf32>
    %50 = tpu.matmul %48, %49, %cst_19 {dimension_numbers = #tpu.dot_dimension_numbers<[1], [1], [0], [0], [0, 0, 1, 0], [], []>} : vector<128x8xbf16>, vector<128x8xbf16>, vector<128x128xf32> -> vector<128x128xf32>
    %51 = vector.broadcast %29 : vector<1x128xf32> to vector<128x128xf32>
    %52 = arith.addf %50, %51 : vector<128x128xf32>
    %cst_20 = arith.constant dense<0xFF800000> : vector<128xf32>
    %53 = vector.multi_reduction <maximumf>, %52, %cst_20 [1] : vector<128x128xf32> to vector<128xf32>
    %54 = vector.shape_cast %53 : vector<128xf32> to vector<128x1xf32>
    %55 = vector.broadcast %54 : vector<128x1xf32> to vector<128x128xf32>
    %56 = arith.subf %52, %55 : vector<128x128xf32>
    %57 = math.exp %56 : vector<128x128xf32>
    %cst_21 = arith.constant dense<0.000000e+00> : vector<128xf32>
    %58 = vector.multi_reduction <add>, %57, %cst_21 [1] : vector<128x128xf32> to vector<128xf32>
    %59 = vector.shape_cast %58 : vector<128xf32> to vector<128x1xf32>
    %60 = arith.truncf %57 : vector<128x128xf32> to vector<128x128xbf16>
    %61 = vector.extract_strided_slice %28 {offsets = [0, 8], sizes = [128, 8], strides = [1, 1]} : vector<128x32xbf16> to vector<128x8xbf16>
    %cst_22 = arith.constant dense<0.000000e+00> : vector<128x8xf32>
    %62 = tpu.matmul %60, %61, %cst_22 {dimension_numbers = #tpu.dot_dimension_numbers<[1], [0], [0], [1], [0, 0, 1, 1], [], []>} : vector<128x128xbf16>, vector<128x8xbf16>, vector<128x8xf32> -> vector<128x8xf32>
    %63 = tpu.reciprocal %59 {approx = true} : vector<128x1xf32> -> vector<128x1xf32>
    %64 = vector.broadcast %63 : vector<128x1xf32> to vector<128x8xf32>
    %65 = arith.mulf %62, %64 : vector<128x8xf32>
    %66 = vector.extract_strided_slice %22 {offsets = [0, 16], sizes = [128, 8], strides = [1, 1]} : vector<128x32xbf16> to vector<128x8xbf16>
    %67 = vector.extract_strided_slice %25 {offsets = [0, 16], sizes = [128, 8], strides = [1, 1]} : vector<128x32xbf16> to vector<128x8xbf16>
    %cst_23 = arith.constant dense<0.000000e+00> : vector<128x128xf32>
    %68 = tpu.matmul %66, %67, %cst_23 {dimension_numbers = #tpu.dot_dimension_numbers<[1], [1], [0], [0], [0, 0, 1, 0], [], []>} : vector<128x8xbf16>, vector<128x8xbf16>, vector<128x128xf32> -> vector<128x128xf32>
    %69 = vector.broadcast %29 : vector<1x128xf32> to vector<128x128xf32>
    %70 = arith.addf %68, %69 : vector<128x128xf32>
    %cst_24 = arith.constant dense<0xFF800000> : vector<128xf32>
    %71 = vector.multi_reduction <maximumf>, %70, %cst_24 [1] : vector<128x128xf32> to vector<128xf32>
    %72 = vector.shape_cast %71 : vector<128xf32> to vector<128x1xf32>
    %73 = vector.broadcast %72 : vector<128x1xf32> to vector<128x128xf32>
    %74 = arith.subf %70, %73 : vector<128x128xf32>
    %75 = math.exp %74 : vector<128x128xf32>
    %cst_25 = arith.constant dense<0.000000e+00> : vector<128xf32>
    %76 = vector.multi_reduction <add>, %75, %cst_25 [1] : vector<128x128xf32> to vector<128xf32>
    %77 = vector.shape_cast %76 : vector<128xf32> to vector<128x1xf32>
    %78 = arith.truncf %75 : vector<128x128xf32> to vector<128x128xbf16>
    %79 = vector.extract_strided_slice %28 {offsets = [0, 16], sizes = [128, 8], strides = [1, 1]} : vector<128x32xbf16> to vector<128x8xbf16>
    %cst_26 = arith.constant dense<0.000000e+00> : vector<128x8xf32>
    %80 = tpu.matmul %78, %79, %cst_26 {dimension_numbers = #tpu.dot_dimension_numbers<[1], [0], [0], [1], [0, 0, 1, 1], [], []>} : vector<128x128xbf16>, vector<128x8xbf16>, vector<128x8xf32> -> vector<128x8xf32>
    %81 = tpu.reciprocal %77 {approx = true} : vector<128x1xf32> -> vector<128x1xf32>
    %82 = vector.broadcast %81 : vector<128x1xf32> to vector<128x8xf32>
    %83 = arith.mulf %80, %82 : vector<128x8xf32>
    %84 = vector.extract_strided_slice %22 {offsets = [0, 24], sizes = [128, 8], strides = [1, 1]} : vector<128x32xbf16> to vector<128x8xbf16>
    %85 = vector.extract_strided_slice %25 {offsets = [0, 24], sizes = [128, 8], strides = [1, 1]} : vector<128x32xbf16> to vector<128x8xbf16>
    %cst_27 = arith.constant dense<0.000000e+00> : vector<128x128xf32>
    %86 = tpu.matmul %84, %85, %cst_27 {dimension_numbers = #tpu.dot_dimension_numbers<[1], [1], [0], [0], [0, 0, 1, 0], [], []>} : vector<128x8xbf16>, vector<128x8xbf16>, vector<128x128xf32> -> vector<128x128xf32>
    %87 = vector.broadcast %29 : vector<1x128xf32> to vector<128x128xf32>
    %88 = arith.addf %86, %87 : vector<128x128xf32>
    %cst_28 = arith.constant dense<0xFF800000> : vector<128xf32>
    %89 = vector.multi_reduction <maximumf>, %88, %cst_28 [1] : vector<128x128xf32> to vector<128xf32>
    %90 = vector.shape_cast %89 : vector<128xf32> to vector<128x1xf32>
    %91 = vector.broadcast %90 : vector<128x1xf32> to vector<128x128xf32>
    %92 = arith.subf %88, %91 : vector<128x128xf32>
    %93 = math.exp %92 : vector<128x128xf32>
    %cst_29 = arith.constant dense<0.000000e+00> : vector<128xf32>
    %94 = vector.multi_reduction <add>, %93, %cst_29 [1] : vector<128x128xf32> to vector<128xf32>
    %95 = vector.shape_cast %94 : vector<128xf32> to vector<128x1xf32>
    %96 = arith.truncf %93 : vector<128x128xf32> to vector<128x128xbf16>
    %97 = vector.extract_strided_slice %28 {offsets = [0, 24], sizes = [128, 8], strides = [1, 1]} : vector<128x32xbf16> to vector<128x8xbf16>
    %cst_30 = arith.constant dense<0.000000e+00> : vector<128x8xf32>
    %98 = tpu.matmul %96, %97, %cst_30 {dimension_numbers = #tpu.dot_dimension_numbers<[1], [0], [0], [1], [0, 0, 1, 1], [], []>} : vector<128x128xbf16>, vector<128x8xbf16>, vector<128x8xf32> -> vector<128x8xf32>
    %99 = tpu.reciprocal %95 {approx = true} : vector<128x1xf32> -> vector<128x1xf32>
    %100 = vector.broadcast %99 : vector<128x1xf32> to vector<128x8xf32>
    %101 = arith.mulf %98, %100 : vector<128x8xf32>
    %102 = tpu.concatenate %47, %65, %83, %101 in 1 : vector<128x8xf32>, vector<128x8xf32>, vector<128x8xf32>, vector<128x8xf32> -> vector<128x32xf32>
    %c0_31 = arith.constant 0 : index
    %c0_32 = arith.constant 0 : index
    %103 = vector.load %arg16[%c0_31, %c0_32] : memref<128x32xf32, #tpu.memory_space<vmem>>, vector<128x32xf32>
    %104 = arith.truncf %102 : vector<128x32xf32> to vector<128x32xbf16>
    %105 = arith.index_cast %arg2 : i32 to index
    %c0_33 = arith.constant 0 : index
    %c0_34 = arith.constant 0 : index
    %106 = vector.load %arg8[%105, %c0_33, %c0_34] : memref<1x32x32xbf16, #tpu.memory_space<vmem>>, vector<1x32x32xbf16>
    %107 = vector.shape_cast %106 : vector<1x32x32xbf16> to vector<32x32xbf16>
    %cst_35 = arith.constant dense<0.000000e+00> : vector<128x32xf32>
    %108 = tpu.matmul %104, %107, %cst_35 {dimension_numbers = #tpu.dot_dimension_numbers<[1], [0], [0], [1], [0, 0, 1, 1], [], []>} : vector<128x32xbf16>, vector<32x32xbf16>, vector<128x32xf32> -> vector<128x32xf32>
    %109 = arith.addf %103, %108 : vector<128x32xf32>
    %c0_36 = arith.constant 0 : index
    %c0_37 = arith.constant 0 : index
    %110 = vector.load %arg16[%c0_36, %c0_37] : memref<128x32xf32, #tpu.memory_space<vmem>>, vector<128x32xf32>
    tpu.vector_store %arg16[%c0_36, %c0_37], %109 {strides = array<i32>} : memref<128x32xf32, #tpu.memory_space<vmem>>, vector<128x32xf32>,
    %c0_i32_38 = arith.constant 0 : i32
    %111 = arith.cmpi eq, %arg2, %c0_i32_38 : i32
    %112 = arith.extui %111 : i1 to i32
    %c0_i32_39 = arith.constant 0 : i32
    %113 = arith.cmpi ne, %112, %c0_i32_39 : i32
    scf.if %113 {
      %c0_40 = arith.constant 0 : index
      %c0_41 = arith.constant 0 : index
      %114 = vector.load %arg16[%c0_40, %c0_41] : memref<128x32xf32, #tpu.memory_space<vmem>>, vector<128x32xf32>
      %c0_42 = arith.constant 0 : index
      %c0_43 = arith.constant 0 : index
      %115 = vector.load %arg12[%c0_42, %c0_43] : memref<1x32xf32, #tpu.memory_space<vmem>>, vector<1x32xf32>
      %116 = vector.broadcast %115 : vector<1x32xf32> to vector<128x32xf32>
      %117 = arith.addf %114, %116 : vector<128x32xf32>
      %c0_44 = arith.constant 0 : index
      %c0_45 = arith.constant 0 : index
      %c0_46 = arith.constant 0 : index
      %118 = vector.load %arg13[%c0_44, %c0_45, %c0_46] : memref<1x128x32xf32, #tpu.memory_space<vmem>>, vector<1x128x32xf32>
      %119 = vector.shape_cast %118 : vector<1x128x32xf32> to vector<128x32xf32>
      %120 = vector.shape_cast %117 : vector<128x32xf32> to vector<1x128x32xf32>
      tpu.vector_store %arg13[%c0_44, %c0_45, %c0_46], %120 {strides = array<i32>} : memref<1x128x32xf32, #tpu.memory_space<vmem>>, vector<1x128x32xf32>,
    } else {
    }
    return
  }
  func.func @transform_0(%arg0: i32, %arg1: i32, %arg2: i32) -> (i32, i32, i32) {
    %c0_i32 = arith.constant 0 : i32
    %c0_i32_0 = arith.constant 0 : i32
    %c0_i32_1 = arith.constant 0 : i32
    return %arg0, %c0_i32, %c0_i32_0 : i32, i32, i32
  }
  func.func @transform_1(%arg0: i32, %arg1: i32, %arg2: i32) -> (i32, i32) {
    %c0_i32 = arith.constant 0 : i32
    %c0_i32_0 = arith.constant 0 : i32
    %c0_i32_1 = arith.constant 0 : i32
    return %c0_i32, %c0_i32_0 : i32, i32
  }
  func.func @transform_2(%arg0: i32, %arg1: i32, %arg2: i32) -> (i32, i32, i32) {
    %c0_i32 = arith.constant 0 : i32
    %c0_i32_0 = arith.constant 0 : i32
    %c0_i32_1 = arith.constant 0 : i32
    %c0_i32_2 = arith.constant 0 : i32
    return %c0_i32, %c0_i32_0, %c0_i32_1 : i32, i32, i32
  }
  func.func @transform_3(%arg0: i32, %arg1: i32, %arg2: i32) -> (i32, i32, i32) {
    %c0_i32 = arith.constant 0 : i32
    %c0_i32_0 = arith.constant 0 : i32
    %c0_i32_1 = arith.constant 0 : i32
    %c0_i32_2 = arith.constant 0 : i32
    return %c0_i32, %c0_i32_0, %c0_i32_1 : i32, i32, i32
  }
  func.func @transform_4(%arg0: i32, %arg1: i32, %arg2: i32) -> (i32, i32, i32) {
    %c0_i32 = arith.constant 0 : i32
    %c0_i32_0 = arith.constant 0 : i32
    %c0_i32_1 = arith.constant 0 : i32
    %c0_i32_2 = arith.constant 0 : i32
    return %c0_i32, %c0_i32_0, %c0_i32_1 : i32, i32, i32
  }
  func.func @transform_5(%arg0: i32, %arg1: i32, %arg2: i32) -> (i32, i32, i32) {
    %c0_i32 = arith.constant 0 : i32
    %c0_i32_0 = arith.constant 0 : i32
    %c0_i32_1 = arith.constant 0 : i32
    %c0_i32_2 = arith.constant 0 : i32
    return %c0_i32, %c0_i32_0, %c0_i32_1 : i32, i32, i32
  }
  func.func @transform_6(%arg0: i32, %arg1: i32, %arg2: i32) -> (i32, i32, i32) {
    %c0_i32 = arith.constant 0 : i32
    %c0_i32_0 = arith.constant 0 : i32
    %c0_i32_1 = arith.constant 0 : i32
    %c0_i32_2 = arith.constant 0 : i32
    return %c0_i32, %c0_i32_0, %c0_i32_1 : i32, i32, i32
  }
  func.func @transform_7(%arg0: i32, %arg1: i32, %arg2: i32) -> (i32, i32, i32) {
    %c0_i32 = arith.constant 0 : i32
    %c0_i32_0 = arith.constant 0 : i32
    %c0_i32_1 = arith.constant 0 : i32
    %c0_i32_2 = arith.constant 0 : i32
    return %c0_i32, %c0_i32_0, %c0_i32_1 : i32, i32, i32
  }
  func.func @transform_8(%arg0: i32, %arg1: i32, %arg2: i32) -> (i32, i32, i32) {
    %c0_i32 = arith.constant 0 : i32
    %c0_i32_0 = arith.constant 0 : i32
    %c0_i32_1 = arith.constant 0 : i32
    %c0_i32_2 = arith.constant 0 : i32
    return %c0_i32, %c0_i32_0, %c0_i32_1 : i32, i32, i32
  }
  func.func @transform_9(%arg0: i32, %arg1: i32, %arg2: i32) -> (i32, i32) {
    %c0_i32 = arith.constant 0 : i32
    %c0_i32_0 = arith.constant 0 : i32
    %c0_i32_1 = arith.constant 0 : i32
    return %c0_i32, %c0_i32_0 : i32, i32
  }
  func.func @transform_10(%arg0: i32, %arg1: i32, %arg2: i32) -> (i32, i32, i32) {
    %c0_i32 = arith.constant 0 : i32
    %c0_i32_0 = arith.constant 0 : i32
    return %arg0, %arg1, %c0_i32 : i32, i32, i32
  }
}

</mosaic_0001>

<llo_original>
// kernel: tpu_custom_call.1
$region0: #{tpu_custom_call.1}
  #allocation0 [shape = 'u32[]', space=smem, size = 0x4, offset = 0x4, fixed_abs, tag = 'smem constant byte address 0x4 - core index']
  #allocation1 [shape = 'u32[144,128]{1,0:T(1,128)}', space=vmem, size = 0x12000, scoped, tag = 'internal scratch']
  #allocation2 [shape = 'bf16[1,128,32]{2,1,0:T(16,128)(2,1)}', space=vmem, size = 0x8000, scoped, tag = 'scratch operand']
  #allocation3 [shape = 'bf16[1,128,32]{2,1,0:T(16,128)(2,1)}', space=vmem, size = 0x8000, scoped, tag = 'scratch operand']
  #allocation4 [shape = 'f32[128,32]{1,0:T(8,128)}', space=vmem, size = 0x10000, scoped, tag = 'scratch operand']
  %s0 = inlined_call_operand.vmem [shape: bf16[2,128,32], index: 0, kind: input, shape index: {}]
  %s1 = inlined_call_operand.vmem [shape: f32[1,128], index: 1, kind: input, shape index: {}]
  %s2 = inlined_call_operand.vmem [shape: bf16[1,32,32], index: 2, kind: input, shape index: {}]
  %s3 = inlined_call_operand.vmem [shape: bf16[1,32,32], index: 3, kind: input, shape index: {}]
  %s4 = inlined_call_operand.vmem [shape: bf16[1,32,32], index: 4, kind: input, shape index: {}]
  %s5 = inlined_call_operand.vmem [shape: bf16[1,32,32], index: 5, kind: input, shape index: {}]
  %s6 = inlined_call_operand.vmem [shape: f32[1,1,32], index: 6, kind: input, shape index: {}]
  %s7 = inlined_call_operand.vmem [shape: f32[1,1,32], index: 7, kind: input, shape index: {}]
  %s8 = inlined_call_operand.vmem [shape: f32[1,1,32], index: 8, kind: input, shape index: {}]
  %s9 = inlined_call_operand.vmem [shape: f32[1,32], index: 9, kind: input, shape index: {}]
  %s10 = inlined_call_operand.hbm [shape: f32[2,8,32], index: 10, kind: output, shape index: {}]
  %s11 = sld [smem:[#allocation0]]
  $region85: #{tpu_custom_call.1} parent=0
    _
  %s13 = ssub.s32 1, %s11
  %s14 = scalar_select 0, %s13, %s11
  $region1: #{tpu_custom_call.1} parent=0
    #allocation5 [shape = 'u8[131072]{0}', space=vmem, size = 0x20000, scoped, tag = 'output window, operand 0']
    #allocation6 [shape = 's32[2]{0}', space=sflag, size = 0x8, scoped, tag = 'scoped memory for tpu_custom_call.1']
    %15 = vsyncpa [#allocation6], 0
    %s16 = scalar_lea.sflag [#allocation6], 1
    %17 = vsyncpa %s16, 0
    loop: start=0, step=1, limit=4
    $region2: #{tpu_custom_call.1} parent=1 // loop_pre_header
      _
    $region3: #{tpu_custom_call.1} parent=1 // loop_header
      %s19 = sphi 0, %s23
      %p20 = scmp.ge.s32.totalorder %s19, 4
      %s26 = sphi 0, %s45
      %s27 = sphi 0, %s41
      %s28 = sphi 0, %s37
      %s29 = sphi 0, %s26
      %s30 = sphi 0, %s27
      %s31 = sphi 0, %s28
      %s32 = sphi 0, %s29
      %s33 = sphi 0, %s30
      %s34 = sphi 0, %s31
      %s48 = sphi 0, %s50
      %s51 = sphi 0, %s48
      %s52 = sphi 0, %s51
      %s68 = sphi 0, %s52
      %s72 = sphi 0, %s72
      %s74 = sphi 0, %s72
      %s75 = sphi 0, %s74
      %s89 = sphi 0, %s75
      %s93 = sphi 0, %s93
      %s95 = sphi 0, %s93
      %s96 = sphi 0, %s95
      %s110 = sphi 0, %s96
      %s114 = sphi 0, %s114
      %s116 = sphi 0, %s114
      %s117 = sphi 0, %s116
      %s131 = sphi 0, %s117
      %s135 = sphi 0, %s135
      %s137 = sphi 0, %s135
      %s138 = sphi 0, %s137
      %s152 = sphi 0, %s138
      %s156 = sphi 0, %s156
      %s158 = sphi 0, %s156
      %s159 = sphi 0, %s158
      %s173 = sphi 0, %s159
      %s177 = sphi 0, %s177
      %s179 = sphi 0, %s177
      %s180 = sphi 0, %s179
      %s194 = sphi 0, %s180
      %s198 = sphi 0, %s198
      %s200 = sphi 0, %s198
      %s201 = sphi 0, %s200
      %s215 = sphi 0, %s201
      %s219 = sphi 0, %s219
      %s221 = sphi 0, %s219
      %s222 = sphi 0, %s221
      %s236 = sphi 0, %s222
      %s240 = sphi 0, %s240
      %s242 = sphi 0, %s240
      %s243 = sphi 0, %s242
      %s257 = sphi 0, %s243
      %s265 = sphi 0, %s267
      %s268 = sphi 0, %s265
      %s269 = sphi 0, %s268
      %s285 = sphi 0, %s269
    $region4: #{tpu_custom_call.1} parent=1 // loop_header_branch
      %22 = sbr.rel (%p20) target = $region8
    $region5: #{tpu_custom_call.1} parent=1 // loop_body
      %s24 = ssub.s32 %s19, 1
      %s25 = ssub.s32 %s19, 2
      %s35 = sadd.s32 1, %s28
      %p36 = scmp.ge.s32.totalorder %s35, 1
      %s37 = scalar_select %p36, 0, %s35
      %s38 = sadd.s32 1, %s27
      %s39 = scalar_select %p36, %s38, %s27
      %p40 = scmp.ge.s32.totalorder %s39, 1
      %s41 = scalar_select %p40, 0, %s39
      %s42 = sadd.s32 1, %s26
      %s43 = scalar_select %p40, %s42, %s26
      %p44 = scmp.ge.s32.totalorder %s43, 2
      %s45 = scalar_select %p44, 0, %s43
      %s46 = ssub.s32 %s26, %s45
      %p47 = scmp.eq.s32.totalorder %s46, 0
      %s49 = sadd.s32 %s48, 1
      %s50 = scalar_select %p47, %s48, %s49
      %p53 = pneg %p47
      %p54 = scmp.eq.s32.totalorder %s19, 1
      %p55 = por %p53, %p54
      %p56 = scmp.ne.s32.totalorder %s48, %s51
      %p57 = scmp.eq.s32.totalorder %s19, 0
      %p58 = por %p56, %p57
      %p59 = scmp.ne.s32.totalorder %s48, %s51
      %p60 = scmp.eq.s32.totalorder %s24, 1
      %p61 = por %p59, %p60
      %p62 = scmp.ne.s32.totalorder %s51, %s52
      %p63 = scmp.eq.s32.totalorder %s24, 0
      %p64 = por %p62, %p63
      %p65 = scmp.ne.s32.totalorder %s51, %s52
      %p66 = scmp.eq.s32.totalorder %s25, 1
      %p67 = por %p65, %p66
      %p69 = scmp.ne.s32.totalorder %s52, %s68
      %p70 = scmp.eq.s32.totalorder %s25, 0
      %p71 = por %p69, %p70
      %s73 = sadd.s32 %s72, 1
      %p76 = scmp.eq.s32.totalorder %s19, 1
      %p77 = scmp.ne.s32.totalorder %s72, %s74
      %p78 = scmp.eq.s32.totalorder %s19, 0
      %p79 = por %p77, %p78
      %p80 = scmp.ne.s32.totalorder %s72, %s74
      %p81 = scmp.eq.s32.totalorder %s24, 1
      %p82 = por %p80, %p81
      %p83 = scmp.ne.s32.totalorder %s74, %s75
      %p84 = scmp.eq.s32.totalorder %s24, 0
      %p85 = por %p83, %p84
      %p86 = scmp.ne.s32.totalorder %s74, %s75
      %p87 = scmp.eq.s32.totalorder %s25, 1
      %p88 = por %p86, %p87
      %p90 = scmp.ne.s32.totalorder %s75, %s89
      %p91 = scmp.eq.s32.totalorder %s25, 0
      %p92 = por %p90, %p91
      %s94 = sadd.s32 %s93, 1
      %p97 = scmp.eq.s32.totalorder %s19, 1
      %p98 = scmp.ne.s32.totalorder %s93, %s95
      %p99 = scmp.eq.s32.totalorder %s19, 0
      %p100 = por %p98, %p99
      %p101 = scmp.ne.s32.totalorder %s93, %s95
      %p102 = scmp.eq.s32.totalorder %s24, 1
      %p103 = por %p101, %p102
      %p104 = scmp.ne.s32.totalorder %s95, %s96
      %p105 = scmp.eq.s32.totalorder %s24, 0
      %p106 = por %p104, %p105
      %p107 = scmp.ne.s32.totalorder %s95, %s96
      %p108 = scmp.eq.s32.totalorder %s25, 1
      %p109 = por %p107, %p108
      %p111 = scmp.ne.s32.totalorder %s96, %s110
      %p112 = scmp.eq.s32.totalorder %s25, 0
      %p113 = por %p111, %p112
      %s115 = sadd.s32 %s114, 1
      %p118 = scmp.eq.s32.totalorder %s19, 1
      %p119 = scmp.ne.s32.totalorder %s114, %s116
      %p120 = scmp.eq.s32.totalorder %s19, 0
      %p121 = por %p119, %p120
      %p122 = scmp.ne.s32.totalorder %s114, %s116
      %p123 = scmp.eq.s32.totalorder %s24, 1
      %p124 = por %p122, %p123
      %p125 = scmp.ne.s32.totalorder %s116, %s117
      %p126 = scmp.eq.s32.totalorder %s24, 0
      %p127 = por %p125, %p126
      %p128 = scmp.ne.s32.totalorder %s116, %s117
      %p129 = scmp.eq.s32.totalorder %s25, 1
      %p130 = por %p128, %p129
      %p132 = scmp.ne.s32.totalorder %s117, %s131
      %p133 = scmp.eq.s32.totalorder %s25, 0
      %p134 = por %p132, %p133
      %s136 = sadd.s32 %s135, 1
      %p139 = scmp.eq.s32.totalorder %s19, 1
      %p140 = scmp.ne.s32.totalorder %s135, %s137
      %p141 = scmp.eq.s32.totalorder %s19, 0
      %p142 = por %p140, %p141
      %p143 = scmp.ne.s32.totalorder %s135, %s137
      %p144 = scmp.eq.s32.totalorder %s24, 1
      %p145 = por %p143, %p144
      %p146 = scmp.ne.s32.totalorder %s137, %s138
      %p147 = scmp.eq.s32.totalorder %s24, 0
      %p148 = por %p146, %p147
      %p149 = scmp.ne.s32.totalorder %s137, %s138
      %p150 = scmp.eq.s32.totalorder %s25, 1
      %p151 = por %p149, %p150
      %p153 = scmp.ne.s32.totalorder %s138, %s152
      %p154 = scmp.eq.s32.totalorder %s25, 0
      %p155 = por %p153, %p154
      %s157 = sadd.s32 %s156, 1
      %p160 = scmp.eq.s32.totalorder %s19, 1
      %p161 = scmp.ne.s32.totalorder %s156, %s158
      %p162 = scmp.eq.s32.totalorder %s19, 0
      %p163 = por %p161, %p162
      %p164 = scmp.ne.s32.totalorder %s156, %s158
      %p165 = scmp.eq.s32.totalorder %s24, 1
      %p166 = por %p164, %p165
      %p167 = scmp.ne.s32.totalorder %s158, %s159
      %p168 = scmp.eq.s32.totalorder %s24, 0
      %p169 = por %p167, %p168
      %p170 = scmp.ne.s32.totalorder %s158, %s159
      %p171 = scmp.eq.s32.totalorder %s25, 1
      %p172 = por %p170, %p171
      %p174 = scmp.ne.s32.totalorder %s159, %s173
      %p175 = scmp.eq.s32.totalorder %s25, 0
      %p176 = por %p174, %p175
      %s178 = sadd.s32 %s177, 1
      %p181 = scmp.eq.s32.totalorder %s19, 1
      %p182 = scmp.ne.s32.totalorder %s177, %s179
      %p183 = scmp.eq.s32.totalorder %s19, 0
      %p184 = por %p182, %p183
      %p185 = scmp.ne.s32.totalorder %s177, %s179
      %p186 = scmp.eq.s32.totalorder %s24, 1
      %p187 = por %p185, %p186
      %p188 = scmp.ne.s32.totalorder %s179, %s180
      %p189 = scmp.eq.s32.totalorder %s24, 0
      %p190 = por %p188, %p189
      %p191 = scmp.ne.s32.totalorder %s179, %s180
      %p192 = scmp.eq.s32.totalorder %s25, 1
      %p193 = por %p191, %p192
      %p195 = scmp.ne.s32.totalorder %s180, %s194
      %p196 = scmp.eq.s32.totalorder %s25, 0
      %p197 = por %p195, %p196
      %s199 = sadd.s32 %s198, 1
      %p202 = scmp.eq.s32.totalorder %s19, 1
      %p203 = scmp.ne.s32.totalorder %s198, %s200
      %p204 = scmp.eq.s32.totalorder %s19, 0
      %p205 = por %p203, %p204
      %p206 = scmp.ne.s32.totalorder %s198, %s200
      %p207 = scmp.eq.s32.totalorder %s24, 1
      %p208 = por %p206, %p207
      %p209 = scmp.ne.s32.totalorder %s200, %s201
      %p210 = scmp.eq.s32.totalorder %s24, 0
      %p211 = por %p209, %p210
      %p212 = scmp.ne.s32.totalorder %s200, %s201
      %p213 = scmp.eq.s32.totalorder %s25, 1
      %p214 = por %p212, %p213
      %p216 = scmp.ne.s32.totalorder %s201, %s215
      %p217 = scmp.eq.s32.totalorder %s25, 0
      %p218 = por %p216, %p217
      %s220 = sadd.s32 %s219, 1
      %p223 = scmp.eq.s32.totalorder %s19, 1
      %p224 = scmp.ne.s32.totalorder %s219, %s221
      %p225 = scmp.eq.s32.totalorder %s19, 0
      %p226 = por %p224, %p225
      %p227 = scmp.ne.s32.totalorder %s219, %s221
      %p228 = scmp.eq.s32.totalorder %s24, 1
      %p229 = por %p227, %p228
      %p230 = scmp.ne.s32.totalorder %s221, %s222
      %p231 = scmp.eq.s32.totalorder %s24, 0
      %p232 = por %p230, %p231
      %p233 = scmp.ne.s32.totalorder %s221, %s222
      %p234 = scmp.eq.s32.totalorder %s25, 1
      %p235 = por %p233, %p234
      %p237 = scmp.ne.s32.totalorder %s222, %s236
      %p238 = scmp.eq.s32.totalorder %s25, 0
      %p239 = por %p237, %p238
      %s241 = sadd.s32 %s240, 1
      %p244 = scmp.eq.s32.totalorder %s19, 1
      %p245 = scmp.ne.s32.totalorder %s240, %s242
      %p246 = scmp.eq.s32.totalorder %s19, 0
      %p247 = por %p245, %p246
      %p248 = scmp.ne.s32.totalorder %s240, %s242
      %p249 = scmp.eq.s32.totalorder %s24, 1
      %p250 = por %p248, %p249
      %p251 = scmp.ne.s32.totalorder %s242, %s243
      %p252 = scmp.eq.s32.totalorder %s24, 0
      %p253 = por %p251, %p252
      %p254 = scmp.ne.s32.totalorder %s242, %s243
      %p255 = scmp.eq.s32.totalorder %s25, 1
      %p256 = por %p254, %p255
      %p258 = scmp.ne.s32.totalorder %s243, %s257
      %p259 = scmp.eq.s32.totalorder %s25, 0
      %p260 = por %p258, %p259
      %s261 = ssub.s32 %s26, %s45
      %s262 = ssub.s32 %s27, %s41
      %s263 = sor.u32 %s261, %s262
      %p264 = scmp.eq.s32.totalorder %s263, 0
      %s266 = sadd.s32 %s265, 1
      %s267 = scalar_select %p264, %s265, %s266
      %p270 = pneg %p264
      %p271 = scmp.eq.s32.totalorder %s19, 1
      %p272 = por %p270, %p271
      %p273 = scmp.ne.s32.totalorder %s265, %s268
      %p274 = scmp.eq.s32.totalorder %s19, 0
      %p275 = por %p273, %p274
      %p276 = scmp.ne.s32.totalorder %s265, %s268
      %p277 = scmp.eq.s32.totalorder %s24, 1
      %p278 = por %p276, %p277
      %p279 = scmp.ne.s32.totalorder %s268, %s269
      %p280 = scmp.eq.s32.totalorder %s24, 0
      %p281 = por %p279, %p280
      %p282 = scmp.ne.s32.totalorder %s268, %s269
      %p283 = scmp.eq.s32.totalorder %s25, 1
      %p284 = por %p282, %p283
      %p286 = scmp.ne.s32.totalorder %s269, %s285
      %p287 = scmp.eq.s32.totalorder %s25, 0
      %p288 = por %p286, %p287
      %p289 = scmp.le.s32.totalorder 1, %s19
      %p290 = scmp.lt.s32.totalorder %s19, 3
      %p291 = pnand %p289, %p290
      %p292 = pneg %p291
      // Predicated region
      $region9: #{tpu_custom_call.1} parent=5 // pred_check
        _
      $region10: #{tpu_custom_call.1} parent=5 // pred_check_branch
        %294 = sbr.rel (%p291) target = $region12
      $region11: #{tpu_custom_call.1} parent=5 // pred_region
        %s295 = ssub.s32 %s19, 1
        // Predicated region
        $region13: #{tpu_custom_call.1} parent=11 // pred_check
          %p296 = pneg %p85
        $region14: #{tpu_custom_call.1} parent=11 // pred_check_branch
          %298 = sbr.rel (%p296) target = $region16
        $region15: #{tpu_custom_call.1} parent=11 // pred_region
          _
        $region16: #{tpu_custom_call.1} parent=11 // pred_fallthru
          _
        // Predicated region
        $region17: #{tpu_custom_call.1} parent=11 // pred_check
          %p299 = pneg %p106
        $region18: #{tpu_custom_call.1} parent=11 // pred_check_branch
          %301 = sbr.rel (%p299) target = $region20
        $region19: #{tpu_custom_call.1} parent=11 // pred_region
          _
        $region20: #{tpu_custom_call.1} parent=11 // pred_fallthru
          _
        // Predicated region
        $region21: #{tpu_custom_call.1} parent=11 // pred_check
          %p302 = pneg %p127
        $region22: #{tpu_custom_call.1} parent=11 // pred_check_branch
          %304 = sbr.rel (%p302) target = $region24
        $region23: #{tpu_custom_call.1} parent=11 // pred_region
          _
        $region24: #{tpu_custom_call.1} parent=11 // pred_fallthru
          _
        // Predicated region
        $region25: #{tpu_custom_call.1} parent=11 // pred_check
          %p305 = pneg %p148
        $region26: #{tpu_custom_call.1} parent=11 // pred_check_branch
          %307 = sbr.rel (%p305) target = $region28
        $region27: #{tpu_custom_call.1} parent=11 // pred_region
          _
        $region28: #{tpu_custom_call.1} parent=11 // pred_fallthru
          _
        // Predicated region
        $region29: #{tpu_custom_call.1} parent=11 // pred_check
          %p308 = pneg %p169
        $region30: #{tpu_custom_call.1} parent=11 // pred_check_branch
          %310 = sbr.rel (%p308) target = $region32
        $region31: #{tpu_custom_call.1} parent=11 // pred_region
          _
        $region32: #{tpu_custom_call.1} parent=11 // pred_fallthru
          _
        // Predicated region
        $region33: #{tpu_custom_call.1} parent=11 // pred_check
          %p311 = pneg %p190
        $region34: #{tpu_custom_call.1} parent=11 // pred_check_branch
          %313 = sbr.rel (%p311) target = $region36
        $region35: #{tpu_custom_call.1} parent=11 // pred_region
          _
        $region36: #{tpu_custom_call.1} parent=11 // pred_fallthru
          _
        // Predicated region
        $region37: #{tpu_custom_call.1} parent=11 // pred_check
          %p314 = pneg %p211
        $region38: #{tpu_custom_call.1} parent=11 // pred_check_branch
          %316 = sbr.rel (%p314) target = $region40
        $region39: #{tpu_custom_call.1} parent=11 // pred_region
          _
        $region40: #{tpu_custom_call.1} parent=11 // pred_fallthru
          _
        // Predicated region
        $region41: #{tpu_custom_call.1} parent=11 // pred_check
          %p317 = pneg %p232
        $region42: #{tpu_custom_call.1} parent=11 // pred_check_branch
          %319 = sbr.rel (%p317) target = $region44
        $region43: #{tpu_custom_call.1} parent=11 // pred_region
          _
        $region44: #{tpu_custom_call.1} parent=11 // pred_fallthru
          _
        // Predicated region
        $region45: #{tpu_custom_call.1} parent=11 // pred_check
          %p320 = pneg %p253
        $region46: #{tpu_custom_call.1} parent=11 // pred_check_branch
          %322 = sbr.rel (%p320) target = $region48
        $region47: #{tpu_custom_call.1} parent=11 // pred_region
          _
        $region48: #{tpu_custom_call.1} parent=11 // pred_fallthru
          _
      $region12: #{tpu_custom_call.1} parent=5 // pred_fallthru
        _
      %p323 = scmp.lt.s32.totalorder %s19, 2
      // Predicated region
      $region49: #{tpu_custom_call.1} parent=5 // pred_check
        %p324 = pneg %p323
      $region50: #{tpu_custom_call.1} parent=5 // pred_check_branch
        %326 = sbr.rel (%p324) target = $region52
      $region51: #{tpu_custom_call.1} parent=5 // pred_region
        // Predicated region
        $region53: #{tpu_custom_call.1} parent=51 // pred_check
          %p327 = pneg %p58
        $region54: #{tpu_custom_call.1} parent=51 // pred_check_branch
          %329 = sbr.rel (%p327) target = $region56
        $region55: #{tpu_custom_call.1} parent=51 // pred_region
          %p330 = scmp.lt.s32.totalorder %s26, 1
          %s331 = scalar_select %p330, %s26, 1
          %s332 = smul.addr %s331, 16
          %s333 = smul.addr %s332, 4
          %s334 = scalar_lea.vmem %s0, %s333
        $region56: #{tpu_custom_call.1} parent=51 // pred_fallthru
          _
      $region52: #{tpu_custom_call.1} parent=5 // pred_fallthru
        _
      %p335 = scmp.le.s32.totalorder 1, %s19
      %p336 = scmp.lt.s32.totalorder %s19, 3
      %p337 = pnand %p335, %p336
      %p338 = pneg %p337
      // Predicated region
      $region57: #{tpu_custom_call.1} parent=5 // pred_check
        _
      $region58: #{tpu_custom_call.1} parent=5 // pred_check_branch
        %340 = sbr.rel (%p337) target = $region60
      $region59: #{tpu_custom_call.1} parent=5 // pred_region
        %s341 = ssub.s32 %s19, 1
        %p342 = scmp.lt.s32.totalorder %s29, 1
        %s343 = scalar_select %p342, %s29, 1
        %s344 = smul.addr %s343, 16
        %s345 = smul.addr %s344, 4
        %s346 = scalar_lea.vmem %s0, %s345
        %p347 = pneg %p64
        %p348 = pneg %p61
        %p349 = pneg %p85
        %p350 = pneg %p82
        %p351 = pneg %p106
        %p352 = pneg %p103
        %p353 = pneg %p127
        %p354 = pneg %p124
        %p355 = pneg %p148
        %p356 = pneg %p145
        %p357 = pneg %p169
        %p358 = pneg %p166
        %p359 = pneg %p190
        %p360 = pneg %p187
        %p361 = pneg %p211
        %p362 = pneg %p208
        %p363 = pneg %p232
        %p364 = pneg %p229
        %p365 = pneg %p253
        %p366 = pneg %p250
        %p367 = pneg %p281
        %p368 = pneg %p278
        %s369 = sand.u32 %s268, 1
        %s370 = scalar_lea.sflag [#allocation6], %s369
        %s371 = sand.u32 %s268, 1
        %s372 = smul.addr %s371, 128
        %s373 = scalar_lea.vmem [#allocation5], %s372
        %p374 = scmp.lt.s32.totalorder %s29, 1
        %s375 = scalar_select %p374, %s29, 1
        %s376 = smul.addr %s375, 16
        %s377 = smul.addr %s376, 4
        %s378 = scalar_lea.vmem %s0, %s377
        %s379 = smul.u32 16, %s30
        %s380 = ssub.s32 1, %s379
        %s381 = smul.u32 128, %s380
        %p383 = scmp.eq.s32.totalorder %s30, 0
        // Predicated region
        $region61: #{tpu_custom_call.1} parent=59 // pred_check
          %p384 = pneg %p383
        $region62: #{tpu_custom_call.1} parent=59 // pred_check_branch
          %386 = sbr.rel (%p384) target = $region64
        $region63: #{tpu_custom_call.1} parent=59 // pred_region
          %v387 = vld [vmem:[%s378] sm:$0xf]
          %v388 = vld [vmem:[%s378 + $0x4] sm:$0xf]
          %v389 = vld [vmem:[%s378 + $0x8] sm:$0xf]
          %v390 = vld [vmem:[%s378 + $0xc] sm:$0xf]
          %v391 = vld [vmem:[%s378 + $0x10] sm:$0xf]
          %v392 = vld [vmem:[%s378 + $0x14] sm:$0xf]
          %v393 = vld [vmem:[%s378 + $0x18] sm:$0xf]
          %v394 = vld [vmem:[%s378 + $0x1c] sm:$0xf]
          %v395 = vld [vmem:[%s378 + $0x20] sm:$0xf]
          %v396 = vld [vmem:[%s378 + $0x24] sm:$0xf]
          %v397 = vld [vmem:[%s378 + $0x28] sm:$0xf]
          %v398 = vld [vmem:[%s378 + $0x2c] sm:$0xf]
          %v399 = vld [vmem:[%s378 + $0x30] sm:$0xf]
          %v400 = vld [vmem:[%s378 + $0x34] sm:$0xf]
          %v401 = vld [vmem:[%s378 + $0x38] sm:$0xf]
          %v402 = vld [vmem:[%s378 + $0x3c] sm:$0xf]
          %s403 = smul.u32 %s31, 4
          %s404 = smul.addr %s403, 4
          %s405 = scalar_lea.vmem %s3, %s404
          %v406 = vld [vmem:[%s405] sm:$0xf]
          %v407 = vld [vmem:[%s405 + $0x4] sm:$0xf]
          %v408 = vld [vmem:[%s405 + $0x8] sm:$0xf]
          %v409 = vld [vmem:[%s405 + $0xc] sm:$0xf]
          %s410 = scalar_lea.vmem %s7, %s31
          %v411 = vld [vmem:[%s410] sm:$0x1]
          %v413 = vlaneseq
          %v414 = vshrl.u32 %v413, 7
          %v415 = vsub.s32 0, %v414
          %v416 = vrot.slane %v411, %v415
          %v434 = vunpack.c.l.b16 %v387
          %v435 = vunpack.c.l.b16 %v388
          %v436 = vunpack.c.l.b16 %v389
          %v437 = vunpack.c.l.b16 %v390
          %v438 = vunpack.c.l.b16 %v391
          %v439 = vunpack.c.l.b16 %v392
          %v440 = vunpack.c.l.b16 %v393
          %v441 = vunpack.c.l.b16 %v394
          %v442 = vunpack.c.l.b16 %v395
          %v443 = vunpack.c.l.b16 %v396
          %v444 = vunpack.c.l.b16 %v397
          %v445 = vunpack.c.l.b16 %v398
          %v446 = vunpack.c.l.b16 %v399
          %v447 = vunpack.c.l.b16 %v400
          %v448 = vunpack.c.l.b16 %v401
          %v449 = vunpack.c.l.b16 %v402
          %v450 = vpack.c.b16 %v435, %v434
          %v451 = vpack.c.b16 %v437, %v436
          %v452 = vpack.c.b16 %v439, %v438
          %v453 = vpack.c.b16 %v441, %v440
          %v454 = vpack.c.b16 %v443, %v442
          %v455 = vpack.c.b16 %v445, %v444
          %v456 = vpack.c.b16 %v447, %v446
          %v457 = vpack.c.b16 %v449, %v448
          %v462 = vunpack.c.l.b16 %v406
          %v463 = vunpack.c.l.b16 %v407
          %v464 = vunpack.c.l.b16 %v408
          %v465 = vunpack.c.l.b16 %v409
          %v466 = vpack.c.b16 %v463, %v462
          %v467 = vpack.c.b16 %v465, %v464
          %vm470 = vcmask 261120
          %v472 = vsel %vm470, %v450, 0
          %v475 = vsel %vm470, %v451, 0
          %v478 = vsel %vm470, %v452, 0
          %v481 = vsel %vm470, %v453, 0
          %v484 = vsel %vm470, %v454, 0
          %v487 = vsel %vm470, %v455, 0
          %v490 = vsel %vm470, %v456, 0
          %v493 = vsel %vm470, %v457, 0
          %495 = vmatprep.subr.bf16.mxu0 0
          %496 = vmatpush1.bf16.msra.mxu0 %v466
          %497 = vmatprep.subr.bf16.mxu0 0
          %498 = vmatpush1.bf16.msra.mxu0 %v467
          %499 = vmatprep.subr.bf16.mxu0 0
          %500 = vmatpush1.bf16.msra.mxu0 0
          %501 = vmatprep.subr.bf16.mxu0 0
          %502 = vmatpush1.bf16.msra.mxu0 0
          %503 = vmatprep.subr.bf16.mxu0 0
          %504 = vmatpush1.bf16.msra.mxu0 0
          %505 = vmatprep.subr.bf16.mxu0 0
          %506 = vmatpush1.bf16.msra.mxu0 0
          %507 = vmatprep.subr.bf16.mxu0 0
          %508 = vmatpush1.bf16.msra.mxu0 0
          %509 = vmatprep.subr.bf16.mxu0 0
          %510 = vmatpush1.bf16.msra.mxu0 0
          %511 = vmatprep.subr.bf16.mxu0 0
          %512 = vmatpush1.bf16.msra.mxu0 0
          %513 = vmatprep.subr.bf16.mxu0 0
          %514 = vmatpush1.bf16.msra.mxu0 0
          %515 = vmatprep.subr.bf16.mxu0 0
          %516 = vmatpush1.bf16.msra.mxu0 0
          %517 = vmatprep.subr.bf16.mxu0 0
          %518 = vmatpush1.bf16.msra.mxu0 0
          %519 = vmatprep.subr.bf16.mxu0 0
          %520 = vmatpush1.bf16.msra.mxu0 0
          %521 = vmatprep.subr.bf16.mxu0 0
          %522 = vmatpush1.bf16.msra.mxu0 0
          %523 = vmatprep.subr.bf16.mxu0 0
          %524 = vmatpush1.bf16.msra.mxu0 0
          %525 = vmatprep.subr.bf16.mxu0 0
          %526 = vmatpush1.bf16.msra.mxu0 0
          %527 = vmatprep.mubr.bf16.mxu0 0
          %528 = vmatmul.mubr.bf16.gmra.mrb[0].mxu0 %v472
          %v529 = vpop.f32.mrb[0].mxu0
          %v530 = vadd.f32 %v416, %v529
          %v531 = vpop.f32.mrb[0].mxu0
          %v532 = vpop.f32.mrb[0].mxu0
          %v533 = vadd.f32 %v416, %v532
          %v534 = vpop.f32.mrb[0].mxu0
          %535 = vmatprep.mubr.bf16.mxu0 0
          %536 = vmatmul.mubr.bf16.gmra.mrb[0].mxu0 %v475
          %v537 = vpop.f32.mrb[0].mxu0
          %v538 = vadd.f32 %v416, %v537
          %v539 = vpop.f32.mrb[0].mxu0
          %v540 = vpop.f32.mrb[0].mxu0
          %v541 = vadd.f32 %v416, %v540
          %v542 = vpop.f32.mrb[0].mxu0
          %543 = vmatprep.mubr.bf16.mxu0 0
          %544 = vmatmul.mubr.bf16.gmra.mrb[0].mxu0 %v478
          %v545 = vpop.f32.mrb[0].mxu0
          %v546 = vadd.f32 %v416, %v545
          %v547 = vpop.f32.mrb[0].mxu0
          %v548 = vpop.f32.mrb[0].mxu0
          %v549 = vadd.f32 %v416, %v548
          %v550 = vpop.f32.mrb[0].mxu0
          %551 = vmatprep.mubr.bf16.mxu0 0
          %552 = vmatmul.mubr.bf16.gmra.mrb[0].mxu0 %v481
          %v553 = vpop.f32.mrb[0].mxu0
          %v554 = vadd.f32 %v416, %v553
          %v555 = vpop.f32.mrb[0].mxu0
          %v556 = vpop.f32.mrb[0].mxu0
          %v557 = vadd.f32 %v416, %v556
          %v558 = vpop.f32.mrb[0].mxu0
          %559 = vmatprep.mubr.bf16.mxu0 0
          %560 = vmatmul.mubr.bf16.gmra.mrb[0].mxu0 %v484
          %v561 = vpop.f32.mrb[0].mxu0
          %v562 = vadd.f32 %v416, %v561
          %v563 = vpop.f32.mrb[0].mxu0
          %v564 = vpop.f32.mrb[0].mxu0
          %v565 = vadd.f32 %v416, %v564
          %v566 = vpop.f32.mrb[0].mxu0
          %567 = vmatprep.mubr.bf16.mxu0 0
          %568 = vmatmul.mubr.bf16.gmra.mrb[0].mxu0 %v487
          %v569 = vpop.f32.mrb[0].mxu0
          %v570 = vadd.f32 %v416, %v569
          %v571 = vpop.f32.mrb[0].mxu0
          %v572 = vpop.f32.mrb[0].mxu0
          %v573 = vadd.f32 %v416, %v572
          %v574 = vpop.f32.mrb[0].mxu0
          %575 = vmatprep.mubr.bf16.mxu0 0
          %576 = vmatmul.mubr.bf16.gmra.mrb[0].mxu0 %v490
          %v577 = vpop.f32.mrb[0].mxu0
          %v578 = vadd.f32 %v416, %v577
          %v579 = vpop.f32.mrb[0].mxu0
          %v580 = vpop.f32.mrb[0].mxu0
          %v581 = vadd.f32 %v416, %v580
          %v582 = vpop.f32.mrb[0].mxu0
          %583 = vmatprep.mubr.bf16.mxu0 0
          %584 = vmatmul.mubr.bf16.gmra.mrb[0].mxu0 %v493
          %v585 = vpop.f32.mrb[0].mxu0
          %v586 = vadd.f32 %v416, %v585
          %v587 = vpop.f32.mrb[0].mxu0
          %v588 = vpop.f32.mrb[0].mxu0
          %v589 = vadd.f32 %v416, %v588
          %v590 = vpop.f32.mrb[0].mxu0
          %591 = vdwg.mxu0
          %s592 = smul.addr %s403, 4
          %s593 = scalar_lea.vmem %s4, %s592
          %v594 = vld [vmem:[%s593] sm:$0xf]
          %v595 = vld [vmem:[%s593 + $0x4] sm:$0xf]
          %v596 = vld [vmem:[%s593 + $0x8] sm:$0xf]
          %v597 = vld [vmem:[%s593 + $0xc] sm:$0xf]
          %s598 = scalar_lea.vmem %s8, %s31
          %v599 = vld [vmem:[%s598] sm:$0x1]
          %v601 = vlaneseq
          %v602 = vshrl.u32 %v601, 7
          %v603 = vsub.s32 0, %v602
          %v604 = vrot.slane %v599, %v603
          %v610 = vunpack.c.l.b16 %v594
          %v611 = vunpack.c.l.b16 %v595
          %v612 = vunpack.c.l.b16 %v596
          %v613 = vunpack.c.l.b16 %v597
          %v614 = vpack.c.b16 %v611, %v610
          %v615 = vpack.c.b16 %v613, %v612
          %618 = vmatprep.subr.bf16.mxu0 0
          %619 = vmatpush1.bf16.msra.mxu0 %v614
          %620 = vmatprep.subr.bf16.mxu0 0
          %621 = vmatpush1.bf16.msra.mxu0 %v615
          %622 = vmatprep.subr.bf16.mxu0 0
          %623 = vmatpush1.bf16.msra.mxu0 0
          %624 = vmatprep.subr.bf16.mxu0 0
          %625 = vmatpush1.bf16.msra.mxu0 0
          %626 = vmatprep.subr.bf16.mxu0 0
          %627 = vmatpush1.bf16.msra.mxu0 0
          %628 = vmatprep.subr.bf16.mxu0 0
          %629 = vmatpush1.bf16.msra.mxu0 0
          %630 = vmatprep.subr.bf16.mxu0 0
          %631 = vmatpush1.bf16.msra.mxu0 0
          %632 = vmatprep.subr.bf16.mxu0 0
          %633 = vmatpush1.bf16.msra.mxu0 0
          %634 = vmatprep.subr.bf16.mxu0 0
          %635 = vmatpush1.bf16.msra.mxu0 0
          %636 = vmatprep.subr.bf16.mxu0 0
          %637 = vmatpush1.bf16.msra.mxu0 0
          %638 = vmatprep.subr.bf16.mxu0 0
          %639 = vmatpush1.bf16.msra.mxu0 0
          %640 = vmatprep.subr.bf16.mxu0 0
          %641 = vmatpush1.bf16.msra.mxu0 0
          %642 = vmatprep.subr.bf16.mxu0 0
          %643 = vmatpush1.bf16.msra.mxu0 0
          %644 = vmatprep.subr.bf16.mxu0 0
          %645 = vmatpush1.bf16.msra.mxu0 0
          %646 = vmatprep.subr.bf16.mxu0 0
          %647 = vmatpush1.bf16.msra.mxu0 0
          %648 = vmatprep.subr.bf16.mxu0 0
          %649 = vmatpush1.bf16.msra.mxu0 0
          %650 = vmatprep.mubr.bf16.mxu0 0
          %651 = vmatmul.mubr.bf16.gmra.mrb[0].mxu0 %v472
          %v652 = vpop.f32.mrb[0].mxu0
          %v653 = vadd.f32 %v604, %v652
          %v654 = vpop.f32.mrb[0].mxu0
          %v655 = vpop.f32.mrb[0].mxu0
          %v656 = vadd.f32 %v604, %v655
          %v657 = vpop.f32.mrb[0].mxu0
          %658 = vmatprep.mubr.bf16.mxu0 0
          %659 = vmatmul.mubr.bf16.gmra.mrb[0].mxu0 %v475
          %v660 = vpop.f32.mrb[0].mxu0
          %v661 = vadd.f32 %v604, %v660
          %v662 = vpop.f32.mrb[0].mxu0
          %v663 = vpop.f32.mrb[0].mxu0
          %v664 = vadd.f32 %v604, %v663
          %v665 = vpop.f32.mrb[0].mxu0
          %666 = vmatprep.mubr.bf16.mxu0 0
          %667 = vmatmul.mubr.bf16.gmra.mrb[0].mxu0 %v478
          %v668 = vpop.f32.mrb[0].mxu0
          %v669 = vadd.f32 %v604, %v668
          %v670 = vpop.f32.mrb[0].mxu0
          %v671 = vpop.f32.mrb[0].mxu0
          %v672 = vadd.f32 %v604, %v671
          %v673 = vpop.f32.mrb[0].mxu0
          %674 = vmatprep.mubr.bf16.mxu0 0
          %675 = vmatmul.mubr.bf16.gmra.mrb[0].mxu0 %v481
          %v676 = vpop.f32.mrb[0].mxu0
          %v677 = vadd.f32 %v604, %v676
          %v678 = vpop.f32.mrb[0].mxu0
          %v679 = vpop.f32.mrb[0].mxu0
          %v680 = vadd.f32 %v604, %v679
          %v681 = vpop.f32.mrb[0].mxu0
          %682 = vmatprep.mubr.bf16.mxu0 0
          %683 = vmatmul.mubr.bf16.gmra.mrb[0].mxu0 %v484
          %v684 = vpop.f32.mrb[0].mxu0
          %v685 = vadd.f32 %v604, %v684
          %v686 = vpop.f32.mrb[0].mxu0
          %v687 = vpop.f32.mrb[0].mxu0
          %v688 = vadd.f32 %v604, %v687
          %v689 = vpop.f32.mrb[0].mxu0
          %690 = vmatprep.mubr.bf16.mxu0 0
          %691 = vmatmul.mubr.bf16.gmra.mrb[0].mxu0 %v487
          %v692 = vpop.f32.mrb[0].mxu0
          %v693 = vadd.f32 %v604, %v692
          %v694 = vpop.f32.mrb[0].mxu0
          %v695 = vpop.f32.mrb[0].mxu0
          %v696 = vadd.f32 %v604, %v695
          %v697 = vpop.f32.mrb[0].mxu0
          %698 = vmatprep.mubr.bf16.mxu0 0
          %699 = vmatmul.mubr.bf16.gmra.mrb[0].mxu0 %v490
          %v700 = vpop.f32.mrb[0].mxu0
          %v701 = vadd.f32 %v604, %v700
          %v702 = vpop.f32.mrb[0].mxu0
          %v703 = vpop.f32.mrb[0].mxu0
          %v704 = vadd.f32 %v604, %v703
          %v705 = vpop.f32.mrb[0].mxu0
          %706 = vmatprep.mubr.bf16.mxu0 0
          %707 = vmatmul.mubr.bf16.gmra.mrb[0].mxu0 %v493
          %v708 = vpop.f32.mrb[0].mxu0
          %v709 = vadd.f32 %v604, %v708
          %v710 = vpop.f32.mrb[0].mxu0
          %v711 = vpop.f32.mrb[0].mxu0
          %v712 = vadd.f32 %v604, %v711
          %v713 = vpop.f32.mrb[0].mxu0
          %714 = vdwg.mxu0
          %v715 = vpack.c.bf16 %v533, %v530
          %v716 = vpack.c.bf16 %v541, %v538
          %v717 = vpack.c.bf16 %v549, %v546
          %v718 = vpack.c.bf16 %v557, %v554
          %v719 = vpack.c.bf16 %v565, %v562
          %v720 = vpack.c.bf16 %v573, %v570
          %v721 = vpack.c.bf16 %v581, %v578
          %v722 = vpack.c.bf16 %v589, %v586
          %s723 = smul.u32 %s31, 8
          %s724 = smul.addr %s723, 8
          %s725 = scalar_lea.vmem [#allocation2], %s724
          %726 = vst.msk [vmem:[%s725] sm:$0xff] %vm470, %v715
          %727 = vst.msk [vmem:[%s725 + $0x8] sm:$0xff] %vm470, %v716
          %728 = vst.msk [vmem:[%s725 + $0x10] sm:$0xff] %vm470, %v717
          %729 = vst.msk [vmem:[%s725 + $0x18] sm:$0xff] %vm470, %v718
          %730 = vst.msk [vmem:[%s725 + $0x20] sm:$0xff] %vm470, %v719
          %731 = vst.msk [vmem:[%s725 + $0x28] sm:$0xff] %vm470, %v720
          %732 = vst.msk [vmem:[%s725 + $0x30] sm:$0xff] %vm470, %v721
          %733 = vst.msk [vmem:[%s725 + $0x38] sm:$0xff] %vm470, %v722
          %v734 = vpack.c.bf16 %v656, %v653
          %v735 = vpack.c.bf16 %v664, %v661
          %v736 = vpack.c.bf16 %v672, %v669
          %v737 = vpack.c.bf16 %v680, %v677
          %v738 = vpack.c.bf16 %v688, %v685
          %v739 = vpack.c.bf16 %v696, %v693
          %v740 = vpack.c.bf16 %v704, %v701
          %v741 = vpack.c.bf16 %v712, %v709
          %s742 = smul.addr %s723, 8
          %s743 = scalar_lea.vmem [#allocation3], %s742
          %744 = vst.msk [vmem:[%s743] sm:$0xff] %vm470, %v734
          %745 = vst.msk [vmem:[%s743 + $0x8] sm:$0xff] %vm470, %v735
          %746 = vst.msk [vmem:[%s743 + $0x10] sm:$0xff] %vm470, %v736
          %747 = vst.msk [vmem:[%s743 + $0x18] sm:$0xff] %vm470, %v737
          %748 = vst.msk [vmem:[%s743 + $0x20] sm:$0xff] %vm470, %v738
          %749 = vst.msk [vmem:[%s743 + $0x28] sm:$0xff] %vm470, %v739
          %750 = vst.msk [vmem:[%s743 + $0x30] sm:$0xff] %vm470, %v740
          %751 = vst.msk [vmem:[%s743 + $0x38] sm:$0xff] %vm470, %v741
        $region64: #{tpu_custom_call.1} parent=59 // pred_fallthru
          _
        %p752 = scmp.eq.s32.totalorder %s31, 0
        // Predicated region
        $region65: #{tpu_custom_call.1} parent=59 // pred_check
          %p753 = pneg %p752
        $region66: #{tpu_custom_call.1} parent=59 // pred_check_branch
          %755 = sbr.rel (%p753) target = $region68
        $region67: #{tpu_custom_call.1} parent=59 // pred_region
          %vm756 = vcmask 261120
          %757 = vst.msk [vmem:[#allocation4] sm:$0xff] %vm756, 0.0
          %758 = vst.msk [vmem:[#allocation4 + $0x8] sm:$0xff] %vm756, 0.0
          %759 = vst.msk [vmem:[#allocation4 + $0x10] sm:$0xff] %vm756, 0.0
          %760 = vst.msk [vmem:[#allocation4 + $0x18] sm:$0xff] %vm756, 0.0
          %761 = vst.msk [vmem:[#allocation4 + $0x20] sm:$0xff] %vm756, 0.0
          %762 = vst.msk [vmem:[#allocation4 + $0x28] sm:$0xff] %vm756, 0.0
          %763 = vst.msk [vmem:[#allocation4 + $0x30] sm:$0xff] %vm756, 0.0
          %764 = vst.msk [vmem:[#allocation4 + $0x38] sm:$0xff] %vm756, 0.0
          %765 = vst.msk [vmem:[#allocation4 + $0x40] sm:$0xff] %vm756, 0.0
          %766 = vst.msk [vmem:[#allocation4 + $0x48] sm:$0xff] %vm756, 0.0
          %767 = vst.msk [vmem:[#allocation4 + $0x50] sm:$0xff] %vm756, 0.0
          %768 = vst.msk [vmem:[#allocation4 + $0x58] sm:$0xff] %vm756, 0.0
          %769 = vst.msk [vmem:[#allocation4 + $0x60] sm:$0xff] %vm756, 0.0
          %770 = vst.msk [vmem:[#allocation4 + $0x68] sm:$0xff] %vm756, 0.0
          %771 = vst.msk [vmem:[#allocation4 + $0x70] sm:$0xff] %vm756, 0.0
          %772 = vst.msk [vmem:[#allocation4 + $0x78] sm:$0xff] %vm756, 0.0
        $region68: #{tpu_custom_call.1} parent=59 // pred_fallthru
          _
        %s773 = smul.u32 %s30, 128
        %s774 = sshra.s32 %s773, 3
        %s775 = sand.u32 %s773, 7
        %s776 = smul.addr %s774, 4
        %s777 = scalar_lea.vmem %s378, %s776
        %v778 = vld [vmem:[%s777] sm:$0xf]
        %v779 = vld [vmem:[%s777 + $0x4] sm:$0xf]
        %v780 = vld [vmem:[%s777 + $0x8] sm:$0xf]
        %v781 = vld [vmem:[%s777 + $0xc] sm:$0xf]
        %v782 = vld [vmem:[%s777 + $0x10] sm:$0xf]
        %v783 = vld [vmem:[%s777 + $0x14] sm:$0xf]
        %v784 = vld [vmem:[%s777 + $0x18] sm:$0xf]
        %v785 = vld [vmem:[%s777 + $0x1c] sm:$0xf]
        %v786 = vld [vmem:[%s777 + $0x20] sm:$0xf]
        %v787 = vld [vmem:[%s777 + $0x24] sm:$0xf]
        %v788 = vld [vmem:[%s777 + $0x28] sm:$0xf]
        %v789 = vld [vmem:[%s777 + $0x2c] sm:$0xf]
        %v790 = vld [vmem:[%s777 + $0x30] sm:$0xf]
        %v791 = vld [vmem:[%s777 + $0x34] sm:$0xf]
        %v792 = vld [vmem:[%s777 + $0x38] sm:$0xf]
        %v793 = vld [vmem:[%s777 + $0x3c] sm:$0xf]
        %s794 = smul.u32 %s31, 4
        %s795 = smul.addr %s794, 4
        %s796 = scalar_lea.vmem %s2, %s795
        %v797 = vld [vmem:[%s796] sm:$0xf]
        %v798 = vld [vmem:[%s796 + $0x4] sm:$0xf]
        %v799 = vld [vmem:[%s796 + $0x8] sm:$0xf]
        %v800 = vld [vmem:[%s796 + $0xc] sm:$0xf]
        %s801 = scalar_lea.vmem %s6, %s31
        %v802 = vld [vmem:[%s801] sm:$0x1]
        %v804 = vlaneseq
        %v805 = vshrl.u32 %v804, 7
        %v806 = vsub.s32 0, %v805
        %v807 = vrot.slane %v802, %v806
        %v825 = vunpack.c.l.b16 %v778
        %v826 = vunpack.c.l.b16 %v779
        %v827 = vunpack.c.l.b16 %v780
        %v828 = vunpack.c.l.b16 %v781
        %v829 = vunpack.c.l.b16 %v782
        %v830 = vunpack.c.l.b16 %v783
        %v831 = vunpack.c.l.b16 %v784
        %v832 = vunpack.c.l.b16 %v785
        %v833 = vunpack.c.l.b16 %v786
        %v834 = vunpack.c.l.b16 %v787
        %v835 = vunpack.c.l.b16 %v788
        %v836 = vunpack.c.l.b16 %v789
        %v837 = vunpack.c.l.b16 %v790
        %v838 = vunpack.c.l.b16 %v791
        %v839 = vunpack.c.l.b16 %v792
        %v840 = vunpack.c.l.b16 %v793
        %v841 = vpack.c.b16 %v826, %v825
        %v842 = vpack.c.b16 %v828, %v827
        %v843 = vpack.c.b16 %v830, %v829
        %v844 = vpack.c.b16 %v832, %v831
        %v845 = vpack.c.b16 %v834, %v833
        %v846 = vpack.c.b16 %v836, %v835
        %v847 = vpack.c.b16 %v838, %v837
        %v848 = vpack.c.b16 %v840, %v839
        %v853 = vunpack.c.l.b16 %v797
        %v854 = vunpack.c.l.b16 %v798
        %v855 = vunpack.c.l.b16 %v799
        %v856 = vunpack.c.l.b16 %v800
        %v857 = vpack.c.b16 %v854, %v853
        %v858 = vpack.c.b16 %v856, %v855
        %vm861 = vcmask 261120
        %v863 = vsel %vm861, %v841, 0
        %v866 = vsel %vm861, %v842, 0
        %v869 = vsel %vm861, %v843, 0
        %v872 = vsel %vm861, %v844, 0
        %v875 = vsel %vm861, %v845, 0
        %v878 = vsel %vm861, %v846, 0
        %v881 = vsel %vm861, %v847, 0
        %v884 = vsel %vm861, %v848, 0
        %886 = vmatprep.subr.bf16.mxu0 0
        %887 = vmatpush1.bf16.msra.mxu0 %v857
        %888 = vmatprep.subr.bf16.mxu0 0
        %889 = vmatpush1.bf16.msra.mxu0 %v858
        %890 = vmatprep.subr.bf16.mxu0 0
        %891 = vmatpush1.bf16.msra.mxu0 0
        %892 = vmatprep.subr.bf16.mxu0 0
        %893 = vmatpush1.bf16.msra.mxu0 0
        %894 = vmatprep.subr.bf16.mxu0 0
        %895 = vmatpush1.bf16.msra.mxu0 0
        %896 = vmatprep.subr.bf16.mxu0 0
        %897 = vmatpush1.bf16.msra.mxu0 0
        %898 = vmatprep.subr.bf16.mxu0 0
        %899 = vmatpush1.bf16.msra.mxu0 0
        %900 = vmatprep.subr.bf16.mxu0 0
        %901 = vmatpush1.bf16.msra.mxu0 0
        %902 = vmatprep.subr.bf16.mxu0 0
        %903 = vmatpush1.bf16.msra.mxu0 0
        %904 = vmatprep.subr.bf16.mxu0 0
        %905 = vmatpush1.bf16.msra.mxu0 0
        %906 = vmatprep.subr.bf16.mxu0 0
        %907 = vmatpush1.bf16.msra.mxu0 0
        %908 = vmatprep.subr.bf16.mxu0 0
        %909 = vmatpush1.bf16.msra.mxu0 0
        %910 = vmatprep.subr.bf16.mxu0 0
        %911 = vmatpush1.bf16.msra.mxu0 0
        %912 = vmatprep.subr.bf16.mxu0 0
        %913 = vmatpush1.bf16.msra.mxu0 0
        %914 = vmatprep.subr.bf16.mxu0 0
        %915 = vmatpush1.bf16.msra.mxu0 0
        %916 = vmatprep.subr.bf16.mxu0 0
        %917 = vmatpush1.bf16.msra.mxu0 0
        %918 = vmatprep.mubr.bf16.mxu0 0
        %919 = vmatmul.mubr.bf16.gmra.mrb[0].mxu0 %v863
        %v920 = vpop.f32.mrb[0].mxu0
        %v921 = vadd.f32 %v807, %v920
        %v922 = vpop.f32.mrb[0].mxu0
        %v923 = vpop.f32.mrb[0].mxu0
        %v924 = vadd.f32 %v807, %v923
        %v925 = vpop.f32.mrb[0].mxu0
        %926 = vmatprep.mubr.bf16.mxu0 0
        %927 = vmatmul.mubr.bf16.gmra.mrb[0].mxu0 %v866
        %v928 = vpop.f32.mrb[0].mxu0
        %v929 = vadd.f32 %v807, %v928
        %v930 = vpop.f32.mrb[0].mxu0
        %v931 = vpop.f32.mrb[0].mxu0
        %v932 = vadd.f32 %v807, %v931
        %v933 = vpop.f32.mrb[0].mxu0
        %934 = vmatprep.mubr.bf16.mxu0 0
        %935 = vmatmul.mubr.bf16.gmra.mrb[0].mxu0 %v869
        %v936 = vpop.f32.mrb[0].mxu0
        %v937 = vadd.f32 %v807, %v936
        %v938 = vpop.f32.mrb[0].mxu0
        %v939 = vpop.f32.mrb[0].mxu0
        %v940 = vadd.f32 %v807, %v939
        %v941 = vpop.f32.mrb[0].mxu0
        %942 = vmatprep.mubr.bf16.mxu0 0
        %943 = vmatmul.mubr.bf16.gmra.mrb[0].mxu0 %v872
        %v944 = vpop.f32.mrb[0].mxu0
        %v945 = vadd.f32 %v807, %v944
        %v946 = vpop.f32.mrb[0].mxu0
        %v947 = vpop.f32.mrb[0].mxu0
        %v948 = vadd.f32 %v807, %v947
        %v949 = vpop.f32.mrb[0].mxu0
        %950 = vmatprep.mubr.bf16.mxu0 0
        %951 = vmatmul.mubr.bf16.gmra.mrb[0].mxu0 %v875
        %v952 = vpop.f32.mrb[0].mxu0
        %v953 = vadd.f32 %v807, %v952
        %v954 = vpop.f32.mrb[0].mxu0
        %v955 = vpop.f32.mrb[0].mxu0
        %v956 = vadd.f32 %v807, %v955
        %v957 = vpop.f32.mrb[0].mxu0
        %958 = vmatprep.mubr.bf16.mxu0 0
        %959 = vmatmul.mubr.bf16.gmra.mrb[0].mxu0 %v878
        %v960 = vpop.f32.mrb[0].mxu0
        %v961 = vadd.f32 %v807, %v960
        %v962 = vpop.f32.mrb[0].mxu0
        %v963 = vpop.f32.mrb[0].mxu0
        %v964 = vadd.f32 %v807, %v963
        %v965 = vpop.f32.mrb[0].mxu0
        %966 = vmatprep.mubr.bf16.mxu0 0
        %967 = vmatmul.mubr.bf16.gmra.mrb[0].mxu0 %v881
        %v968 = vpop.f32.mrb[0].mxu0
        %v969 = vadd.f32 %v807, %v968
        %v970 = vpop.f32.mrb[0].mxu0
        %v971 = vpop.f32.mrb[0].mxu0
        %v972 = vadd.f32 %v807, %v971
        %v973 = vpop.f32.mrb[0].mxu0
        %974 = vmatprep.mubr.bf16.mxu0 0
        %975 = vmatmul.mubr.bf16.gmra.mrb[0].mxu0 %v884
        %v976 = vpop.f32.mrb[0].mxu0
        %v977 = vadd.f32 %v807, %v976
        %v978 = vpop.f32.mrb[0].mxu0
        %v979 = vpop.f32.mrb[0].mxu0
        %v980 = vadd.f32 %v807, %v979
        %v981 = vpop.f32.mrb[0].mxu0
        %982 = vdwg.mxu0
        %v983 = vmul.f32 %v921, 0.35355338
        %v984 = vmul.f32 %v924, 0.35355338
        %v985 = vmul.f32 %v929, 0.35355338
        %v986 = vmul.f32 %v932, 0.35355338
        %v987 = vmul.f32 %v937, 0.35355338
        %v988 = vmul.f32 %v940, 0.35355338
        %v989 = vmul.f32 %v945, 0.35355338
        %v990 = vmul.f32 %v948, 0.35355338
        %v991 = vmul.f32 %v953, 0.35355338
        %v992 = vmul.f32 %v956, 0.35355338
        %v993 = vmul.f32 %v961, 0.35355338
        %v994 = vmul.f32 %v964, 0.35355338
        %v995 = vmul.f32 %v969, 0.35355338
        %v996 = vmul.f32 %v972, 0.35355338
        %v997 = vmul.f32 %v977, 0.35355338
        %v998 = vmul.f32 %v980, 0.35355338
        %v999 = vpack.c.bf16 %v984, %v983
        %v1000 = vpack.c.bf16 %v986, %v985
        %v1001 = vpack.c.bf16 %v988, %v987
        %v1002 = vpack.c.bf16 %v990, %v989
        %v1003 = vpack.c.bf16 %v992, %v991
        %v1004 = vpack.c.bf16 %v994, %v993
        %v1005 = vpack.c.bf16 %v996, %v995
        %v1006 = vpack.c.bf16 %v998, %v997
        %s1007 = smul.u32 %s31, 8
        %s1008 = smul.addr %s1007, 8
        %s1009 = scalar_lea.vmem [#allocation2], %s1008
        %v1010 = vld [vmem:[%s1009] sm:$0xff]
        %v1011 = vld [vmem:[%s1009 + $0x8] sm:$0xff]
        %v1012 = vld [vmem:[%s1009 + $0x10] sm:$0xff]
        %v1013 = vld [vmem:[%s1009 + $0x18] sm:$0xff]
        %v1014 = vld [vmem:[%s1009 + $0x20] sm:$0xff]
        %v1015 = vld [vmem:[%s1009 + $0x28] sm:$0xff]
        %v1016 = vld [vmem:[%s1009 + $0x30] sm:$0xff]
        %v1017 = vld [vmem:[%s1009 + $0x38] sm:$0xff]
        %s1018 = smul.addr %s1007, 8
        %s1019 = scalar_lea.vmem [#allocation3], %s1018
        %v1020 = vld [vmem:[%s1019] sm:$0xff]
        %v1021 = vld [vmem:[%s1019 + $0x8] sm:$0xff]
        %v1022 = vld [vmem:[%s1019 + $0x10] sm:$0xff]
        %v1023 = vld [vmem:[%s1019 + $0x18] sm:$0xff]
        %v1024 = vld [vmem:[%s1019 + $0x20] sm:$0xff]
        %v1025 = vld [vmem:[%s1019 + $0x28] sm:$0xff]
        %v1026 = vld [vmem:[%s1019 + $0x30] sm:$0xff]
        %v1027 = vld [vmem:[%s1019 + $0x38] sm:$0xff]
        %v1028 = vld [vmem:[%s1] sm:$0x1]
        %v1030 = vlaneseq
        %v1031 = vshrl.u32 %v1030, 7
        %v1032 = vsub.s32 0, %v1031
        %v1033 = vrot.slane %v1028, %v1032
        %vm1035 = vcmask 64512
        %v1037 = vsel %vm1035, %v999, 0
        %v1040 = vsel %vm1035, %v1000, 0
        %v1043 = vsel %vm1035, %v1001, 0
        %v1046 = vsel %vm1035, %v1002, 0
        %v1049 = vsel %vm1035, %v1003, 0
        %v1052 = vsel %vm1035, %v1004, 0
        %v1055 = vsel %vm1035, %v1005, 0
        %v1058 = vsel %vm1035, %v1006, 0
        %v1061 = vsel %vm1035, %v1010, 0
        %v1064 = vsel %vm1035, %v1011, 0
        %v1067 = vsel %vm1035, %v1012, 0
        %v1070 = vsel %vm1035, %v1013, 0
        %v1073 = vsel %vm1035, %v1014, 0
        %v1076 = vsel %vm1035, %v1015, 0
        %v1079 = vsel %vm1035, %v1016, 0
        %v1082 = vsel %vm1035, %v1017, 0
        %1084 = vmatprep.subr.bf16.mxu0 0
        %1085 = vmatpush1.bf16.xpose.msra.mxu0 %v1061
        %1086 = vmatprep.subr.bf16.mxu0 0
        %1087 = vmatpush1.bf16.xpose.msra.mxu0 %v1064
        %1088 = vmatprep.subr.bf16.mxu0 0
        %1089 = vmatpush1.bf16.xpose.msra.mxu0 %v1067
        %1090 = vmatprep.subr.bf16.mxu0 0
        %1091 = vmatpush1.bf16.xpose.msra.mxu0 %v1070
        %1092 = vmatprep.subr.bf16.mxu0 0
        %1093 = vmatpush1.bf16.xpose.msra.mxu0 %v1073
        %1094 = vmatprep.subr.bf16.mxu0 0
        %1095 = vmatpush1.bf16.xpose.msra.mxu0 %v1076
        %1096 = vmatprep.subr.bf16.mxu0 0
        %1097 = vmatpush1.bf16.xpose.msra.mxu0 %v1079
        %1098 = vmatprep.subr.bf16.mxu0 0
        %1099 = vmatpush1.bf16.xpose.msra.mxu0 %v1082
        %1100 = vmatprep.subr.bf16.mxu0 0
        %1101 = vmatpush1.bf16.xpose.msra.mxu0 0
        %1102 = vmatprep.subr.bf16.mxu0 0
        %1103 = vmatpush1.bf16.xpose.msra.mxu0 0
        %1104 = vmatprep.subr.bf16.mxu0 0
        %1105 = vmatpush1.bf16.xpose.msra.mxu0 0
        %1106 = vmatprep.subr.bf16.mxu0 0
        %1107 = vmatpush1.bf16.xpose.msra.mxu0 0
        %1108 = vmatprep.subr.bf16.mxu0 0
        %1109 = vmatpush1.bf16.xpose.msra.mxu0 0
        %1110 = vmatprep.subr.bf16.mxu0 0
        %1111 = vmatpush1.bf16.xpose.msra.mxu0 0
        %1112 = vmatprep.subr.bf16.mxu0 0
        %1113 = vmatpush1.bf16.xpose.msra.mxu0 0
        %1114 = vmatprep.subr.bf16.mxu0 0
        %1115 = vmatpush1.bf16.xpose.msra.mxu0 0
        %1116 = vmatprep.mubr.bf16.mxu0 0
        %1117 = vmatmul.mubr.bf16.gmra.mrb[0].mxu0 %v1037
        %v1118 = vpop.f32.mrb[0].mxu0
        %v1119 = vadd.f32 %v1033, %v1118
        %v1120 = vpop.f32.mrb[0].mxu0
        %v1121 = vpop.f32.mrb[0].mxu0
        %v1122 = vadd.f32 %v1033, %v1121
        %v1123 = vpop.f32.mrb[0].mxu0
        %1124 = vmatprep.mubr.bf16.mxu0 0
        %1125 = vmatmul.mubr.bf16.gmra.mrb[0].mxu0 %v1040
        %v1126 = vpop.f32.mrb[0].mxu0
        %v1127 = vadd.f32 %v1033, %v1126
        %v1128 = vpop.f32.mrb[0].mxu0
        %v1129 = vpop.f32.mrb[0].mxu0
        %v1130 = vadd.f32 %v1033, %v1129
        %v1131 = vpop.f32.mrb[0].mxu0
        %1132 = vmatprep.mubr.bf16.mxu0 0
        %1133 = vmatmul.mubr.bf16.gmra.mrb[0].mxu0 %v1043
        %v1134 = vpop.f32.mrb[0].mxu0
        %v1135 = vadd.f32 %v1033, %v1134
        %v1136 = vpop.f32.mrb[0].mxu0
        %v1137 = vpop.f32.mrb[0].mxu0
        %v1138 = vadd.f32 %v1033, %v1137
        %v1139 = vpop.f32.mrb[0].mxu0
        %1140 = vmatprep.mubr.bf16.mxu0 0
        %1141 = vmatmul.mubr.bf16.gmra.mrb[0].mxu0 %v1046
        %v1142 = vpop.f32.mrb[0].mxu0
        %v1143 = vadd.f32 %v1033, %v1142
        %v1144 = vpop.f32.mrb[0].mxu0
        %v1145 = vpop.f32.mrb[0].mxu0
        %v1146 = vadd.f32 %v1033, %v1145
        %v1147 = vpop.f32.mrb[0].mxu0
        %1148 = vmatprep.mubr.bf16.mxu0 0
        %1149 = vmatmul.mubr.bf16.gmra.mrb[0].mxu0 %v1049
        %v1150 = vpop.f32.mrb[0].mxu0
        %v1151 = vadd.f32 %v1033, %v1150
        %v1152 = vpop.f32.mrb[0].mxu0
        %v1153 = vpop.f32.mrb[0].mxu0
        %v1154 = vadd.f32 %v1033, %v1153
        %v1155 = vpop.f32.mrb[0].mxu0
        %1156 = vmatprep.mubr.bf16.mxu0 0
        %1157 = vmatmul.mubr.bf16.gmra.mrb[0].mxu0 %v1052
        %v1158 = vpop.f32.mrb[0].mxu0
        %v1159 = vadd.f32 %v1033, %v1158
        %v1160 = vpop.f32.mrb[0].mxu0
        %v1161 = vpop.f32.mrb[0].mxu0
        %v1162 = vadd.f32 %v1033, %v1161
        %v1163 = vpop.f32.mrb[0].mxu0
        %1164 = vmatprep.mubr.bf16.mxu0 0
        %1165 = vmatmul.mubr.bf16.gmra.mrb[0].mxu0 %v1055
        %v1166 = vpop.f32.mrb[0].mxu0
        %v1167 = vadd.f32 %v1033, %v1166
        %v1168 = vpop.f32.mrb[0].mxu0
        %v1169 = vpop.f32.mrb[0].mxu0
        %v1170 = vadd.f32 %v1033, %v1169
        %v1171 = vpop.f32.mrb[0].mxu0
        %1172 = vmatprep.mubr.bf16.mxu0 0
        %1173 = vmatmul.mubr.bf16.gmra.mrb[0].mxu0 %v1058
        %v1174 = vpop.f32.mrb[0].mxu0
        %v1175 = vadd.f32 %v1033, %v1174
        %v1176 = vpop.f32.mrb[0].mxu0
        %v1177 = vpop.f32.mrb[0].mxu0
        %v1178 = vadd.f32 %v1033, %v1177
        %v1179 = vpop.f32.mrb[0].mxu0
        %1180 = vdwg.mxu0
        %1181 = vmax.xlane.f32.xlu0 %v1119
        %v1182 = vpop.xlane.xlu0 %1181
        %1183 = vmax.xlane.f32.xlu0 %v1122
        %v1184 = vpop.xlane.xlu0 %1183
        %1185 = vmax.xlane.f32.xlu0 %v1127
        %v1186 = vpop.xlane.xlu0 %1185
        %1187 = vmax.xlane.f32.xlu0 %v1130
        %v1188 = vpop.xlane.xlu0 %1187
        %1189 = vmax.xlane.f32.xlu0 %v1135
        %v1190 = vpop.xlane.xlu0 %1189
        %1191 = vmax.xlane.f32.xlu0 %v1138
        %v1192 = vpop.xlane.xlu0 %1191
        %1193 = vmax.xlane.f32.xlu0 %v1143
        %v1194 = vpop.xlane.xlu0 %1193
        %1195 = vmax.xlane.f32.xlu0 %v1146
        %v1196 = vpop.xlane.xlu0 %1195
        %1197 = vmax.xlane.f32.xlu0 %v1151
        %v1198 = vpop.xlane.xlu0 %1197
        %1199 = vmax.xlane.f32.xlu0 %v1154
        %v1200 = vpop.xlane.xlu0 %1199
        %1201 = vmax.xlane.f32.xlu0 %v1159
        %v1202 = vpop.xlane.xlu0 %1201
        %1203 = vmax.xlane.f32.xlu0 %v1162
        %v1204 = vpop.xlane.xlu0 %1203
        %1205 = vmax.xlane.f32.xlu0 %v1167
        %v1206 = vpop.xlane.xlu0 %1205
        %1207 = vmax.xlane.f32.xlu0 %v1170
        %v1208 = vpop.xlane.xlu0 %1207
        %1209 = vmax.xlane.f32.xlu0 %v1175
        %v1210 = vpop.xlane.xlu0 %1209
        %1211 = vmax.xlane.f32.xlu0 %v1178
        %v1212 = vpop.xlane.xlu0 %1211
        %v1213 = vsub.f32 %v1119, %v1182
        %v1214 = vsub.f32 %v1122, %v1184
        %v1215 = vsub.f32 %v1127, %v1186
        %v1216 = vsub.f32 %v1130, %v1188
        %v1217 = vsub.f32 %v1135, %v1190
        %v1218 = vsub.f32 %v1138, %v1192
        %v1219 = vsub.f32 %v1143, %v1194
        %v1220 = vsub.f32 %v1146, %v1196
        %v1221 = vsub.f32 %v1151, %v1198
        %v1222 = vsub.f32 %v1154, %v1200
        %v1223 = vsub.f32 %v1159, %v1202
        %v1224 = vsub.f32 %v1162, %v1204
        %v1225 = vsub.f32 %v1167, %v1206
        %v1226 = vsub.f32 %v1170, %v1208
        %v1227 = vsub.f32 %v1175, %v1210
        %v1228 = vsub.f32 %v1178, %v1212
        %v1229 = vmul.f32 %v1213, 1.442695
        %v1230 = vpow.pop %v1229
        %v1231 = vmul.f32 %v1214, 1.442695
        %v1232 = vpow.pop %v1231
        %v1233 = vmul.f32 %v1215, 1.442695
        %v1234 = vpow.pop %v1233
        %v1235 = vmul.f32 %v1216, 1.442695
        %v1236 = vpow.pop %v1235
        %v1237 = vmul.f32 %v1217, 1.442695
        %v1238 = vpow.pop %v1237
        %v1239 = vmul.f32 %v1218, 1.442695
        %v1240 = vpow.pop %v1239
        %v1241 = vmul.f32 %v1219, 1.442695
        %v1242 = vpow.pop %v1241
        %v1243 = vmul.f32 %v1220, 1.442695
        %v1244 = vpow.pop %v1243
        %v1245 = vmul.f32 %v1221, 1.442695
        %v1246 = vpow.pop %v1245
        %v1247 = vmul.f32 %v1222, 1.442695
        %v1248 = vpow.pop %v1247
        %v1249 = vmul.f32 %v1223, 1.442695
        %v1250 = vpow.pop %v1249
        %v1251 = vmul.f32 %v1224, 1.442695
        %v1252 = vpow.pop %v1251
        %v1253 = vmul.f32 %v1225, 1.442695
        %v1254 = vpow.pop %v1253
        %v1255 = vmul.f32 %v1226, 1.442695
        %v1256 = vpow.pop %v1255
        %v1257 = vmul.f32 %v1227, 1.442695
        %v1258 = vpow.pop %v1257
        %v1259 = vmul.f32 %v1228, 1.442695
        %v1260 = vpow.pop %v1259
        %1261 = vadd.xlane.f32.xlu0 %v1230
        %v1262 = vpop.xlane.xlu0 %1261
        %1263 = vadd.xlane.f32.xlu0 %v1232
        %v1264 = vpop.xlane.xlu0 %1263
        %1265 = vadd.xlane.f32.xlu0 %v1234
        %v1266 = vpop.xlane.xlu0 %1265
        %1267 = vadd.xlane.f32.xlu0 %v1236
        %v1268 = vpop.xlane.xlu0 %1267
        %1269 = vadd.xlane.f32.xlu0 %v1238
        %v1270 = vpop.xlane.xlu0 %1269
        %1271 = vadd.xlane.f32.xlu0 %v1240
        %v1272 = vpop.xlane.xlu0 %1271
        %1273 = vadd.xlane.f32.xlu0 %v1242
        %v1274 = vpop.xlane.xlu0 %1273
        %1275 = vadd.xlane.f32.xlu0 %v1244
        %v1276 = vpop.xlane.xlu0 %1275
        %1277 = vadd.xlane.f32.xlu0 %v1246
        %v1278 = vpop.xlane.xlu0 %1277
        %1279 = vadd.xlane.f32.xlu0 %v1248
        %v1280 = vpop.xlane.xlu0 %1279
        %1281 = vadd.xlane.f32.xlu0 %v1250
        %v1282 = vpop.xlane.xlu0 %1281
        %1283 = vadd.xlane.f32.xlu0 %v1252
        %v1284 = vpop.xlane.xlu0 %1283
        %1285 = vadd.xlane.f32.xlu0 %v1254
        %v1286 = vpop.xlane.xlu0 %1285
        %1287 = vadd.xlane.f32.xlu0 %v1256
        %v1288 = vpop.xlane.xlu0 %1287
        %1289 = vadd.xlane.f32.xlu0 %v1258
        %v1290 = vpop.xlane.xlu0 %1289
        %1291 = vadd.xlane.f32.xlu0 %v1260
        %v1292 = vpop.xlane.xlu0 %1291
        %v1293 = vpack.c.bf16 %v1232, %v1230
        %v1294 = vpack.c.bf16 %v1236, %v1234
        %v1295 = vpack.c.bf16 %v1240, %v1238
        %v1296 = vpack.c.bf16 %v1244, %v1242
        %v1297 = vpack.c.bf16 %v1248, %v1246
        %v1298 = vpack.c.bf16 %v1252, %v1250
        %v1299 = vpack.c.bf16 %v1256, %v1254
        %v1300 = vpack.c.bf16 %v1260, %v1258
        %1301 = vmatprep.subr.bf16.mxu0 0
        %1302 = vmatpush1.bf16.msra.mxu0 %v1020
        %1303 = vmatprep.subr.bf16.mxu0 0
        %1304 = vmatpush1.bf16.msra.mxu0 %v1021
        %1305 = vmatprep.subr.bf16.mxu0 0
        %1306 = vmatpush1.bf16.msra.mxu0 %v1022
        %1307 = vmatprep.subr.bf16.mxu0 0
        %1308 = vmatpush1.bf16.msra.mxu0 %v1023
        %1309 = vmatprep.subr.bf16.mxu0 0
        %1310 = vmatpush1.bf16.msra.mxu0 %v1024
        %1311 = vmatprep.subr.bf16.mxu0 0
        %1312 = vmatpush1.bf16.msra.mxu0 %v1025
        %1313 = vmatprep.subr.bf16.mxu0 0
        %1314 = vmatpush1.bf16.msra.mxu0 %v1026
        %1315 = vmatprep.subr.bf16.mxu0 0
        %1316 = vmatpush1.bf16.msra.mxu0 %v1027
        %1317 = vmatprep.subr.bf16.mxu0 0
        %1318 = vmatpush1.bf16.msra.mxu0 0
        %1319 = vmatprep.subr.bf16.mxu0 0
        %1320 = vmatpush1.bf16.msra.mxu0 0
        %1321 = vmatprep.subr.bf16.mxu0 0
        %1322 = vmatpush1.bf16.msra.mxu0 0
        %1323 = vmatprep.subr.bf16.mxu0 0
        %1324 = vmatpush1.bf16.msra.mxu0 0
        %1325 = vmatprep.subr.bf16.mxu0 0
        %1326 = vmatpush1.bf16.msra.mxu0 0
        %1327 = vmatprep.subr.bf16.mxu0 0
        %1328 = vmatpush1.bf16.msra.mxu0 0
        %1329 = vmatprep.subr.bf16.mxu0 0
        %1330 = vmatpush1.bf16.msra.mxu0 0
        %1331 = vmatprep.subr.bf16.mxu0 0
        %1332 = vmatpush1.bf16.msra.mxu0 0
        %1333 = vmatprep.mubr.bf16.mxu0 0
        %1334 = vmatmul.mubr.bf16.gmra.mrb[0].mxu0 %v1293
        %v1335 = vpop.f32.mrb[0].mxu0
        %v1336 = vadd.f32 0.0, %v1335
        %v1337 = vpop.f32.mrb[0].mxu0
        %v1338 = vpop.f32.mrb[0].mxu0
        %v1339 = vadd.f32 0.0, %v1338
        %v1340 = vpop.f32.mrb[0].mxu0
        %1341 = vmatprep.mubr.bf16.mxu0 0
        %1342 = vmatmul.mubr.bf16.gmra.mrb[0].mxu0 %v1294
        %v1343 = vpop.f32.mrb[0].mxu0
        %v1344 = vadd.f32 0.0, %v1343
        %v1345 = vpop.f32.mrb[0].mxu0
        %v1346 = vpop.f32.mrb[0].mxu0
        %v1347 = vadd.f32 0.0, %v1346
        %v1348 = vpop.f32.mrb[0].mxu0
        %1349 = vmatprep.mubr.bf16.mxu0 0
        %1350 = vmatmul.mubr.bf16.gmra.mrb[0].mxu0 %v1295
        %v1351 = vpop.f32.mrb[0].mxu0
        %v1352 = vadd.f32 0.0, %v1351
        %v1353 = vpop.f32.mrb[0].mxu0
        %v1354 = vpop.f32.mrb[0].mxu0
        %v1355 = vadd.f32 0.0, %v1354
        %v1356 = vpop.f32.mrb[0].mxu0
        %1357 = vmatprep.mubr.bf16.mxu0 0
        %1358 = vmatmul.mubr.bf16.gmra.mrb[0].mxu0 %v1296
        %v1359 = vpop.f32.mrb[0].mxu0
        %v1360 = vadd.f32 0.0, %v1359
        %v1361 = vpop.f32.mrb[0].mxu0
        %v1362 = vpop.f32.mrb[0].mxu0
        %v1363 = vadd.f32 0.0, %v1362
        %v1364 = vpop.f32.mrb[0].mxu0
        %1365 = vmatprep.mubr.bf16.mxu0 0
        %1366 = vmatmul.mubr.bf16.gmra.mrb[0].mxu0 %v1297
        %v1367 = vpop.f32.mrb[0].mxu0
        %v1368 = vadd.f32 0.0, %v1367
        %v1369 = vpop.f32.mrb[0].mxu0
        %v1370 = vpop.f32.mrb[0].mxu0
        %v1371 = vadd.f32 0.0, %v1370
        %v1372 = vpop.f32.mrb[0].mxu0
        %1373 = vmatprep.mubr.bf16.mxu0 0
        %1374 = vmatmul.mubr.bf16.gmra.mrb[0].mxu0 %v1298
        %v1375 = vpop.f32.mrb[0].mxu0
        %v1376 = vadd.f32 0.0, %v1375
        %v1377 = vpop.f32.mrb[0].mxu0
        %v1378 = vpop.f32.mrb[0].mxu0
        %v1379 = vadd.f32 0.0, %v1378
        %v1380 = vpop.f32.mrb[0].mxu0
        %1381 = vmatprep.mubr.bf16.mxu0 0
        %1382 = vmatmul.mubr.bf16.gmra.mrb[0].mxu0 %v1299
        %v1383 = vpop.f32.mrb[0].mxu0
        %v1384 = vadd.f32 0.0, %v1383
        %v1385 = vpop.f32.mrb[0].mxu0
        %v1386 = vpop.f32.mrb[0].mxu0
        %v1387 = vadd.f32 0.0, %v1386
        %v1388 = vpop.f32.mrb[0].mxu0
        %1389 = vmatprep.mubr.bf16.mxu0 0
        %1390 = vmatmul.mubr.bf16.gmra.mrb[0].mxu0 %v1300
        %v1391 = vpop.f32.mrb[0].mxu0
        %v1392 = vadd.f32 0.0, %v1391
        %v1393 = vpop.f32.mrb[0].mxu0
        %v1394 = vpop.f32.mrb[0].mxu0
        %v1395 = vadd.f32 0.0, %v1394
        %v1396 = vpop.f32.mrb[0].mxu0
        %1397 = vdwg.mxu0
        %v1398 = vrcp.pop %v1262
        %v1399 = vrcp.pop %v1264
        %v1400 = vrcp.pop %v1266
        %v1401 = vrcp.pop %v1268
        %v1402 = vrcp.pop %v1270
        %v1403 = vrcp.pop %v1272
        %v1404 = vrcp.pop %v1274
        %v1405 = vrcp.pop %v1276
        %v1406 = vrcp.pop %v1278
        %v1407 = vrcp.pop %v1280
        %v1408 = vrcp.pop %v1282
        %v1409 = vrcp.pop %v1284
        %v1410 = vrcp.pop %v1286
        %v1411 = vrcp.pop %v1288
        %v1412 = vrcp.pop %v1290
        %v1413 = vrcp.pop %v1292
        %v1414 = vmul.f32 %v1336, %v1398
        %v1415 = vmul.f32 %v1339, %v1399
        %v1416 = vmul.f32 %v1344, %v1400
        %v1417 = vmul.f32 %v1347, %v1401
        %v1418 = vmul.f32 %v1352, %v1402
        %v1419 = vmul.f32 %v1355, %v1403
        %v1420 = vmul.f32 %v1360, %v1404
        %v1421 = vmul.f32 %v1363, %v1405
        %v1422 = vmul.f32 %v1368, %v1406
        %v1423 = vmul.f32 %v1371, %v1407
        %v1424 = vmul.f32 %v1376, %v1408
        %v1425 = vmul.f32 %v1379, %v1409
        %v1426 = vmul.f32 %v1384, %v1410
        %v1427 = vmul.f32 %v1387, %v1411
        %v1428 = vmul.f32 %v1392, %v1412
        %v1429 = vmul.f32 %v1395, %v1413
        %1438 = vrot.lane.b32.xlu0 %v999, 120
        %v1439 = vpop.permute.xlu0 %1438
        %1440 = vrot.lane.b32.xlu0 %v1000, 120
        %v1441 = vpop.permute.xlu0 %1440
        %1442 = vrot.lane.b32.xlu0 %v1001, 120
        %v1443 = vpop.permute.xlu0 %1442
        %1444 = vrot.lane.b32.xlu0 %v1002, 120
        %v1445 = vpop.permute.xlu0 %1444
        %1446 = vrot.lane.b32.xlu0 %v1003, 120
        %v1447 = vpop.permute.xlu0 %1446
        %1448 = vrot.lane.b32.xlu0 %v1004, 120
        %v1449 = vpop.permute.xlu0 %1448
        %1450 = vrot.lane.b32.xlu0 %v1005, 120
        %v1451 = vpop.permute.xlu0 %1450
        %1452 = vrot.lane.b32.xlu0 %v1006, 120
        %v1453 = vpop.permute.xlu0 %1452
        %1462 = vrot.lane.b32.xlu0 %v1010, 120
        %v1463 = vpop.permute.xlu0 %1462
        %1464 = vrot.lane.b32.xlu0 %v1011, 120
        %v1465 = vpop.permute.xlu0 %1464
        %1466 = vrot.lane.b32.xlu0 %v1012, 120
        %v1467 = vpop.permute.xlu0 %1466
        %1468 = vrot.lane.b32.xlu0 %v1013, 120
        %v1469 = vpop.permute.xlu0 %1468
        %1470 = vrot.lane.b32.xlu0 %v1014, 120
        %v1471 = vpop.permute.xlu0 %1470
        %1472 = vrot.lane.b32.xlu0 %v1015, 120
        %v1473 = vpop.permute.xlu0 %1472
        %1474 = vrot.lane.b32.xlu0 %v1016, 120
        %v1475 = vpop.permute.xlu0 %1474
        %1476 = vrot.lane.b32.xlu0 %v1017, 120
        %v1477 = vpop.permute.xlu0 %1476
        %v1479 = vsel %vm1035, %v1439, 0
        %v1482 = vsel %vm1035, %v1441, 0
        %v1485 = vsel %vm1035, %v1443, 0
        %v1488 = vsel %vm1035, %v1445, 0
        %v1491 = vsel %vm1035, %v1447, 0
        %v1494 = vsel %vm1035, %v1449, 0
        %v1497 = vsel %vm1035, %v1451, 0
        %v1500 = vsel %vm1035, %v1453, 0
        %v1503 = vsel %vm1035, %v1463, 0
        %v1506 = vsel %vm1035, %v1465, 0
        %v1509 = vsel %vm1035, %v1467, 0
        %v1512 = vsel %vm1035, %v1469, 0
        %v1515 = vsel %vm1035, %v1471, 0
        %v1518 = vsel %vm1035, %v1473, 0
        %v1521 = vsel %vm1035, %v1475, 0
        %v1524 = vsel %vm1035, %v1477, 0
        %1526 = vmatprep.subr.bf16.mxu0 0
        %1527 = vmatpush1.bf16.xpose.msra.mxu0 %v1503
        %1528 = vmatprep.subr.bf16.mxu0 0
        %1529 = vmatpush1.bf16.xpose.msra.mxu0 %v1506
        %1530 = vmatprep.subr.bf16.mxu0 0
        %1531 = vmatpush1.bf16.xpose.msra.mxu0 %v1509
        %1532 = vmatprep.subr.bf16.mxu0 0
        %1533 = vmatpush1.bf16.xpose.msra.mxu0 %v1512
        %1534 = vmatprep.subr.bf16.mxu0 0
        %1535 = vmatpush1.bf16.xpose.msra.mxu0 %v1515
        %1536 = vmatprep.subr.bf16.mxu0 0
        %1537 = vmatpush1.bf16.xpose.msra.mxu0 %v1518
        %1538 = vmatprep.subr.bf16.mxu0 0
        %1539 = vmatpush1.bf16.xpose.msra.mxu0 %v1521
        %1540 = vmatprep.subr.bf16.mxu0 0
        %1541 = vmatpush1.bf16.xpose.msra.mxu0 %v1524
        %1542 = vmatprep.subr.bf16.mxu0 0
        %1543 = vmatpush1.bf16.xpose.msra.mxu0 0
        %1544 = vmatprep.subr.bf16.mxu0 0
        %1545 = vmatpush1.bf16.xpose.msra.mxu0 0
        %1546 = vmatprep.subr.bf16.mxu0 0
        %1547 = vmatpush1.bf16.xpose.msra.mxu0 0
        %1548 = vmatprep.subr.bf16.mxu0 0
        %1549 = vmatpush1.bf16.xpose.msra.mxu0 0
        %1550 = vmatprep.subr.bf16.mxu0 0
        %1551 = vmatpush1.bf16.xpose.msra.mxu0 0
        %1552 = vmatprep.subr.bf16.mxu0 0
        %1553 = vmatpush1.bf16.xpose.msra.mxu0 0
        %1554 = vmatprep.subr.bf16.mxu0 0
        %1555 = vmatpush1.bf16.xpose.msra.mxu0 0
        %1556 = vmatprep.subr.bf16.mxu0 0
        %1557 = vmatpush1.bf16.xpose.msra.mxu0 0
        %1558 = vmatprep.mubr.bf16.mxu0 0
        %1559 = vmatmul.mubr.bf16.gmra.mrb[0].mxu0 %v1479
        %v1560 = vpop.f32.mrb[0].mxu0
        %v1561 = vadd.f32 %v1033, %v1560
        %v1562 = vpop.f32.mrb[0].mxu0
        %v1563 = vpop.f32.mrb[0].mxu0
        %v1564 = vadd.f32 %v1033, %v1563
        %v1565 = vpop.f32.mrb[0].mxu0
        %1566 = vmatprep.mubr.bf16.mxu0 0
        %1567 = vmatmul.mubr.bf16.gmra.mrb[0].mxu0 %v1482
        %v1568 = vpop.f32.mrb[0].mxu0
        %v1569 = vadd.f32 %v1033, %v1568
        %v1570 = vpop.f32.mrb[0].mxu0
        %v1571 = vpop.f32.mrb[0].mxu0
        %v1572 = vadd.f32 %v1033, %v1571
        %v1573 = vpop.f32.mrb[0].mxu0
        %1574 = vmatprep.mubr.bf16.mxu0 0
        %1575 = vmatmul.mubr.bf16.gmra.mrb[0].mxu0 %v1485
        %v1576 = vpop.f32.mrb[0].mxu0
        %v1577 = vadd.f32 %v1033, %v1576
        %v1578 = vpop.f32.mrb[0].mxu0
        %v1579 = vpop.f32.mrb[0].mxu0
        %v1580 = vadd.f32 %v1033, %v1579
        %v1581 = vpop.f32.mrb[0].mxu0
        %1582 = vmatprep.mubr.bf16.mxu0 0
        %1583 = vmatmul.mubr.bf16.gmra.mrb[0].mxu0 %v1488
        %v1584 = vpop.f32.mrb[0].mxu0
        %v1585 = vadd.f32 %v1033, %v1584
        %v1586 = vpop.f32.mrb[0].mxu0
        %v1587 = vpop.f32.mrb[0].mxu0
        %v1588 = vadd.f32 %v1033, %v1587
        %v1589 = vpop.f32.mrb[0].mxu0
        %1590 = vmatprep.mubr.bf16.mxu0 0
        %1591 = vmatmul.mubr.bf16.gmra.mrb[0].mxu0 %v1491
        %v1592 = vpop.f32.mrb[0].mxu0
        %v1593 = vadd.f32 %v1033, %v1592
        %v1594 = vpop.f32.mrb[0].mxu0
        %v1595 = vpop.f32.mrb[0].mxu0
        %v1596 = vadd.f32 %v1033, %v1595
        %v1597 = vpop.f32.mrb[0].mxu0
        %1598 = vmatprep.mubr.bf16.mxu0 0
        %1599 = vmatmul.mubr.bf16.gmra.mrb[0].mxu0 %v1494
        %v1600 = vpop.f32.mrb[0].mxu0
        %v1601 = vadd.f32 %v1033, %v1600
        %v1602 = vpop.f32.mrb[0].mxu0
        %v1603 = vpop.f32.mrb[0].mxu0
        %v1604 = vadd.f32 %v1033, %v1603
        %v1605 = vpop.f32.mrb[0].mxu0
        %1606 = vmatprep.mubr.bf16.mxu0 0
        %1607 = vmatmul.mubr.bf16.gmra.mrb[0].mxu0 %v1497
        %v1608 = vpop.f32.mrb[0].mxu0
        %v1609 = vadd.f32 %v1033, %v1608
        %v1610 = vpop.f32.mrb[0].mxu0
        %v1611 = vpop.f32.mrb[0].mxu0
        %v1612 = vadd.f32 %v1033, %v1611
        %v1613 = vpop.f32.mrb[0].mxu0
        %1614 = vmatprep.mubr.bf16.mxu0 0
        %1615 = vmatmul.mubr.bf16.gmra.mrb[0].mxu0 %v1500
        %v1616 = vpop.f32.mrb[0].mxu0
        %v1617 = vadd.f32 %v1033, %v1616
        %v1618 = vpop.f32.mrb[0].mxu0
        %v1619 = vpop.f32.mrb[0].mxu0
        %v1620 = vadd.f32 %v1033, %v1619
        %v1621 = vpop.f32.mrb[0].mxu0
        %1622 = vdwg.mxu0
        %1623 = vmax.xlane.f32.xlu0 %v1561
        %v1624 = vpop.xlane.xlu0 %1623
        %1625 = vmax.xlane.f32.xlu0 %v1564
        %v1626 = vpop.xlane.xlu0 %1625
        %1627 = vmax.xlane.f32.xlu0 %v1569
        %v1628 = vpop.xlane.xlu0 %1627
        %1629 = vmax.xlane.f32.xlu0 %v1572
        %v1630 = vpop.xlane.xlu0 %1629
        %1631 = vmax.xlane.f32.xlu0 %v1577
        %v1632 = vpop.xlane.xlu0 %1631
        %1633 = vmax.xlane.f32.xlu0 %v1580
        %v1634 = vpop.xlane.xlu0 %1633
        %1635 = vmax.xlane.f32.xlu0 %v1585
        %v1636 = vpop.xlane.xlu0 %1635
        %1637 = vmax.xlane.f32.xlu0 %v1588
        %v1638 = vpop.xlane.xlu0 %1637
        %1639 = vmax.xlane.f32.xlu0 %v1593
        %v1640 = vpop.xlane.xlu0 %1639
        %1641 = vmax.xlane.f32.xlu0 %v1596
        %v1642 = vpop.xlane.xlu0 %1641
        %1643 = vmax.xlane.f32.xlu0 %v1601
        %v1644 = vpop.xlane.xlu0 %1643
        %1645 = vmax.xlane.f32.xlu0 %v1604
        %v1646 = vpop.xlane.xlu0 %1645
        %1647 = vmax.xlane.f32.xlu0 %v1609
        %v1648 = vpop.xlane.xlu0 %1647
        %1649 = vmax.xlane.f32.xlu0 %v1612
        %v1650 = vpop.xlane.xlu0 %1649
        %1651 = vmax.xlane.f32.xlu0 %v1617
        %v1652 = vpop.xlane.xlu0 %1651
        %1653 = vmax.xlane.f32.xlu0 %v1620
        %v1654 = vpop.xlane.xlu0 %1653
        %v1655 = vsub.f32 %v1561, %v1624
        %v1656 = vsub.f32 %v1564, %v1626
        %v1657 = vsub.f32 %v1569, %v1628
        %v1658 = vsub.f32 %v1572, %v1630
        %v1659 = vsub.f32 %v1577, %v1632
        %v1660 = vsub.f32 %v1580, %v1634
        %v1661 = vsub.f32 %v1585, %v1636
        %v1662 = vsub.f32 %v1588, %v1638
        %v1663 = vsub.f32 %v1593, %v1640
        %v1664 = vsub.f32 %v1596, %v1642
        %v1665 = vsub.f32 %v1601, %v1644
        %v1666 = vsub.f32 %v1604, %v1646
        %v1667 = vsub.f32 %v1609, %v1648
        %v1668 = vsub.f32 %v1612, %v1650
        %v1669 = vsub.f32 %v1617, %v1652
        %v1670 = vsub.f32 %v1620, %v1654
        %v1671 = vmul.f32 %v1655, 1.442695
        %v1672 = vpow.pop %v1671
        %v1673 = vmul.f32 %v1656, 1.442695
        %v1674 = vpow.pop %v1673
        %v1675 = vmul.f32 %v1657, 1.442695
        %v1676 = vpow.pop %v1675
        %v1677 = vmul.f32 %v1658, 1.442695
        %v1678 = vpow.pop %v1677
        %v1679 = vmul.f32 %v1659, 1.442695
        %v1680 = vpow.pop %v1679
        %v1681 = vmul.f32 %v1660, 1.442695
        %v1682 = vpow.pop %v1681
        %v1683 = vmul.f32 %v1661, 1.442695
        %v1684 = vpow.pop %v1683
        %v1685 = vmul.f32 %v1662, 1.442695
        %v1686 = vpow.pop %v1685
        %v1687 = vmul.f32 %v1663, 1.442695
        %v1688 = vpow.pop %v1687
        %v1689 = vmul.f32 %v1664, 1.442695
        %v1690 = vpow.pop %v1689
        %v1691 = vmul.f32 %v1665, 1.442695
        %v1692 = vpow.pop %v1691
        %v1693 = vmul.f32 %v1666, 1.442695
        %v1694 = vpow.pop %v1693
        %v1695 = vmul.f32 %v1667, 1.442695
        %v1696 = vpow.pop %v1695
        %v1697 = vmul.f32 %v1668, 1.442695
        %v1698 = vpow.pop %v1697
        %v1699 = vmul.f32 %v1669, 1.442695
        %v1700 = vpow.pop %v1699
        %v1701 = vmul.f32 %v1670, 1.442695
        %v1702 = vpow.pop %v1701
        %1703 = vadd.xlane.f32.xlu0 %v1672
        %v1704 = vpop.xlane.xlu0 %1703
        %1705 = vadd.xlane.f32.xlu0 %v1674
        %v1706 = vpop.xlane.xlu0 %1705
        %1707 = vadd.xlane.f32.xlu0 %v1676
        %v1708 = vpop.xlane.xlu0 %1707
        %1709 = vadd.xlane.f32.xlu0 %v1678
        %v1710 = vpop.xlane.xlu0 %1709
        %1711 = vadd.xlane.f32.xlu0 %v1680
        %v1712 = vpop.xlane.xlu0 %1711
        %1713 = vadd.xlane.f32.xlu0 %v1682
        %v1714 = vpop.xlane.xlu0 %1713
        %1715 = vadd.xlane.f32.xlu0 %v1684
        %v1716 = vpop.xlane.xlu0 %1715
        %1717 = vadd.xlane.f32.xlu0 %v1686
        %v1718 = vpop.xlane.xlu0 %1717
        %1719 = vadd.xlane.f32.xlu0 %v1688
        %v1720 = vpop.xlane.xlu0 %1719
        %1721 = vadd.xlane.f32.xlu0 %v1690
        %v1722 = vpop.xlane.xlu0 %1721
        %1723 = vadd.xlane.f32.xlu0 %v1692
        %v1724 = vpop.xlane.xlu0 %1723
        %1725 = vadd.xlane.f32.xlu0 %v1694
        %v1726 = vpop.xlane.xlu0 %1725
        %1727 = vadd.xlane.f32.xlu0 %v1696
        %v1728 = vpop.xlane.xlu0 %1727
        %1729 = vadd.xlane.f32.xlu0 %v1698
        %v1730 = vpop.xlane.xlu0 %1729
        %1731 = vadd.xlane.f32.xlu0 %v1700
        %v1732 = vpop.xlane.xlu0 %1731
        %1733 = vadd.xlane.f32.xlu0 %v1702
        %v1734 = vpop.xlane.xlu0 %1733
        %v1735 = vpack.c.bf16 %v1674, %v1672
        %v1736 = vpack.c.bf16 %v1678, %v1676
        %v1737 = vpack.c.bf16 %v1682, %v1680
        %v1738 = vpack.c.bf16 %v1686, %v1684
        %v1739 = vpack.c.bf16 %v1690, %v1688
        %v1740 = vpack.c.bf16 %v1694, %v1692
        %v1741 = vpack.c.bf16 %v1698, %v1696
        %v1742 = vpack.c.bf16 %v1702, %v1700
        %1751 = vrot.lane.b32.xlu0 %v1020, 120
        %v1752 = vpop.permute.xlu0 %1751
        %1753 = vrot.lane.b32.xlu0 %v1021, 120
        %v1754 = vpop.permute.xlu0 %1753
        %1755 = vrot.lane.b32.xlu0 %v1022, 120
        %v1756 = vpop.permute.xlu0 %1755
        %1757 = vrot.lane.b32.xlu0 %v1023, 120
        %v1758 = vpop.permute.xlu0 %1757
        %1759 = vrot.lane.b32.xlu0 %v1024, 120
        %v1760 = vpop.permute.xlu0 %1759
        %1761 = vrot.lane.b32.xlu0 %v1025, 120
        %v1762 = vpop.permute.xlu0 %1761
        %1763 = vrot.lane.b32.xlu0 %v1026, 120
        %v1764 = vpop.permute.xlu0 %1763
        %1765 = vrot.lane.b32.xlu0 %v1027, 120
        %v1766 = vpop.permute.xlu0 %1765
        %1775 = vmatprep.subr.bf16.mxu0 0
        %1776 = vmatpush1.bf16.msra.mxu0 %v1752
        %1777 = vmatprep.subr.bf16.mxu0 0
        %1778 = vmatpush1.bf16.msra.mxu0 %v1754
        %1779 = vmatprep.subr.bf16.mxu0 0
        %1780 = vmatpush1.bf16.msra.mxu0 %v1756
        %1781 = vmatprep.subr.bf16.mxu0 0
        %1782 = vmatpush1.bf16.msra.mxu0 %v1758
        %1783 = vmatprep.subr.bf16.mxu0 0
        %1784 = vmatpush1.bf16.msra.mxu0 %v1760
        %1785 = vmatprep.subr.bf16.mxu0 0
        %1786 = vmatpush1.bf16.msra.mxu0 %v1762
        %1787 = vmatprep.subr.bf16.mxu0 0
        %1788 = vmatpush1.bf16.msra.mxu0 %v1764
        %1789 = vmatprep.subr.bf16.mxu0 0
        %1790 = vmatpush1.bf16.msra.mxu0 %v1766
        %1791 = vmatprep.subr.bf16.mxu0 0
        %1792 = vmatpush1.bf16.msra.mxu0 0
        %1793 = vmatprep.subr.bf16.mxu0 0
        %1794 = vmatpush1.bf16.msra.mxu0 0
        %1795 = vmatprep.subr.bf16.mxu0 0
        %1796 = vmatpush1.bf16.msra.mxu0 0
        %1797 = vmatprep.subr.bf16.mxu0 0
        %1798 = vmatpush1.bf16.msra.mxu0 0
        %1799 = vmatprep.subr.bf16.mxu0 0
        %1800 = vmatpush1.bf16.msra.mxu0 0
        %1801 = vmatprep.subr.bf16.mxu0 0
        %1802 = vmatpush1.bf16.msra.mxu0 0
        %1803 = vmatprep.subr.bf16.mxu0 0
        %1804 = vmatpush1.bf16.msra.mxu0 0
        %1805 = vmatprep.subr.bf16.mxu0 0
        %1806 = vmatpush1.bf16.msra.mxu0 0
        %1807 = vmatprep.mubr.bf16.mxu0 0
        %1808 = vmatmul.mubr.bf16.gmra.mrb[0].mxu0 %v1735
        %v1809 = vpop.f32.mrb[0].mxu0
        %v1810 = vadd.f32 0.0, %v1809
        %v1811 = vpop.f32.mrb[0].mxu0
        %v1812 = vpop.f32.mrb[0].mxu0
        %v1813 = vadd.f32 0.0, %v1812
        %v1814 = vpop.f32.mrb[0].mxu0
        %1815 = vmatprep.mubr.bf16.mxu0 0
        %1816 = vmatmul.mubr.bf16.gmra.mrb[0].mxu0 %v1736
        %v1817 = vpop.f32.mrb[0].mxu0
        %v1818 = vadd.f32 0.0, %v1817
        %v1819 = vpop.f32.mrb[0].mxu0
        %v1820 = vpop.f32.mrb[0].mxu0
        %v1821 = vadd.f32 0.0, %v1820
        %v1822 = vpop.f32.mrb[0].mxu0
        %1823 = vmatprep.mubr.bf16.mxu0 0
        %1824 = vmatmul.mubr.bf16.gmra.mrb[0].mxu0 %v1737
        %v1825 = vpop.f32.mrb[0].mxu0
        %v1826 = vadd.f32 0.0, %v1825
        %v1827 = vpop.f32.mrb[0].mxu0
        %v1828 = vpop.f32.mrb[0].mxu0
        %v1829 = vadd.f32 0.0, %v1828
        %v1830 = vpop.f32.mrb[0].mxu0
        %1831 = vmatprep.mubr.bf16.mxu0 0
        %1832 = vmatmul.mubr.bf16.gmra.mrb[0].mxu0 %v1738
        %v1833 = vpop.f32.mrb[0].mxu0
        %v1834 = vadd.f32 0.0, %v1833
        %v1835 = vpop.f32.mrb[0].mxu0
        %v1836 = vpop.f32.mrb[0].mxu0
        %v1837 = vadd.f32 0.0, %v1836
        %v1838 = vpop.f32.mrb[0].mxu0
        %1839 = vmatprep.mubr.bf16.mxu0 0
        %1840 = vmatmul.mubr.bf16.gmra.mrb[0].mxu0 %v1739
        %v1841 = vpop.f32.mrb[0].mxu0
        %v1842 = vadd.f32 0.0, %v1841
        %v1843 = vpop.f32.mrb[0].mxu0
        %v1844 = vpop.f32.mrb[0].mxu0
        %v1845 = vadd.f32 0.0, %v1844
        %v1846 = vpop.f32.mrb[0].mxu0
        %1847 = vmatprep.mubr.bf16.mxu0 0
        %1848 = vmatmul.mubr.bf16.gmra.mrb[0].mxu0 %v1740
        %v1849 = vpop.f32.mrb[0].mxu0
        %v1850 = vadd.f32 0.0, %v1849
        %v1851 = vpop.f32.mrb[0].mxu0
        %v1852 = vpop.f32.mrb[0].mxu0
        %v1853 = vadd.f32 0.0, %v1852
        %v1854 = vpop.f32.mrb[0].mxu0
        %1855 = vmatprep.mubr.bf16.mxu0 0
        %1856 = vmatmul.mubr.bf16.gmra.mrb[0].mxu0 %v1741
        %v1857 = vpop.f32.mrb[0].mxu0
        %v1858 = vadd.f32 0.0, %v1857
        %v1859 = vpop.f32.mrb[0].mxu0
        %v1860 = vpop.f32.mrb[0].mxu0
        %v1861 = vadd.f32 0.0, %v1860
        %v1862 = vpop.f32.mrb[0].mxu0
        %1863 = vmatprep.mubr.bf16.mxu0 0
        %1864 = vmatmul.mubr.bf16.gmra.mrb[0].mxu0 %v1742
        %v1865 = vpop.f32.mrb[0].mxu0
        %v1866 = vadd.f32 0.0, %v1865
        %v1867 = vpop.f32.mrb[0].mxu0
        %v1868 = vpop.f32.mrb[0].mxu0
        %v1869 = vadd.f32 0.0, %v1868
        %v1870 = vpop.f32.mrb[0].mxu0
        %1871 = vdwg.mxu0
        %v1872 = vrcp.pop %v1704
        %v1873 = vrcp.pop %v1706
        %v1874 = vrcp.pop %v1708
        %v1875 = vrcp.pop %v1710
        %v1876 = vrcp.pop %v1712
        %v1877 = vrcp.pop %v1714
        %v1878 = vrcp.pop %v1716
        %v1879 = vrcp.pop %v1718
        %v1880 = vrcp.pop %v1720
        %v1881 = vrcp.pop %v1722
        %v1882 = vrcp.pop %v1724
        %v1883 = vrcp.pop %v1726
        %v1884 = vrcp.pop %v1728
        %v1885 = vrcp.pop %v1730
        %v1886 = vrcp.pop %v1732
        %v1887 = vrcp.pop %v1734
        %v1888 = vmul.f32 %v1810, %v1872
        %v1889 = vmul.f32 %v1813, %v1873
        %v1890 = vmul.f32 %v1818, %v1874
        %v1891 = vmul.f32 %v1821, %v1875
        %v1892 = vmul.f32 %v1826, %v1876
        %v1893 = vmul.f32 %v1829, %v1877
        %v1894 = vmul.f32 %v1834, %v1878
        %v1895 = vmul.f32 %v1837, %v1879
        %v1896 = vmul.f32 %v1842, %v1880
        %v1897 = vmul.f32 %v1845, %v1881
        %v1898 = vmul.f32 %v1850, %v1882
        %v1899 = vmul.f32 %v1853, %v1883
        %v1900 = vmul.f32 %v1858, %v1884
        %v1901 = vmul.f32 %v1861, %v1885
        %v1902 = vmul.f32 %v1866, %v1886
        %v1903 = vmul.f32 %v1869, %v1887
        %1904 = vrot.lane.b32.xlu0 %v999, 112
        %v1905 = vpop.permute.xlu0 %1904
        %1906 = vrot.lane.b32.xlu0 %v1000, 112
        %v1907 = vpop.permute.xlu0 %1906
        %1908 = vrot.lane.b32.xlu0 %v1001, 112
        %v1909 = vpop.permute.xlu0 %1908
        %1910 = vrot.lane.b32.xlu0 %v1002, 112
        %v1911 = vpop.permute.xlu0 %1910
        %1912 = vrot.lane.b32.xlu0 %v1003, 112
        %v1913 = vpop.permute.xlu0 %1912
        %1914 = vrot.lane.b32.xlu0 %v1004, 112
        %v1915 = vpop.permute.xlu0 %1914
        %1916 = vrot.lane.b32.xlu0 %v1005, 112
        %v1917 = vpop.permute.xlu0 %1916
        %1918 = vrot.lane.b32.xlu0 %v1006, 112
        %v1919 = vpop.permute.xlu0 %1918
        %1920 = vrot.lane.b32.xlu0 %v1010, 112
        %v1921 = vpop.permute.xlu0 %1920
        %1922 = vrot.lane.b32.xlu0 %v1011, 112
        %v1923 = vpop.permute.xlu0 %1922
        %1924 = vrot.lane.b32.xlu0 %v1012, 112
        %v1925 = vpop.permute.xlu0 %1924
        %1926 = vrot.lane.b32.xlu0 %v1013, 112
        %v1927 = vpop.permute.xlu0 %1926
        %1928 = vrot.lane.b32.xlu0 %v1014, 112
        %v1929 = vpop.permute.xlu0 %1928
        %1930 = vrot.lane.b32.xlu0 %v1015, 112
        %v1931 = vpop.permute.xlu0 %1930
        %1932 = vrot.lane.b32.xlu0 %v1016, 112
        %v1933 = vpop.permute.xlu0 %1932
        %1934 = vrot.lane.b32.xlu0 %v1017, 112
        %v1935 = vpop.permute.xlu0 %1934
        %v1937 = vsel %vm1035, %v1905, 0
        %v1940 = vsel %vm1035, %v1907, 0
        %v1943 = vsel %vm1035, %v1909, 0
        %v1946 = vsel %vm1035, %v1911, 0
        %v1949 = vsel %vm1035, %v1913, 0
        %v1952 = vsel %vm1035, %v1915, 0
        %v1955 = vsel %vm1035, %v1917, 0
        %v1958 = vsel %vm1035, %v1919, 0
        %v1961 = vsel %vm1035, %v1921, 0
        %v1964 = vsel %vm1035, %v1923, 0
        %v1967 = vsel %vm1035, %v1925, 0
        %v1970 = vsel %vm1035, %v1927, 0
        %v1973 = vsel %vm1035, %v1929, 0
        %v1976 = vsel %vm1035, %v1931, 0
        %v1979 = vsel %vm1035, %v1933, 0
        %v1982 = vsel %vm1035, %v1935, 0
        %1984 = vmatprep.subr.bf16.mxu0 0
        %1985 = vmatpush1.bf16.xpose.msra.mxu0 %v1961
        %1986 = vmatprep.subr.bf16.mxu0 0
        %1987 = vmatpush1.bf16.xpose.msra.mxu0 %v1964
        %1988 = vmatprep.subr.bf16.mxu0 0
        %1989 = vmatpush1.bf16.xpose.msra.mxu0 %v1967
        %1990 = vmatprep.subr.bf16.mxu0 0
        %1991 = vmatpush1.bf16.xpose.msra.mxu0 %v1970
        %1992 = vmatprep.subr.bf16.mxu0 0
        %1993 = vmatpush1.bf16.xpose.msra.mxu0 %v1973
        %1994 = vmatprep.subr.bf16.mxu0 0
        %1995 = vmatpush1.bf16.xpose.msra.mxu0 %v1976
        %1996 = vmatprep.subr.bf16.mxu0 0
        %1997 = vmatpush1.bf16.xpose.msra.mxu0 %v1979
        %1998 = vmatprep.subr.bf16.mxu0 0
        %1999 = vmatpush1.bf16.xpose.msra.mxu0 %v1982
        %2000 = vmatprep.subr.bf16.mxu0 0
        %2001 = vmatpush1.bf16.xpose.msra.mxu0 0
        %2002 = vmatprep.subr.bf16.mxu0 0
        %2003 = vmatpush1.bf16.xpose.msra.mxu0 0
        %2004 = vmatprep.subr.bf16.mxu0 0
        %2005 = vmatpush1.bf16.xpose.msra.mxu0 0
        %2006 = vmatprep.subr.bf16.mxu0 0
        %2007 = vmatpush1.bf16.xpose.msra.mxu0 0
        %2008 = vmatprep.subr.bf16.mxu0 0
        %2009 = vmatpush1.bf16.xpose.msra.mxu0 0
        %2010 = vmatprep.subr.bf16.mxu0 0
        %2011 = vmatpush1.bf16.xpose.msra.mxu0 0
        %2012 = vmatprep.subr.bf16.mxu0 0
        %2013 = vmatpush1.bf16.xpose.msra.mxu0 0
        %2014 = vmatprep.subr.bf16.mxu0 0
        %2015 = vmatpush1.bf16.xpose.msra.mxu0 0
        %2016 = vmatprep.mubr.bf16.mxu0 0
        %2017 = vmatmul.mubr.bf16.gmra.mrb[0].mxu0 %v1937
        %v2018 = vpop.f32.mrb[0].mxu0
        %v2019 = vadd.f32 %v1033, %v2018
        %v2020 = vpop.f32.mrb[0].mxu0
        %v2021 = vpop.f32.mrb[0].mxu0
        %v2022 = vadd.f32 %v1033, %v2021
        %v2023 = vpop.f32.mrb[0].mxu0
        %2024 = vmatprep.mubr.bf16.mxu0 0
        %2025 = vmatmul.mubr.bf16.gmra.mrb[0].mxu0 %v1940
        %v2026 = vpop.f32.mrb[0].mxu0
        %v2027 = vadd.f32 %v1033, %v2026
        %v2028 = vpop.f32.mrb[0].mxu0
        %v2029 = vpop.f32.mrb[0].mxu0
        %v2030 = vadd.f32 %v1033, %v2029
        %v2031 = vpop.f32.mrb[0].mxu0
        %2032 = vmatprep.mubr.bf16.mxu0 0
        %2033 = vmatmul.mubr.bf16.gmra.mrb[0].mxu0 %v1943
        %v2034 = vpop.f32.mrb[0].mxu0
        %v2035 = vadd.f32 %v1033, %v2034
        %v2036 = vpop.f32.mrb[0].mxu0
        %v2037 = vpop.f32.mrb[0].mxu0
        %v2038 = vadd.f32 %v1033, %v2037
        %v2039 = vpop.f32.mrb[0].mxu0
        %2040 = vmatprep.mubr.bf16.mxu0 0
        %2041 = vmatmul.mubr.bf16.gmra.mrb[0].mxu0 %v1946
        %v2042 = vpop.f32.mrb[0].mxu0
        %v2043 = vadd.f32 %v1033, %v2042
        %v2044 = vpop.f32.mrb[0].mxu0
        %v2045 = vpop.f32.mrb[0].mxu0
        %v2046 = vadd.f32 %v1033, %v2045
        %v2047 = vpop.f32.mrb[0].mxu0
        %2048 = vmatprep.mubr.bf16.mxu0 0
        %2049 = vmatmul.mubr.bf16.gmra.mrb[0].mxu0 %v1949
        %v2050 = vpop.f32.mrb[0].mxu0
        %v2051 = vadd.f32 %v1033, %v2050
        %v2052 = vpop.f32.mrb[0].mxu0
        %v2053 = vpop.f32.mrb[0].mxu0
        %v2054 = vadd.f32 %v1033, %v2053
        %v2055 = vpop.f32.mrb[0].mxu0
        %2056 = vmatprep.mubr.bf16.mxu0 0
        %2057 = vmatmul.mubr.bf16.gmra.mrb[0].mxu0 %v1952
        %v2058 = vpop.f32.mrb[0].mxu0
        %v2059 = vadd.f32 %v1033, %v2058
        %v2060 = vpop.f32.mrb[0].mxu0
        %v2061 = vpop.f32.mrb[0].mxu0
        %v2062 = vadd.f32 %v1033, %v2061
        %v2063 = vpop.f32.mrb[0].mxu0
        %2064 = vmatprep.mubr.bf16.mxu0 0
        %2065 = vmatmul.mubr.bf16.gmra.mrb[0].mxu0 %v1955
        %v2066 = vpop.f32.mrb[0].mxu0
        %v2067 = vadd.f32 %v1033, %v2066
        %v2068 = vpop.f32.mrb[0].mxu0
        %v2069 = vpop.f32.mrb[0].mxu0
        %v2070 = vadd.f32 %v1033, %v2069
        %v2071 = vpop.f32.mrb[0].mxu0
        %2072 = vmatprep.mubr.bf16.mxu0 0
        %2073 = vmatmul.mubr.bf16.gmra.mrb[0].mxu0 %v1958
        %v2074 = vpop.f32.mrb[0].mxu0
        %v2075 = vadd.f32 %v1033, %v2074
        %v2076 = vpop.f32.mrb[0].mxu0
        %v2077 = vpop.f32.mrb[0].mxu0
        %v2078 = vadd.f32 %v1033, %v2077
        %v2079 = vpop.f32.mrb[0].mxu0
        %2080 = vdwg.mxu0
        %2081 = vmax.xlane.f32.xlu0 %v2019
        %v2082 = vpop.xlane.xlu0 %2081
        %2083 = vmax.xlane.f32.xlu0 %v2022
        %v2084 = vpop.xlane.xlu0 %2083
        %2085 = vmax.xlane.f32.xlu0 %v2027
        %v2086 = vpop.xlane.xlu0 %2085
        %2087 = vmax.xlane.f32.xlu0 %v2030
        %v2088 = vpop.xlane.xlu0 %2087
        %2089 = vmax.xlane.f32.xlu0 %v2035
        %v2090 = vpop.xlane.xlu0 %2089
        %2091 = vmax.xlane.f32.xlu0 %v2038
        %v2092 = vpop.xlane.xlu0 %2091
        %2093 = vmax.xlane.f32.xlu0 %v2043
        %v2094 = vpop.xlane.xlu0 %2093
        %2095 = vmax.xlane.f32.xlu0 %v2046
        %v2096 = vpop.xlane.xlu0 %2095
        %2097 = vmax.xlane.f32.xlu0 %v2051
        %v2098 = vpop.xlane.xlu0 %2097
        %2099 = vmax.xlane.f32.xlu0 %v2054
        %v2100 = vpop.xlane.xlu0 %2099
        %2101 = vmax.xlane.f32.xlu0 %v2059
        %v2102 = vpop.xlane.xlu0 %2101
        %2103 = vmax.xlane.f32.xlu0 %v2062
        %v2104 = vpop.xlane.xlu0 %2103
        %2105 = vmax.xlane.f32.xlu0 %v2067
        %v2106 = vpop.xlane.xlu0 %2105
        %2107 = vmax.xlane.f32.xlu0 %v2070
        %v2108 = vpop.xlane.xlu0 %2107
        %2109 = vmax.xlane.f32.xlu0 %v2075
        %v2110 = vpop.xlane.xlu0 %2109
        %2111 = vmax.xlane.f32.xlu0 %v2078
        %v2112 = vpop.xlane.xlu0 %2111
        %v2113 = vsub.f32 %v2019, %v2082
        %v2114 = vsub.f32 %v2022, %v2084
        %v2115 = vsub.f32 %v2027, %v2086
        %v2116 = vsub.f32 %v2030, %v2088
        %v2117 = vsub.f32 %v2035, %v2090
        %v2118 = vsub.f32 %v2038, %v2092
        %v2119 = vsub.f32 %v2043, %v2094
        %v2120 = vsub.f32 %v2046, %v2096
        %v2121 = vsub.f32 %v2051, %v2098
        %v2122 = vsub.f32 %v2054, %v2100
        %v2123 = vsub.f32 %v2059, %v2102
        %v2124 = vsub.f32 %v2062, %v2104
        %v2125 = vsub.f32 %v2067, %v2106
        %v2126 = vsub.f32 %v2070, %v2108
        %v2127 = vsub.f32 %v2075, %v2110
        %v2128 = vsub.f32 %v2078, %v2112
        %v2129 = vmul.f32 %v2113, 1.442695
        %v2130 = vpow.pop %v2129
        %v2131 = vmul.f32 %v2114, 1.442695
        %v2132 = vpow.pop %v2131
        %v2133 = vmul.f32 %v2115, 1.442695
        %v2134 = vpow.pop %v2133
        %v2135 = vmul.f32 %v2116, 1.442695
        %v2136 = vpow.pop %v2135
        %v2137 = vmul.f32 %v2117, 1.442695
        %v2138 = vpow.pop %v2137
        %v2139 = vmul.f32 %v2118, 1.442695
        %v2140 = vpow.pop %v2139
        %v2141 = vmul.f32 %v2119, 1.442695
        %v2142 = vpow.pop %v2141
        %v2143 = vmul.f32 %v2120, 1.442695
        %v2144 = vpow.pop %v2143
        %v2145 = vmul.f32 %v2121, 1.442695
        %v2146 = vpow.pop %v2145
        %v2147 = vmul.f32 %v2122, 1.442695
        %v2148 = vpow.pop %v2147
        %v2149 = vmul.f32 %v2123, 1.442695
        %v2150 = vpow.pop %v2149
        %v2151 = vmul.f32 %v2124, 1.442695
        %v2152 = vpow.pop %v2151
        %v2153 = vmul.f32 %v2125, 1.442695
        %v2154 = vpow.pop %v2153
        %v2155 = vmul.f32 %v2126, 1.442695
        %v2156 = vpow.pop %v2155
        %v2157 = vmul.f32 %v2127, 1.442695
        %v2158 = vpow.pop %v2157
        %v2159 = vmul.f32 %v2128, 1.442695
        %v2160 = vpow.pop %v2159
        %2161 = vadd.xlane.f32.xlu0 %v2130
        %v2162 = vpop.xlane.xlu0 %2161
        %2163 = vadd.xlane.f32.xlu0 %v2132
        %v2164 = vpop.xlane.xlu0 %2163
        %2165 = vadd.xlane.f32.xlu0 %v2134
        %v2166 = vpop.xlane.xlu0 %2165
        %2167 = vadd.xlane.f32.xlu0 %v2136
        %v2168 = vpop.xlane.xlu0 %2167
        %2169 = vadd.xlane.f32.xlu0 %v2138
        %v2170 = vpop.xlane.xlu0 %2169
        %2171 = vadd.xlane.f32.xlu0 %v2140
        %v2172 = vpop.xlane.xlu0 %2171
        %2173 = vadd.xlane.f32.xlu0 %v2142
        %v2174 = vpop.xlane.xlu0 %2173
        %2175 = vadd.xlane.f32.xlu0 %v2144
        %v2176 = vpop.xlane.xlu0 %2175
        %2177 = vadd.xlane.f32.xlu0 %v2146
        %v2178 = vpop.xlane.xlu0 %2177
        %2179 = vadd.xlane.f32.xlu0 %v2148
        %v2180 = vpop.xlane.xlu0 %2179
        %2181 = vadd.xlane.f32.xlu0 %v2150
        %v2182 = vpop.xlane.xlu0 %2181
        %2183 = vadd.xlane.f32.xlu0 %v2152
        %v2184 = vpop.xlane.xlu0 %2183
        %2185 = vadd.xlane.f32.xlu0 %v2154
        %v2186 = vpop.xlane.xlu0 %2185
        %2187 = vadd.xlane.f32.xlu0 %v2156
        %v2188 = vpop.xlane.xlu0 %2187
        %2189 = vadd.xlane.f32.xlu0 %v2158
        %v2190 = vpop.xlane.xlu0 %2189
        %2191 = vadd.xlane.f32.xlu0 %v2160
        %v2192 = vpop.xlane.xlu0 %2191
        %v2193 = vpack.c.bf16 %v2132, %v2130
        %v2194 = vpack.c.bf16 %v2136, %v2134
        %v2195 = vpack.c.bf16 %v2140, %v2138
        %v2196 = vpack.c.bf16 %v2144, %v2142
        %v2197 = vpack.c.bf16 %v2148, %v2146
        %v2198 = vpack.c.bf16 %v2152, %v2150
        %v2199 = vpack.c.bf16 %v2156, %v2154
        %v2200 = vpack.c.bf16 %v2160, %v2158
        %2201 = vrot.lane.b32.xlu0 %v1020, 112
        %v2202 = vpop.permute.xlu0 %2201
        %2203 = vrot.lane.b32.xlu0 %v1021, 112
        %v2204 = vpop.permute.xlu0 %2203
        %2205 = vrot.lane.b32.xlu0 %v1022, 112
        %v2206 = vpop.permute.xlu0 %2205
        %2207 = vrot.lane.b32.xlu0 %v1023, 112
        %v2208 = vpop.permute.xlu0 %2207
        %2209 = vrot.lane.b32.xlu0 %v1024, 112
        %v2210 = vpop.permute.xlu0 %2209
        %2211 = vrot.lane.b32.xlu0 %v1025, 112
        %v2212 = vpop.permute.xlu0 %2211
        %2213 = vrot.lane.b32.xlu0 %v1026, 112
        %v2214 = vpop.permute.xlu0 %2213
        %2215 = vrot.lane.b32.xlu0 %v1027, 112
        %v2216 = vpop.permute.xlu0 %2215
        %2225 = vmatprep.subr.bf16.mxu0 0
        %2226 = vmatpush1.bf16.msra.mxu0 %v2202
        %2227 = vmatprep.subr.bf16.mxu0 0
        %2228 = vmatpush1.bf16.msra.mxu0 %v2204
        %2229 = vmatprep.subr.bf16.mxu0 0
        %2230 = vmatpush1.bf16.msra.mxu0 %v2206
        %2231 = vmatprep.subr.bf16.mxu0 0
        %2232 = vmatpush1.bf16.msra.mxu0 %v2208
        %2233 = vmatprep.subr.bf16.mxu0 0
        %2234 = vmatpush1.bf16.msra.mxu0 %v2210
        %2235 = vmatprep.subr.bf16.mxu0 0
        %2236 = vmatpush1.bf16.msra.mxu0 %v2212
        %2237 = vmatprep.subr.bf16.mxu0 0
        %2238 = vmatpush1.bf16.msra.mxu0 %v2214
        %2239 = vmatprep.subr.bf16.mxu0 0
        %2240 = vmatpush1.bf16.msra.mxu0 %v2216
        %2241 = vmatprep.subr.bf16.mxu0 0
        %2242 = vmatpush1.bf16.msra.mxu0 0
        %2243 = vmatprep.subr.bf16.mxu0 0
        %2244 = vmatpush1.bf16.msra.mxu0 0
        %2245 = vmatprep.subr.bf16.mxu0 0
        %2246 = vmatpush1.bf16.msra.mxu0 0
        %2247 = vmatprep.subr.bf16.mxu0 0
        %2248 = vmatpush1.bf16.msra.mxu0 0
        %2249 = vmatprep.subr.bf16.mxu0 0
        %2250 = vmatpush1.bf16.msra.mxu0 0
        %2251 = vmatprep.subr.bf16.mxu0 0
        %2252 = vmatpush1.bf16.msra.mxu0 0
        %2253 = vmatprep.subr.bf16.mxu0 0
        %2254 = vmatpush1.bf16.msra.mxu0 0
        %2255 = vmatprep.subr.bf16.mxu0 0
        %2256 = vmatpush1.bf16.msra.mxu0 0
        %2257 = vmatprep.mubr.bf16.mxu0 0
        %2258 = vmatmul.mubr.bf16.gmra.mrb[0].mxu0 %v2193
        %v2259 = vpop.f32.mrb[0].mxu0
        %v2260 = vadd.f32 0.0, %v2259
        %v2261 = vpop.f32.mrb[0].mxu0
        %v2262 = vpop.f32.mrb[0].mxu0
        %v2263 = vadd.f32 0.0, %v2262
        %v2264 = vpop.f32.mrb[0].mxu0
        %2265 = vmatprep.mubr.bf16.mxu0 0
        %2266 = vmatmul.mubr.bf16.gmra.mrb[0].mxu0 %v2194
        %v2267 = vpop.f32.mrb[0].mxu0
        %v2268 = vadd.f32 0.0, %v2267
        %v2269 = vpop.f32.mrb[0].mxu0
        %v2270 = vpop.f32.mrb[0].mxu0
        %v2271 = vadd.f32 0.0, %v2270
        %v2272 = vpop.f32.mrb[0].mxu0
        %2273 = vmatprep.mubr.bf16.mxu0 0
        %2274 = vmatmul.mubr.bf16.gmra.mrb[0].mxu0 %v2195
        %v2275 = vpop.f32.mrb[0].mxu0
        %v2276 = vadd.f32 0.0, %v2275
        %v2277 = vpop.f32.mrb[0].mxu0
        %v2278 = vpop.f32.mrb[0].mxu0
        %v2279 = vadd.f32 0.0, %v2278
        %v2280 = vpop.f32.mrb[0].mxu0
        %2281 = vmatprep.mubr.bf16.mxu0 0
        %2282 = vmatmul.mubr.bf16.gmra.mrb[0].mxu0 %v2196
        %v2283 = vpop.f32.mrb[0].mxu0
        %v2284 = vadd.f32 0.0, %v2283
        %v2285 = vpop.f32.mrb[0].mxu0
        %v2286 = vpop.f32.mrb[0].mxu0
        %v2287 = vadd.f32 0.0, %v2286
        %v2288 = vpop.f32.mrb[0].mxu0
        %2289 = vmatprep.mubr.bf16.mxu0 0
        %2290 = vmatmul.mubr.bf16.gmra.mrb[0].mxu0 %v2197
        %v2291 = vpop.f32.mrb[0].mxu0
        %v2292 = vadd.f32 0.0, %v2291
        %v2293 = vpop.f32.mrb[0].mxu0
        %v2294 = vpop.f32.mrb[0].mxu0
        %v2295 = vadd.f32 0.0, %v2294
        %v2296 = vpop.f32.mrb[0].mxu0
        %2297 = vmatprep.mubr.bf16.mxu0 0
        %2298 = vmatmul.mubr.bf16.gmra.mrb[0].mxu0 %v2198
        %v2299 = vpop.f32.mrb[0].mxu0
        %v2300 = vadd.f32 0.0, %v2299
        %v2301 = vpop.f32.mrb[0].mxu0
        %v2302 = vpop.f32.mrb[0].mxu0
        %v2303 = vadd.f32 0.0, %v2302
        %v2304 = vpop.f32.mrb[0].mxu0
        %2305 = vmatprep.mubr.bf16.mxu0 0
        %2306 = vmatmul.mubr.bf16.gmra.mrb[0].mxu0 %v2199
        %v2307 = vpop.f32.mrb[0].mxu0
        %v2308 = vadd.f32 0.0, %v2307
        %v2309 = vpop.f32.mrb[0].mxu0
        %v2310 = vpop.f32.mrb[0].mxu0
        %v2311 = vadd.f32 0.0, %v2310
        %v2312 = vpop.f32.mrb[0].mxu0
        %2313 = vmatprep.mubr.bf16.mxu0 0
        %2314 = vmatmul.mubr.bf16.gmra.mrb[0].mxu0 %v2200
        %v2315 = vpop.f32.mrb[0].mxu0
        %v2316 = vadd.f32 0.0, %v2315
        %v2317 = vpop.f32.mrb[0].mxu0
        %v2318 = vpop.f32.mrb[0].mxu0
        %v2319 = vadd.f32 0.0, %v2318
        %v2320 = vpop.f32.mrb[0].mxu0
        %2321 = vdwg.mxu0
        %v2322 = vrcp.pop %v2162
        %v2323 = vrcp.pop %v2164
        %v2324 = vrcp.pop %v2166
        %v2325 = vrcp.pop %v2168
        %v2326 = vrcp.pop %v2170
        %v2327 = vrcp.pop %v2172
        %v2328 = vrcp.pop %v2174
        %v2329 = vrcp.pop %v2176
        %v2330 = vrcp.pop %v2178
        %v2331 = vrcp.pop %v2180
        %v2332 = vrcp.pop %v2182
        %v2333 = vrcp.pop %v2184
        %v2334 = vrcp.pop %v2186
        %v2335 = vrcp.pop %v2188
        %v2336 = vrcp.pop %v2190
        %v2337 = vrcp.pop %v2192
        %v2338 = vmul.f32 %v2260, %v2322
        %v2339 = vmul.f32 %v2263, %v2323
        %v2340 = vmul.f32 %v2268, %v2324
        %v2341 = vmul.f32 %v2271, %v2325
        %v2342 = vmul.f32 %v2276, %v2326
        %v2343 = vmul.f32 %v2279, %v2327
        %v2344 = vmul.f32 %v2284, %v2328
        %v2345 = vmul.f32 %v2287, %v2329
        %v2346 = vmul.f32 %v2292, %v2330
        %v2347 = vmul.f32 %v2295, %v2331
        %v2348 = vmul.f32 %v2300, %v2332
        %v2349 = vmul.f32 %v2303, %v2333
        %v2350 = vmul.f32 %v2308, %v2334
        %v2351 = vmul.f32 %v2311, %v2335
        %v2352 = vmul.f32 %v2316, %v2336
        %v2353 = vmul.f32 %v2319, %v2337
        %2354 = vrot.lane.b32.xlu0 %v999, 104
        %v2355 = vpop.permute.xlu0 %2354
        %2356 = vrot.lane.b32.xlu0 %v1000, 104
        %v2357 = vpop.permute.xlu0 %2356
        %2358 = vrot.lane.b32.xlu0 %v1001, 104
        %v2359 = vpop.permute.xlu0 %2358
        %2360 = vrot.lane.b32.xlu0 %v1002, 104
        %v2361 = vpop.permute.xlu0 %2360
        %2362 = vrot.lane.b32.xlu0 %v1003, 104
        %v2363 = vpop.permute.xlu0 %2362
        %2364 = vrot.lane.b32.xlu0 %v1004, 104
        %v2365 = vpop.permute.xlu0 %2364
        %2366 = vrot.lane.b32.xlu0 %v1005, 104
        %v2367 = vpop.permute.xlu0 %2366
        %2368 = vrot.lane.b32.xlu0 %v1006, 104
        %v2369 = vpop.permute.xlu0 %2368
        %2370 = vrot.lane.b32.xlu0 %v1010, 104
        %v2371 = vpop.permute.xlu0 %2370
        %2372 = vrot.lane.b32.xlu0 %v1011, 104
        %v2373 = vpop.permute.xlu0 %2372
        %2374 = vrot.lane.b32.xlu0 %v1012, 104
        %v2375 = vpop.permute.xlu0 %2374
        %2376 = vrot.lane.b32.xlu0 %v1013, 104
        %v2377 = vpop.permute.xlu0 %2376
        %2378 = vrot.lane.b32.xlu0 %v1014, 104
        %v2379 = vpop.permute.xlu0 %2378
        %2380 = vrot.lane.b32.xlu0 %v1015, 104
        %v2381 = vpop.permute.xlu0 %2380
        %2382 = vrot.lane.b32.xlu0 %v1016, 104
        %v2383 = vpop.permute.xlu0 %2382
        %2384 = vrot.lane.b32.xlu0 %v1017, 104
        %v2385 = vpop.permute.xlu0 %2384
        %v2387 = vsel %vm1035, %v2355, 0
        %v2390 = vsel %vm1035, %v2357, 0
        %v2393 = vsel %vm1035, %v2359, 0
        %v2396 = vsel %vm1035, %v2361, 0
        %v2399 = vsel %vm1035, %v2363, 0
        %v2402 = vsel %vm1035, %v2365, 0
        %v2405 = vsel %vm1035, %v2367, 0
        %v2408 = vsel %vm1035, %v2369, 0
        %v2411 = vsel %vm1035, %v2371, 0
        %v2414 = vsel %vm1035, %v2373, 0
        %v2417 = vsel %vm1035, %v2375, 0
        %v2420 = vsel %vm1035, %v2377, 0
        %v2423 = vsel %vm1035, %v2379, 0
        %v2426 = vsel %vm1035, %v2381, 0
        %v2429 = vsel %vm1035, %v2383, 0
        %v2432 = vsel %vm1035, %v2385, 0
        %2434 = vmatprep.subr.bf16.mxu0 0
        %2435 = vmatpush1.bf16.xpose.msra.mxu0 %v2411
        %2436 = vmatprep.subr.bf16.mxu0 0
        %2437 = vmatpush1.bf16.xpose.msra.mxu0 %v2414
        %2438 = vmatprep.subr.bf16.mxu0 0
        %2439 = vmatpush1.bf16.xpose.msra.mxu0 %v2417
        %2440 = vmatprep.subr.bf16.mxu0 0
        %2441 = vmatpush1.bf16.xpose.msra.mxu0 %v2420
        %2442 = vmatprep.subr.bf16.mxu0 0
        %2443 = vmatpush1.bf16.xpose.msra.mxu0 %v2423
        %2444 = vmatprep.subr.bf16.mxu0 0
        %2445 = vmatpush1.bf16.xpose.msra.mxu0 %v2426
        %2446 = vmatprep.subr.bf16.mxu0 0
        %2447 = vmatpush1.bf16.xpose.msra.mxu0 %v2429
        %2448 = vmatprep.subr.bf16.mxu0 0
        %2449 = vmatpush1.bf16.xpose.msra.mxu0 %v2432
        %2450 = vmatprep.subr.bf16.mxu0 0
        %2451 = vmatpush1.bf16.xpose.msra.mxu0 0
        %2452 = vmatprep.subr.bf16.mxu0 0
        %2453 = vmatpush1.bf16.xpose.msra.mxu0 0
        %2454 = vmatprep.subr.bf16.mxu0 0
        %2455 = vmatpush1.bf16.xpose.msra.mxu0 0
        %2456 = vmatprep.subr.bf16.mxu0 0
        %2457 = vmatpush1.bf16.xpose.msra.mxu0 0
        %2458 = vmatprep.subr.bf16.mxu0 0
        %2459 = vmatpush1.bf16.xpose.msra.mxu0 0
        %2460 = vmatprep.subr.bf16.mxu0 0
        %2461 = vmatpush1.bf16.xpose.msra.mxu0 0
        %2462 = vmatprep.subr.bf16.mxu0 0
        %2463 = vmatpush1.bf16.xpose.msra.mxu0 0
        %2464 = vmatprep.subr.bf16.mxu0 0
        %2465 = vmatpush1.bf16.xpose.msra.mxu0 0
        %2466 = vmatprep.mubr.bf16.mxu0 0
        %2467 = vmatmul.mubr.bf16.gmra.mrb[0].mxu0 %v2387
        %v2468 = vpop.f32.mrb[0].mxu0
        %v2469 = vadd.f32 %v1033, %v2468
        %v2470 = vpop.f32.mrb[0].mxu0
        %v2471 = vpop.f32.mrb[0].mxu0
        %v2472 = vadd.f32 %v1033, %v2471
        %v2473 = vpop.f32.mrb[0].mxu0
        %2474 = vmatprep.mubr.bf16.mxu0 0
        %2475 = vmatmul.mubr.bf16.gmra.mrb[0].mxu0 %v2390
        %v2476 = vpop.f32.mrb[0].mxu0
        %v2477 = vadd.f32 %v1033, %v2476
        %v2478 = vpop.f32.mrb[0].mxu0
        %v2479 = vpop.f32.mrb[0].mxu0
        %v2480 = vadd.f32 %v1033, %v2479
        %v2481 = vpop.f32.mrb[0].mxu0
        %2482 = vmatprep.mubr.bf16.mxu0 0
        %2483 = vmatmul.mubr.bf16.gmra.mrb[0].mxu0 %v2393
        %v2484 = vpop.f32.mrb[0].mxu0
        %v2485 = vadd.f32 %v1033, %v2484
        %v2486 = vpop.f32.mrb[0].mxu0
        %v2487 = vpop.f32.mrb[0].mxu0
        %v2488 = vadd.f32 %v1033, %v2487
        %v2489 = vpop.f32.mrb[0].mxu0
        %2490 = vmatprep.mubr.bf16.mxu0 0
        %2491 = vmatmul.mubr.bf16.gmra.mrb[0].mxu0 %v2396
        %v2492 = vpop.f32.mrb[0].mxu0
        %v2493 = vadd.f32 %v1033, %v2492
        %v2494 = vpop.f32.mrb[0].mxu0
        %v2495 = vpop.f32.mrb[0].mxu0
        %v2496 = vadd.f32 %v1033, %v2495
        %v2497 = vpop.f32.mrb[0].mxu0
        %2498 = vmatprep.mubr.bf16.mxu0 0
        %2499 = vmatmul.mubr.bf16.gmra.mrb[0].mxu0 %v2399
        %v2500 = vpop.f32.mrb[0].mxu0
        %v2501 = vadd.f32 %v1033, %v2500
        %v2502 = vpop.f32.mrb[0].mxu0
        %v2503 = vpop.f32.mrb[0].mxu0
        %v2504 = vadd.f32 %v1033, %v2503
        %v2505 = vpop.f32.mrb[0].mxu0
        %2506 = vmatprep.mubr.bf16.mxu0 0
        %2507 = vmatmul.mubr.bf16.gmra.mrb[0].mxu0 %v2402
        %v2508 = vpop.f32.mrb[0].mxu0
        %v2509 = vadd.f32 %v1033, %v2508
        %v2510 = vpop.f32.mrb[0].mxu0
        %v2511 = vpop.f32.mrb[0].mxu0
        %v2512 = vadd.f32 %v1033, %v2511
        %v2513 = vpop.f32.mrb[0].mxu0
        %2514 = vmatprep.mubr.bf16.mxu0 0
        %2515 = vmatmul.mubr.bf16.gmra.mrb[0].mxu0 %v2405
        %v2516 = vpop.f32.mrb[0].mxu0
        %v2517 = vadd.f32 %v1033, %v2516
        %v2518 = vpop.f32.mrb[0].mxu0
        %v2519 = vpop.f32.mrb[0].mxu0
        %v2520 = vadd.f32 %v1033, %v2519
        %v2521 = vpop.f32.mrb[0].mxu0
        %2522 = vmatprep.mubr.bf16.mxu0 0
        %2523 = vmatmul.mubr.bf16.gmra.mrb[0].mxu0 %v2408
        %v2524 = vpop.f32.mrb[0].mxu0
        %v2525 = vadd.f32 %v1033, %v2524
        %v2526 = vpop.f32.mrb[0].mxu0
        %v2527 = vpop.f32.mrb[0].mxu0
        %v2528 = vadd.f32 %v1033, %v2527
        %v2529 = vpop.f32.mrb[0].mxu0
        %2530 = vdwg.mxu0
        %2531 = vmax.xlane.f32.xlu0 %v2469
        %v2532 = vpop.xlane.xlu0 %2531
        %2533 = vmax.xlane.f32.xlu0 %v2472
        %v2534 = vpop.xlane.xlu0 %2533
        %2535 = vmax.xlane.f32.xlu0 %v2477
        %v2536 = vpop.xlane.xlu0 %2535
        %2537 = vmax.xlane.f32.xlu0 %v2480
        %v2538 = vpop.xlane.xlu0 %2537
        %2539 = vmax.xlane.f32.xlu0 %v2485
        %v2540 = vpop.xlane.xlu0 %2539
        %2541 = vmax.xlane.f32.xlu0 %v2488
        %v2542 = vpop.xlane.xlu0 %2541
        %2543 = vmax.xlane.f32.xlu0 %v2493
        %v2544 = vpop.xlane.xlu0 %2543
        %2545 = vmax.xlane.f32.xlu0 %v2496
        %v2546 = vpop.xlane.xlu0 %2545
        %2547 = vmax.xlane.f32.xlu0 %v2501
        %v2548 = vpop.xlane.xlu0 %2547
        %2549 = vmax.xlane.f32.xlu0 %v2504
        %v2550 = vpop.xlane.xlu0 %2549
        %2551 = vmax.xlane.f32.xlu0 %v2509
        %v2552 = vpop.xlane.xlu0 %2551
        %2553 = vmax.xlane.f32.xlu0 %v2512
        %v2554 = vpop.xlane.xlu0 %2553
        %2555 = vmax.xlane.f32.xlu0 %v2517
        %v2556 = vpop.xlane.xlu0 %2555
        %2557 = vmax.xlane.f32.xlu0 %v2520
        %v2558 = vpop.xlane.xlu0 %2557
        %2559 = vmax.xlane.f32.xlu0 %v2525
        %v2560 = vpop.xlane.xlu0 %2559
        %2561 = vmax.xlane.f32.xlu0 %v2528
        %v2562 = vpop.xlane.xlu0 %2561
        %v2563 = vsub.f32 %v2469, %v2532
        %v2564 = vsub.f32 %v2472, %v2534
        %v2565 = vsub.f32 %v2477, %v2536
        %v2566 = vsub.f32 %v2480, %v2538
        %v2567 = vsub.f32 %v2485, %v2540
        %v2568 = vsub.f32 %v2488, %v2542
        %v2569 = vsub.f32 %v2493, %v2544
        %v2570 = vsub.f32 %v2496, %v2546
        %v2571 = vsub.f32 %v2501, %v2548
        %v2572 = vsub.f32 %v2504, %v2550
        %v2573 = vsub.f32 %v2509, %v2552
        %v2574 = vsub.f32 %v2512, %v2554
        %v2575 = vsub.f32 %v2517, %v2556
        %v2576 = vsub.f32 %v2520, %v2558
        %v2577 = vsub.f32 %v2525, %v2560
        %v2578 = vsub.f32 %v2528, %v2562
        %v2579 = vmul.f32 %v2563, 1.442695
        %v2580 = vpow.pop %v2579
        %v2581 = vmul.f32 %v2564, 1.442695
        %v2582 = vpow.pop %v2581
        %v2583 = vmul.f32 %v2565, 1.442695
        %v2584 = vpow.pop %v2583
        %v2585 = vmul.f32 %v2566, 1.442695
        %v2586 = vpow.pop %v2585
        %v2587 = vmul.f32 %v2567, 1.442695
        %v2588 = vpow.pop %v2587
        %v2589 = vmul.f32 %v2568, 1.442695
        %v2590 = vpow.pop %v2589
        %v2591 = vmul.f32 %v2569, 1.442695
        %v2592 = vpow.pop %v2591
        %v2593 = vmul.f32 %v2570, 1.442695
        %v2594 = vpow.pop %v2593
        %v2595 = vmul.f32 %v2571, 1.442695
        %v2596 = vpow.pop %v2595
        %v2597 = vmul.f32 %v2572, 1.442695
        %v2598 = vpow.pop %v2597
        %v2599 = vmul.f32 %v2573, 1.442695
        %v2600 = vpow.pop %v2599
        %v2601 = vmul.f32 %v2574, 1.442695
        %v2602 = vpow.pop %v2601
        %v2603 = vmul.f32 %v2575, 1.442695
        %v2604 = vpow.pop %v2603
        %v2605 = vmul.f32 %v2576, 1.442695
        %v2606 = vpow.pop %v2605
        %v2607 = vmul.f32 %v2577, 1.442695
        %v2608 = vpow.pop %v2607
        %v2609 = vmul.f32 %v2578, 1.442695
        %v2610 = vpow.pop %v2609
        %2611 = vadd.xlane.f32.xlu0 %v2580
        %v2612 = vpop.xlane.xlu0 %2611
        %2613 = vadd.xlane.f32.xlu0 %v2582
        %v2614 = vpop.xlane.xlu0 %2613
        %2615 = vadd.xlane.f32.xlu0 %v2584
        %v2616 = vpop.xlane.xlu0 %2615
        %2617 = vadd.xlane.f32.xlu0 %v2586
        %v2618 = vpop.xlane.xlu0 %2617
        %2619 = vadd.xlane.f32.xlu0 %v2588
        %v2620 = vpop.xlane.xlu0 %2619
        %2621 = vadd.xlane.f32.xlu0 %v2590
        %v2622 = vpop.xlane.xlu0 %2621
        %2623 = vadd.xlane.f32.xlu0 %v2592
        %v2624 = vpop.xlane.xlu0 %2623
        %2625 = vadd.xlane.f32.xlu0 %v2594
        %v2626 = vpop.xlane.xlu0 %2625
        %2627 = vadd.xlane.f32.xlu0 %v2596
        %v2628 = vpop.xlane.xlu0 %2627
        %2629 = vadd.xlane.f32.xlu0 %v2598
        %v2630 = vpop.xlane.xlu0 %2629
        %2631 = vadd.xlane.f32.xlu0 %v2600
        %v2632 = vpop.xlane.xlu0 %2631
        %2633 = vadd.xlane.f32.xlu0 %v2602
        %v2634 = vpop.xlane.xlu0 %2633
        %2635 = vadd.xlane.f32.xlu0 %v2604
        %v2636 = vpop.xlane.xlu0 %2635
        %2637 = vadd.xlane.f32.xlu0 %v2606
        %v2638 = vpop.xlane.xlu0 %2637
        %2639 = vadd.xlane.f32.xlu0 %v2608
        %v2640 = vpop.xlane.xlu0 %2639
        %2641 = vadd.xlane.f32.xlu0 %v2610
        %v2642 = vpop.xlane.xlu0 %2641
        %v2643 = vpack.c.bf16 %v2582, %v2580
        %v2644 = vpack.c.bf16 %v2586, %v2584
        %v2645 = vpack.c.bf16 %v2590, %v2588
        %v2646 = vpack.c.bf16 %v2594, %v2592
        %v2647 = vpack.c.bf16 %v2598, %v2596
        %v2648 = vpack.c.bf16 %v2602, %v2600
        %v2649 = vpack.c.bf16 %v2606, %v2604
        %v2650 = vpack.c.bf16 %v2610, %v2608
        %2651 = vrot.lane.b32.xlu0 %v1020, 104
        %v2652 = vpop.permute.xlu0 %2651
        %2653 = vrot.lane.b32.xlu0 %v1021, 104
        %v2654 = vpop.permute.xlu0 %2653
        %2655 = vrot.lane.b32.xlu0 %v1022, 104
        %v2656 = vpop.permute.xlu0 %2655
        %2657 = vrot.lane.b32.xlu0 %v1023, 104
        %v2658 = vpop.permute.xlu0 %2657
        %2659 = vrot.lane.b32.xlu0 %v1024, 104
        %v2660 = vpop.permute.xlu0 %2659
        %2661 = vrot.lane.b32.xlu0 %v1025, 104
        %v2662 = vpop.permute.xlu0 %2661
        %2663 = vrot.lane.b32.xlu0 %v1026, 104
        %v2664 = vpop.permute.xlu0 %2663
        %2665 = vrot.lane.b32.xlu0 %v1027, 104
        %v2666 = vpop.permute.xlu0 %2665
        %2675 = vmatprep.subr.bf16.mxu0 0
        %2676 = vmatpush1.bf16.msra.mxu0 %v2652
        %2677 = vmatprep.subr.bf16.mxu0 0
        %2678 = vmatpush1.bf16.msra.mxu0 %v2654
        %2679 = vmatprep.subr.bf16.mxu0 0
        %2680 = vmatpush1.bf16.msra.mxu0 %v2656
        %2681 = vmatprep.subr.bf16.mxu0 0
        %2682 = vmatpush1.bf16.msra.mxu0 %v2658
        %2683 = vmatprep.subr.bf16.mxu0 0
        %2684 = vmatpush1.bf16.msra.mxu0 %v2660
        %2685 = vmatprep.subr.bf16.mxu0 0
        %2686 = vmatpush1.bf16.msra.mxu0 %v2662
        %2687 = vmatprep.subr.bf16.mxu0 0
        %2688 = vmatpush1.bf16.msra.mxu0 %v2664
        %2689 = vmatprep.subr.bf16.mxu0 0
        %2690 = vmatpush1.bf16.msra.mxu0 %v2666
        %2691 = vmatprep.subr.bf16.mxu0 0
        %2692 = vmatpush1.bf16.msra.mxu0 0
        %2693 = vmatprep.subr.bf16.mxu0 0
        %2694 = vmatpush1.bf16.msra.mxu0 0
        %2695 = vmatprep.subr.bf16.mxu0 0
        %2696 = vmatpush1.bf16.msra.mxu0 0
        %2697 = vmatprep.subr.bf16.mxu0 0
        %2698 = vmatpush1.bf16.msra.mxu0 0
        %2699 = vmatprep.subr.bf16.mxu0 0
        %2700 = vmatpush1.bf16.msra.mxu0 0
        %2701 = vmatprep.subr.bf16.mxu0 0
        %2702 = vmatpush1.bf16.msra.mxu0 0
        %2703 = vmatprep.subr.bf16.mxu0 0
        %2704 = vmatpush1.bf16.msra.mxu0 0
        %2705 = vmatprep.subr.bf16.mxu0 0
        %2706 = vmatpush1.bf16.msra.mxu0 0
        %2707 = vmatprep.mubr.bf16.mxu0 0
        %2708 = vmatmul.mubr.bf16.gmra.mrb[0].mxu0 %v2643
        %v2709 = vpop.f32.mrb[0].mxu0
        %v2710 = vadd.f32 0.0, %v2709
        %v2711 = vpop.f32.mrb[0].mxu0
        %v2712 = vpop.f32.mrb[0].mxu0
        %v2713 = vadd.f32 0.0, %v2712
        %v2714 = vpop.f32.mrb[0].mxu0
        %2715 = vmatprep.mubr.bf16.mxu0 0
        %2716 = vmatmul.mubr.bf16.gmra.mrb[0].mxu0 %v2644
        %v2717 = vpop.f32.mrb[0].mxu0
        %v2718 = vadd.f32 0.0, %v2717
        %v2719 = vpop.f32.mrb[0].mxu0
        %v2720 = vpop.f32.mrb[0].mxu0
        %v2721 = vadd.f32 0.0, %v2720
        %v2722 = vpop.f32.mrb[0].mxu0
        %2723 = vmatprep.mubr.bf16.mxu0 0
        %2724 = vmatmul.mubr.bf16.gmra.mrb[0].mxu0 %v2645
        %v2725 = vpop.f32.mrb[0].mxu0
        %v2726 = vadd.f32 0.0, %v2725
        %v2727 = vpop.f32.mrb[0].mxu0
        %v2728 = vpop.f32.mrb[0].mxu0
        %v2729 = vadd.f32 0.0, %v2728
        %v2730 = vpop.f32.mrb[0].mxu0
        %2731 = vmatprep.mubr.bf16.mxu0 0
        %2732 = vmatmul.mubr.bf16.gmra.mrb[0].mxu0 %v2646
        %v2733 = vpop.f32.mrb[0].mxu0
        %v2734 = vadd.f32 0.0, %v2733
        %v2735 = vpop.f32.mrb[0].mxu0
        %v2736 = vpop.f32.mrb[0].mxu0
        %v2737 = vadd.f32 0.0, %v2736
        %v2738 = vpop.f32.mrb[0].mxu0
        %2739 = vmatprep.mubr.bf16.mxu0 0
        %2740 = vmatmul.mubr.bf16.gmra.mrb[0].mxu0 %v2647
        %v2741 = vpop.f32.mrb[0].mxu0
        %v2742 = vadd.f32 0.0, %v2741
        %v2743 = vpop.f32.mrb[0].mxu0
        %v2744 = vpop.f32.mrb[0].mxu0
        %v2745 = vadd.f32 0.0, %v2744
        %v2746 = vpop.f32.mrb[0].mxu0
        %2747 = vmatprep.mubr.bf16.mxu0 0
        %2748 = vmatmul.mubr.bf16.gmra.mrb[0].mxu0 %v2648
        %v2749 = vpop.f32.mrb[0].mxu0
        %v2750 = vadd.f32 0.0, %v2749
        %v2751 = vpop.f32.mrb[0].mxu0
        %v2752 = vpop.f32.mrb[0].mxu0
        %v2753 = vadd.f32 0.0, %v2752
        %v2754 = vpop.f32.mrb[0].mxu0
        %2755 = vmatprep.mubr.bf16.mxu0 0
        %2756 = vmatmul.mubr.bf16.gmra.mrb[0].mxu0 %v2649
        %v2757 = vpop.f32.mrb[0].mxu0
        %v2758 = vadd.f32 0.0, %v2757
        %v2759 = vpop.f32.mrb[0].mxu0
        %v2760 = vpop.f32.mrb[0].mxu0
        %v2761 = vadd.f32 0.0, %v2760
        %v2762 = vpop.f32.mrb[0].mxu0
        %2763 = vmatprep.mubr.bf16.mxu0 0
        %2764 = vmatmul.mubr.bf16.gmra.mrb[0].mxu0 %v2650
        %v2765 = vpop.f32.mrb[0].mxu0
        %v2766 = vadd.f32 0.0, %v2765
        %v2767 = vpop.f32.mrb[0].mxu0
        %v2768 = vpop.f32.mrb[0].mxu0
        %v2769 = vadd.f32 0.0, %v2768
        %v2770 = vpop.f32.mrb[0].mxu0
        %2771 = vdwg.mxu0
        %v2772 = vrcp.pop %v2612
        %v2773 = vrcp.pop %v2614
        %v2774 = vrcp.pop %v2616
        %v2775 = vrcp.pop %v2618
        %v2776 = vrcp.pop %v2620
        %v2777 = vrcp.pop %v2622
        %v2778 = vrcp.pop %v2624
        %v2779 = vrcp.pop %v2626
        %v2780 = vrcp.pop %v2628
        %v2781 = vrcp.pop %v2630
        %v2782 = vrcp.pop %v2632
        %v2783 = vrcp.pop %v2634
        %v2784 = vrcp.pop %v2636
        %v2785 = vrcp.pop %v2638
        %v2786 = vrcp.pop %v2640
        %v2787 = vrcp.pop %v2642
        %v2788 = vmul.f32 %v2710, %v2772
        %v2789 = vmul.f32 %v2713, %v2773
        %v2790 = vmul.f32 %v2718, %v2774
        %v2791 = vmul.f32 %v2721, %v2775
        %v2792 = vmul.f32 %v2726, %v2776
        %v2793 = vmul.f32 %v2729, %v2777
        %v2794 = vmul.f32 %v2734, %v2778
        %v2795 = vmul.f32 %v2737, %v2779
        %v2796 = vmul.f32 %v2742, %v2780
        %v2797 = vmul.f32 %v2745, %v2781
        %v2798 = vmul.f32 %v2750, %v2782
        %v2799 = vmul.f32 %v2753, %v2783
        %v2800 = vmul.f32 %v2758, %v2784
        %v2801 = vmul.f32 %v2761, %v2785
        %v2802 = vmul.f32 %v2766, %v2786
        %v2803 = vmul.f32 %v2769, %v2787
        %2820 = vrot.lane.b32.xlu0 %v1888, 8
        %v2821 = vpop.permute.xlu0 %2820
        %2822 = vrot.lane.b32.xlu0 %v1889, 8
        %v2823 = vpop.permute.xlu0 %2822
        %2824 = vrot.lane.b32.xlu0 %v1890, 8
        %v2825 = vpop.permute.xlu0 %2824
        %2826 = vrot.lane.b32.xlu0 %v1891, 8
        %v2827 = vpop.permute.xlu0 %2826
        %2828 = vrot.lane.b32.xlu0 %v1892, 8
        %v2829 = vpop.permute.xlu0 %2828
        %2830 = vrot.lane.b32.xlu0 %v1893, 8
        %v2831 = vpop.permute.xlu0 %2830
        %2832 = vrot.lane.b32.xlu0 %v1894, 8
        %v2833 = vpop.permute.xlu0 %2832
        %2834 = vrot.lane.b32.xlu0 %v1895, 8
        %v2835 = vpop.permute.xlu0 %2834
        %2836 = vrot.lane.b32.xlu0 %v1896, 8
        %v2837 = vpop.permute.xlu0 %2836
        %2838 = vrot.lane.b32.xlu0 %v1897, 8
        %v2839 = vpop.permute.xlu0 %2838
        %2840 = vrot.lane.b32.xlu0 %v1898, 8
        %v2841 = vpop.permute.xlu0 %2840
        %2842 = vrot.lane.b32.xlu0 %v1899, 8
        %v2843 = vpop.permute.xlu0 %2842
        %2844 = vrot.lane.b32.xlu0 %v1900, 8
        %v2845 = vpop.permute.xlu0 %2844
        %2846 = vrot.lane.b32.xlu0 %v1901, 8
        %v2847 = vpop.permute.xlu0 %2846
        %2848 = vrot.lane.b32.xlu0 %v1902, 8
        %v2849 = vpop.permute.xlu0 %2848
        %2850 = vrot.lane.b32.xlu0 %v1903, 8
        %v2851 = vpop.permute.xlu0 %2850
        %2884 = vrot.lane.b32.xlu0 %v2338, 16
        %v2885 = vpop.permute.xlu0 %2884
        %2886 = vrot.lane.b32.xlu0 %v2339, 16
        %v2887 = vpop.permute.xlu0 %2886
        %2888 = vrot.lane.b32.xlu0 %v2340, 16
        %v2889 = vpop.permute.xlu0 %2888
        %2890 = vrot.lane.b32.xlu0 %v2341, 16
        %v2891 = vpop.permute.xlu0 %2890
        %2892 = vrot.lane.b32.xlu0 %v2342, 16
        %v2893 = vpop.permute.xlu0 %2892
        %2894 = vrot.lane.b32.xlu0 %v2343, 16
        %v2895 = vpop.permute.xlu0 %2894
        %2896 = vrot.lane.b32.xlu0 %v2344, 16
        %v2897 = vpop.permute.xlu0 %2896
        %2898 = vrot.lane.b32.xlu0 %v2345, 16
        %v2899 = vpop.permute.xlu0 %2898
        %2900 = vrot.lane.b32.xlu0 %v2346, 16
        %v2901 = vpop.permute.xlu0 %2900
        %2902 = vrot.lane.b32.xlu0 %v2347, 16
        %v2903 = vpop.permute.xlu0 %2902
        %2904 = vrot.lane.b32.xlu0 %v2348, 16
        %v2905 = vpop.permute.xlu0 %2904
        %2906 = vrot.lane.b32.xlu0 %v2349, 16
        %v2907 = vpop.permute.xlu0 %2906
        %2908 = vrot.lane.b32.xlu0 %v2350, 16
        %v2909 = vpop.permute.xlu0 %2908
        %2910 = vrot.lane.b32.xlu0 %v2351, 16
        %v2911 = vpop.permute.xlu0 %2910
        %2912 = vrot.lane.b32.xlu0 %v2352, 16
        %v2913 = vpop.permute.xlu0 %2912
        %2914 = vrot.lane.b32.xlu0 %v2353, 16
        %v2915 = vpop.permute.xlu0 %2914
        %2948 = vrot.lane.b32.xlu0 %v2788, 24
        %v2949 = vpop.permute.xlu0 %2948
        %2950 = vrot.lane.b32.xlu0 %v2789, 24
        %v2951 = vpop.permute.xlu0 %2950
        %2952 = vrot.lane.b32.xlu0 %v2790, 24
        %v2953 = vpop.permute.xlu0 %2952
        %2954 = vrot.lane.b32.xlu0 %v2791, 24
        %v2955 = vpop.permute.xlu0 %2954
        %2956 = vrot.lane.b32.xlu0 %v2792, 24
        %v2957 = vpop.permute.xlu0 %2956
        %2958 = vrot.lane.b32.xlu0 %v2793, 24
        %v2959 = vpop.permute.xlu0 %2958
        %2960 = vrot.lane.b32.xlu0 %v2794, 24
        %v2961 = vpop.permute.xlu0 %2960
        %2962 = vrot.lane.b32.xlu0 %v2795, 24
        %v2963 = vpop.permute.xlu0 %2962
        %2964 = vrot.lane.b32.xlu0 %v2796, 24
        %v2965 = vpop.permute.xlu0 %2964
        %2966 = vrot.lane.b32.xlu0 %v2797, 24
        %v2967 = vpop.permute.xlu0 %2966
        %2968 = vrot.lane.b32.xlu0 %v2798, 24
        %v2969 = vpop.permute.xlu0 %2968
        %2970 = vrot.lane.b32.xlu0 %v2799, 24
        %v2971 = vpop.permute.xlu0 %2970
        %2972 = vrot.lane.b32.xlu0 %v2800, 24
        %v2973 = vpop.permute.xlu0 %2972
        %2974 = vrot.lane.b32.xlu0 %v2801, 24
        %v2975 = vpop.permute.xlu0 %2974
        %2976 = vrot.lane.b32.xlu0 %v2802, 24
        %v2977 = vpop.permute.xlu0 %2976
        %2978 = vrot.lane.b32.xlu0 %v2803, 24
        %v2979 = vpop.permute.xlu0 %2978
        %v2996 = vsel %vm1035, %v1414, %v2821
        %v2997 = vsel %vm1035, %v1415, %v2823
        %v2998 = vsel %vm1035, %v1416, %v2825
        %v2999 = vsel %vm1035, %v1417, %v2827
        %v3000 = vsel %vm1035, %v1418, %v2829
        %v3001 = vsel %vm1035, %v1419, %v2831
        %v3002 = vsel %vm1035, %v1420, %v2833
        %v3003 = vsel %vm1035, %v1421, %v2835
        %v3004 = vsel %vm1035, %v1422, %v2837
        %v3005 = vsel %vm1035, %v1423, %v2839
        %v3006 = vsel %vm1035, %v1424, %v2841
        %v3007 = vsel %vm1035, %v1425, %v2843
        %v3008 = vsel %vm1035, %v1426, %v2845
        %v3009 = vsel %vm1035, %v1427, %v2847
        %v3010 = vsel %vm1035, %v1428, %v2849
        %v3011 = vsel %vm1035, %v1429, %v2851
        %vm3012 = vcmask 130048
        %v3013 = vsel %vm3012, %v2996, %v2885
        %v3014 = vsel %vm3012, %v2997, %v2887
        %v3015 = vsel %vm3012, %v2998, %v2889
        %v3016 = vsel %vm3012, %v2999, %v2891
        %v3017 = vsel %vm3012, %v3000, %v2893
        %v3018 = vsel %vm3012, %v3001, %v2895
        %v3019 = vsel %vm3012, %v3002, %v2897
        %v3020 = vsel %vm3012, %v3003, %v2899
        %v3021 = vsel %vm3012, %v3004, %v2901
        %v3022 = vsel %vm3012, %v3005, %v2903
        %v3023 = vsel %vm3012, %v3006, %v2905
        %v3024 = vsel %vm3012, %v3007, %v2907
        %v3025 = vsel %vm3012, %v3008, %v2909
        %v3026 = vsel %vm3012, %v3009, %v2911
        %v3027 = vsel %vm3012, %v3010, %v2913
        %v3028 = vsel %vm3012, %v3011, %v2915
        %vm3029 = vcmask 195584
        %v3030 = vsel %vm3029, %v3013, %v2949
        %v3031 = vsel %vm3029, %v3014, %v2951
        %v3032 = vsel %vm3029, %v3015, %v2953
        %v3033 = vsel %vm3029, %v3016, %v2955
        %v3034 = vsel %vm3029, %v3017, %v2957
        %v3035 = vsel %vm3029, %v3018, %v2959
        %v3036 = vsel %vm3029, %v3019, %v2961
        %v3037 = vsel %vm3029, %v3020, %v2963
        %v3038 = vsel %vm3029, %v3021, %v2965
        %v3039 = vsel %vm3029, %v3022, %v2967
        %v3040 = vsel %vm3029, %v3023, %v2969
        %v3041 = vsel %vm3029, %v3024, %v2971
        %v3042 = vsel %vm3029, %v3025, %v2973
        %v3043 = vsel %vm3029, %v3026, %v2975
        %v3044 = vsel %vm3029, %v3027, %v2977
        %v3045 = vsel %vm3029, %v3028, %v2979
        %v3046 = vld [vmem:[#allocation4] sm:$0xff]
        %v3047 = vld [vmem:[#allocation4 + $0x8] sm:$0xff]
        %v3048 = vld [vmem:[#allocation4 + $0x10] sm:$0xff]
        %v3049 = vld [vmem:[#allocation4 + $0x18] sm:$0xff]
        %v3050 = vld [vmem:[#allocation4 + $0x20] sm:$0xff]
        %v3051 = vld [vmem:[#allocation4 + $0x28] sm:$0xff]
        %v3052 = vld [vmem:[#allocation4 + $0x30] sm:$0xff]
        %v3053 = vld [vmem:[#allocation4 + $0x38] sm:$0xff]
        %v3054 = vld [vmem:[#allocation4 + $0x40] sm:$0xff]
        %v3055 = vld [vmem:[#allocation4 + $0x48] sm:$0xff]
        %v3056 = vld [vmem:[#allocation4 + $0x50] sm:$0xff]
        %v3057 = vld [vmem:[#allocation4 + $0x58] sm:$0xff]
        %v3058 = vld [vmem:[#allocation4 + $0x60] sm:$0xff]
        %v3059 = vld [vmem:[#allocation4 + $0x68] sm:$0xff]
        %v3060 = vld [vmem:[#allocation4 + $0x70] sm:$0xff]
        %v3061 = vld [vmem:[#allocation4 + $0x78] sm:$0xff]
        %v3062 = vpack.c.bf16 %v3031, %v3030
        %v3063 = vpack.c.bf16 %v3033, %v3032
        %v3064 = vpack.c.bf16 %v3035, %v3034
        %v3065 = vpack.c.bf16 %v3037, %v3036
        %v3066 = vpack.c.bf16 %v3039, %v3038
        %v3067 = vpack.c.bf16 %v3041, %v3040
        %v3068 = vpack.c.bf16 %v3043, %v3042
        %v3069 = vpack.c.bf16 %v3045, %v3044
        %s3070 = smul.addr %s794, 4
        %s3071 = scalar_lea.vmem %s5, %s3070
        %v3072 = vld [vmem:[%s3071] sm:$0xf]
        %v3073 = vld [vmem:[%s3071 + $0x4] sm:$0xf]
        %v3074 = vld [vmem:[%s3071 + $0x8] sm:$0xf]
        %v3075 = vld [vmem:[%s3071 + $0xc] sm:$0xf]
        %v3080 = vunpack.c.l.b16 %v3072
        %v3081 = vunpack.c.l.b16 %v3073
        %v3082 = vunpack.c.l.b16 %v3074
        %v3083 = vunpack.c.l.b16 %v3075
        %v3084 = vpack.c.b16 %v3081, %v3080
        %v3085 = vpack.c.b16 %v3083, %v3082
        %v3089 = vsel %vm861, %v3062, 0
        %v3092 = vsel %vm861, %v3063, 0
        %v3095 = vsel %vm861, %v3064, 0
        %v3098 = vsel %vm861, %v3065, 0
        %v3101 = vsel %vm861, %v3066, 0
        %v3104 = vsel %vm861, %v3067, 0
        %v3107 = vsel %vm861, %v3068, 0
        %v3110 = vsel %vm861, %v3069, 0
        %3112 = vmatprep.subr.bf16.mxu0 0
        %3113 = vmatpush1.bf16.msra.mxu0 %v3084
        %3114 = vmatprep.subr.bf16.mxu0 0
        %3115 = vmatpush1.bf16.msra.mxu0 %v3085
        %3116 = vmatprep.subr.bf16.mxu0 0
        %3117 = vmatpush1.bf16.msra.mxu0 0
        %3118 = vmatprep.subr.bf16.mxu0 0
        %3119 = vmatpush1.bf16.msra.mxu0 0
        %3120 = vmatprep.subr.bf16.mxu0 0
        %3121 = vmatpush1.bf16.msra.mxu0 0
        %3122 = vmatprep.subr.bf16.mxu0 0
        %3123 = vmatpush1.bf16.msra.mxu0 0
        %3124 = vmatprep.subr.bf16.mxu0 0
        %3125 = vmatpush1.bf16.msra.mxu0 0
        %3126 = vmatprep.subr.bf16.mxu0 0
        %3127 = vmatpush1.bf16.msra.mxu0 0
        %3128 = vmatprep.subr.bf16.mxu0 0
        %3129 = vmatpush1.bf16.msra.mxu0 0
        %3130 = vmatprep.subr.bf16.mxu0 0
        %3131 = vmatpush1.bf16.msra.mxu0 0
        %3132 = vmatprep.subr.bf16.mxu0 0
        %3133 = vmatpush1.bf16.msra.mxu0 0
        %3134 = vmatprep.subr.bf16.mxu0 0
        %3135 = vmatpush1.bf16.msra.mxu0 0
        %3136 = vmatprep.subr.bf16.mxu0 0
        %3137 = vmatpush1.bf16.msra.mxu0 0
        %3138 = vmatprep.subr.bf16.mxu0 0
        %3139 = vmatpush1.bf16.msra.mxu0 0
        %3140 = vmatprep.subr.bf16.mxu0 0
        %3141 = vmatpush1.bf16.msra.mxu0 0
        %3142 = vmatprep.subr.bf16.mxu0 0
        %3143 = vmatpush1.bf16.msra.mxu0 0
        %3144 = vmatprep.mubr.bf16.mxu0 0
        %3145 = vmatmul.mubr.bf16.gmra.mrb[0].mxu0 %v3089
        %v3146 = vpop.f32.mrb[0].mxu0
        %v3147 = vadd.f32 0.0, %v3146
        %v3148 = vpop.f32.mrb[0].mxu0
        %v3149 = vpop.f32.mrb[0].mxu0
        %v3150 = vadd.f32 0.0, %v3149
        %v3151 = vpop.f32.mrb[0].mxu0
        %3152 = vmatprep.mubr.bf16.mxu0 0
        %3153 = vmatmul.mubr.bf16.gmra.mrb[0].mxu0 %v3092
        %v3154 = vpop.f32.mrb[0].mxu0
        %v3155 = vadd.f32 0.0, %v3154
        %v3156 = vpop.f32.mrb[0].mxu0
        %v3157 = vpop.f32.mrb[0].mxu0
        %v3158 = vadd.f32 0.0, %v3157
        %v3159 = vpop.f32.mrb[0].mxu0
        %3160 = vmatprep.mubr.bf16.mxu0 0
        %3161 = vmatmul.mubr.bf16.gmra.mrb[0].mxu0 %v3095
        %v3162 = vpop.f32.mrb[0].mxu0
        %v3163 = vadd.f32 0.0, %v3162
        %v3164 = vpop.f32.mrb[0].mxu0
        %v3165 = vpop.f32.mrb[0].mxu0
        %v3166 = vadd.f32 0.0, %v3165
        %v3167 = vpop.f32.mrb[0].mxu0
        %3168 = vmatprep.mubr.bf16.mxu0 0
        %3169 = vmatmul.mubr.bf16.gmra.mrb[0].mxu0 %v3098
        %v3170 = vpop.f32.mrb[0].mxu0
        %v3171 = vadd.f32 0.0, %v3170
        %v3172 = vpop.f32.mrb[0].mxu0
        %v3173 = vpop.f32.mrb[0].mxu0
        %v3174 = vadd.f32 0.0, %v3173
        %v3175 = vpop.f32.mrb[0].mxu0
        %3176 = vmatprep.mubr.bf16.mxu0 0
        %3177 = vmatmul.mubr.bf16.gmra.mrb[0].mxu0 %v3101
        %v3178 = vpop.f32.mrb[0].mxu0
        %v3179 = vadd.f32 0.0, %v3178
        %v3180 = vpop.f32.mrb[0].mxu0
        %v3181 = vpop.f32.mrb[0].mxu0
        %v3182 = vadd.f32 0.0, %v3181
        %v3183 = vpop.f32.mrb[0].mxu0
        %3184 = vmatprep.mubr.bf16.mxu0 0
        %3185 = vmatmul.mubr.bf16.gmra.mrb[0].mxu0 %v3104
        %v3186 = vpop.f32.mrb[0].mxu0
        %v3187 = vadd.f32 0.0, %v3186
        %v3188 = vpop.f32.mrb[0].mxu0
        %v3189 = vpop.f32.mrb[0].mxu0
        %v3190 = vadd.f32 0.0, %v3189
        %v3191 = vpop.f32.mrb[0].mxu0
        %3192 = vmatprep.mubr.bf16.mxu0 0
        %3193 = vmatmul.mubr.bf16.gmra.mrb[0].mxu0 %v3107
        %v3194 = vpop.f32.mrb[0].mxu0
        %v3195 = vadd.f32 0.0, %v3194
        %v3196 = vpop.f32.mrb[0].mxu0
        %v3197 = vpop.f32.mrb[0].mxu0
        %v3198 = vadd.f32 0.0, %v3197
        %v3199 = vpop.f32.mrb[0].mxu0
        %3200 = vmatprep.mubr.bf16.mxu0 0
        %3201 = vmatmul.mubr.bf16.gmra.mrb[0].mxu0 %v3110
        %v3202 = vpop.f32.mrb[0].mxu0
        %v3203 = vadd.f32 0.0, %v3202
        %v3204 = vpop.f32.mrb[0].mxu0
        %v3205 = vpop.f32.mrb[0].mxu0
        %v3206 = vadd.f32 0.0, %v3205
        %v3207 = vpop.f32.mrb[0].mxu0
        %3208 = vdwg.mxu0
        %v3209 = vadd.f32 %v3046, %v3147
        %v3210 = vadd.f32 %v3047, %v3150
        %v3211 = vadd.f32 %v3048, %v3155
        %v3212 = vadd.f32 %v3049, %v3158
        %v3213 = vadd.f32 %v3050, %v3163
        %v3214 = vadd.f32 %v3051, %v3166
        %v3215 = vadd.f32 %v3052, %v3171
        %v3216 = vadd.f32 %v3053, %v3174
        %v3217 = vadd.f32 %v3054, %v3179
        %v3218 = vadd.f32 %v3055, %v3182
        %v3219 = vadd.f32 %v3056, %v3187
        %v3220 = vadd.f32 %v3057, %v3190
        %v3221 = vadd.f32 %v3058, %v3195
        %v3222 = vadd.f32 %v3059, %v3198
        %v3223 = vadd.f32 %v3060, %v3203
        %v3224 = vadd.f32 %v3061, %v3206
        %3225 = vst.msk [vmem:[#allocation4] sm:$0xff] %vm861, %v3209
        %3226 = vst.msk [vmem:[#allocation4 + $0x8] sm:$0xff] %vm861, %v3210
        %3227 = vst.msk [vmem:[#allocation4 + $0x10] sm:$0xff] %vm861, %v3211
        %3228 = vst.msk [vmem:[#allocation4 + $0x18] sm:$0xff] %vm861, %v3212
        %3229 = vst.msk [vmem:[#allocation4 + $0x20] sm:$0xff] %vm861, %v3213
        %3230 = vst.msk [vmem:[#allocation4 + $0x28] sm:$0xff] %vm861, %v3214
        %3231 = vst.msk [vmem:[#allocation4 + $0x30] sm:$0xff] %vm861, %v3215
        %3232 = vst.msk [vmem:[#allocation4 + $0x38] sm:$0xff] %vm861, %v3216
        %3233 = vst.msk [vmem:[#allocation4 + $0x40] sm:$0xff] %vm861, %v3217
        %3234 = vst.msk [vmem:[#allocation4 + $0x48] sm:$0xff] %vm861, %v3218
        %3235 = vst.msk [vmem:[#allocation4 + $0x50] sm:$0xff] %vm861, %v3219
        %3236 = vst.msk [vmem:[#allocation4 + $0x58] sm:$0xff] %vm861, %v3220
        %3237 = vst.msk [vmem:[#allocation4 + $0x60] sm:$0xff] %vm861, %v3221
        %3238 = vst.msk [vmem:[#allocation4 + $0x68] sm:$0xff] %vm861, %v3222
        %3239 = vst.msk [vmem:[#allocation4 + $0x70] sm:$0xff] %vm861, %v3223
        %3240 = vst.msk [vmem:[#allocation4 + $0x78] sm:$0xff] %vm861, %v3224
        // Predicated region
        $region69: #{tpu_custom_call.1} parent=59 // pred_check
          %p3241 = pneg %p752
        $region70: #{tpu_custom_call.1} parent=59 // pred_check_branch
          %3243 = sbr.rel (%p3241) target = $region72
        $region71: #{tpu_custom_call.1} parent=59 // pred_region
          %v3244 = vld [vmem:[#allocation4] sm:$0xff]
          %v3245 = vld [vmem:[#allocation4 + $0x8] sm:$0xff]
          %v3246 = vld [vmem:[#allocation4 + $0x10] sm:$0xff]
          %v3247 = vld [vmem:[#allocation4 + $0x18] sm:$0xff]
          %v3248 = vld [vmem:[#allocation4 + $0x20] sm:$0xff]
          %v3249 = vld [vmem:[#allocation4 + $0x28] sm:$0xff]
          %v3250 = vld [vmem:[#allocation4 + $0x30] sm:$0xff]
          %v3251 = vld [vmem:[#allocation4 + $0x38] sm:$0xff]
          %v3252 = vld [vmem:[#allocation4 + $0x40] sm:$0xff]
          %v3253 = vld [vmem:[#allocation4 + $0x48] sm:$0xff]
          %v3254 = vld [vmem:[#allocation4 + $0x50] sm:$0xff]
          %v3255 = vld [vmem:[#allocation4 + $0x58] sm:$0xff]
          %v3256 = vld [vmem:[#allocation4 + $0x60] sm:$0xff]
          %v3257 = vld [vmem:[#allocation4 + $0x68] sm:$0xff]
          %v3258 = vld [vmem:[#allocation4 + $0x70] sm:$0xff]
          %v3259 = vld [vmem:[#allocation4 + $0x78] sm:$0xff]
          %v3260 = vld [vmem:[%s9] sm:$0x1]
          %v3262 = vlaneseq
          %v3263 = vshrl.u32 %v3262, 7
          %v3264 = vsub.s32 0, %v3263
          %v3265 = vrot.slane %v3260, %v3264
          %v3267 = vadd.f32 %v3244, %v3265
          %v3268 = vadd.f32 %v3245, %v3265
          %v3269 = vadd.f32 %v3246, %v3265
          %v3270 = vadd.f32 %v3247, %v3265
          %v3271 = vadd.f32 %v3248, %v3265
          %v3272 = vadd.f32 %v3249, %v3265
          %v3273 = vadd.f32 %v3250, %v3265
          %v3274 = vadd.f32 %v3251, %v3265
          %v3275 = vadd.f32 %v3252, %v3265
          %v3276 = vadd.f32 %v3253, %v3265
          %v3277 = vadd.f32 %v3254, %v3265
          %v3278 = vadd.f32 %v3255, %v3265
          %v3279 = vadd.f32 %v3256, %v3265
          %v3280 = vadd.f32 %v3257, %v3265
          %v3281 = vadd.f32 %v3258, %v3265
          %v3282 = vadd.f32 %v3259, %v3265
          %3283 = vst.msk [vmem:[%s373] sm:$0xff] %vm861, %v3267
          %3284 = vst.msk [vmem:[%s373 + $0x8] sm:$0xff] %vm861, %v3268
          %3285 = vst.msk [vmem:[%s373 + $0x10] sm:$0xff] %vm861, %v3269
          %3286 = vst.msk [vmem:[%s373 + $0x18] sm:$0xff] %vm861, %v3270
          %3287 = vst.msk [vmem:[%s373 + $0x20] sm:$0xff] %vm861, %v3271
          %3288 = vst.msk [vmem:[%s373 + $0x28] sm:$0xff] %vm861, %v3272
          %3289 = vst.msk [vmem:[%s373 + $0x30] sm:$0xff] %vm861, %v3273
          %3290 = vst.msk [vmem:[%s373 + $0x38] sm:$0xff] %vm861, %v3274
          %3291 = vst.msk [vmem:[%s373 + $0x40] sm:$0xff] %vm861, %v3275
          %3292 = vst.msk [vmem:[%s373 + $0x48] sm:$0xff] %vm861, %v3276
          %3293 = vst.msk [vmem:[%s373 + $0x50] sm:$0xff] %vm861, %v3277
          %3294 = vst.msk [vmem:[%s373 + $0x58] sm:$0xff] %vm861, %v3278
          %3295 = vst.msk [vmem:[%s373 + $0x60] sm:$0xff] %vm861, %v3279
          %3296 = vst.msk [vmem:[%s373 + $0x68] sm:$0xff] %vm861, %v3280
          %3297 = vst.msk [vmem:[%s373 + $0x70] sm:$0xff] %vm861, %v3281
          %3298 = vst.msk [vmem:[%s373 + $0x78] sm:$0xff] %vm861, %v3282
        $region72: #{tpu_custom_call.1} parent=59 // pred_fallthru
          _
        %s3299 = sand.u32 %s268, 1
        %s3300 = scalar_lea.sflag [#allocation6], %s3299
        %s3301 = sand.u32 %s268, 1
        %s3302 = smul.addr %s3301, 128
        %s3303 = scalar_lea.vmem [#allocation5], %s3302
        // Predicated region
        $region73: #{tpu_custom_call.1} parent=59 // pred_check
          %p3304 = pneg %p278
        $region74: #{tpu_custom_call.1} parent=59 // pred_check_branch
          %3306 = sbr.rel (%p3304) target = $region76
        $region75: #{tpu_custom_call.1} parent=59 // pred_region
          %s3307 = smul.u32 16, %s30
          %s3308 = ssub.s32 1, %s3307
          %s3309 = smul.u32 128, %s3308
          %s3311 = ssub.s32 2048, %s3309
          %3312 = vsyncadd %s3300, %s3311
          %p3313 = scmp.ne.s32.totalorder 0, %s3309
          %s3314 = sadd.s32 %s3307, %s29
          %s3315 = smul.addr %s3314, 128
          %s3316 = scalar_lea.hbm %s10, %s3315
          %s3317 = smul.u32 8, %s3308
          %s3318 = sshll.u32 %s3303, 4
          %s3319 = int_to_ptr.vmem [resolvable:$true] %s3318
          %s3320 = sshll.u32 %s3317, 4
          %3324 = dma.vmem_to_hbm [thread:$0]  (%p3313), %s3319, %s3320, %s3316, %s3300, 128, 128, 8
        $region76: #{tpu_custom_call.1} parent=59 // pred_fallthru
          _
      $region60: #{tpu_custom_call.1} parent=5 // pred_fallthru
        _
      %p3325 = scmp.le.s32.totalorder 2, %s19
      // Predicated region
      $region77: #{tpu_custom_call.1} parent=5 // pred_check
        %p3326 = pneg %p3325
      $region78: #{tpu_custom_call.1} parent=5 // pred_check_branch
        %3328 = sbr.rel (%p3326) target = $region80
      $region79: #{tpu_custom_call.1} parent=5 // pred_region
        %s3329 = ssub.s32 %s19, 2
        // Predicated region
        $region81: #{tpu_custom_call.1} parent=79 // pred_check
          %p3330 = pneg %p284
        $region82: #{tpu_custom_call.1} parent=79 // pred_check_branch
          %3332 = sbr.rel (%p3330) target = $region84
        $region83: #{tpu_custom_call.1} parent=79 // pred_region
          %s3333 = sand.u32 %s269, 1
          %s3334 = scalar_lea.sflag [#allocation6], %s3333
          %s3335 = sand.u32 %s269, 1
          %s3336 = smul.addr %s3335, 128
          %s3337 = scalar_lea.vmem [#allocation5], %s3336
          %3338 = dma.done %s3334, 2048
        $region84: #{tpu_custom_call.1} parent=79 // pred_fallthru
          _
      $region80: #{tpu_custom_call.1} parent=5 // pred_fallthru
        _
    $region6: #{tpu_custom_call.1} parent=1 // loop_footer
      %s23 = sadd.s32 1, %s19
    $region7: #{tpu_custom_call.1} parent=1 // loop_footer_branch
      %18 = sbr.rel target = $region3
    $region8: #{tpu_custom_call.1} parent=1 // loop_exit
      _
    %3339 = vsyncpa [#allocation6], 1
    %s3340 = scalar_lea.sflag [#allocation6], 1
    %3341 = vsyncpa %s3340, 1

</llo_original>
